<compile_context>
chip_gen: v6e
topology: v6e:2x2x1
jax: 0.10.0
libtpu: 0.0.40
codegen_flags: <defaults>
</compile_context>

<pallas_src>
from functools import partial

import numpy as np
import jax
import jax.numpy as jnp
from jax import lax
from jax.experimental import pallas as pl
from jax.experimental.pallas import tpu as pltpu

_GN_EPS = 1e-5                      # PyTorch GroupNorm default eps
_INV_SQRT2 = 0.7071067811865476


def _gelu_exact(x):
    # erf-based GELU (nn.GELU() default) via Abramowitz-Stegun 7.1.26 (|err| ~1.5e-7).
    a1, a2, a3, a4, a5 = 0.254829592, -0.284496736, 1.421413741, -1.453152027, 1.061405429
    pc = 0.3275911
    ax = jnp.abs(x) * _INV_SQRT2
    t = pl.reciprocal(1.0 + pc * ax, approx=True)        # divide rides the EUP slot
    poly = t * (a1 + t * (a2 + t * (a3 + t * (a4 + t * a5))))
    erf_abs = 1.0 - poly * jnp.exp(-ax * ax)
    erf = jnp.where(x >= 0.0, erf_abs, -erf_abs)
    return 0.5 * x * (1.0 + erf)


# -----------------------------------------------------------------------------
# Host-side, run ONCE per set of weights: fold conv structure into matrices.
# -----------------------------------------------------------------------------
def preprocess_params(params, w_in, w_skip):
    """Fold the W/Cin structure (incl. W zero padding) of every conv into lane-exact matrices."""
    wt_up = np.asarray(params["up_w"], np.float32)       # (Cin, C, 5, 5)
    c_in, C = wt_up.shape[0], wt_up.shape[1]
    w_up = 2 * w_in - 1
    left = (w_skip - w_up) // 2
    Kx = w_in * c_in
    WC = w_skip * C                                      # exact lane width (no pad lanes)

    # --- up: ConvTranspose2d(k=5, s=2, p=2) + F.pad(W) -> 5 tap matrices (Kx, WC).
    #     out[ox, co] = sum_j x[j, ci] * W[ci, co, ky, kx] with kx = ox + 2 - 2j.
    upM = np.zeros((5, Kx, WC), np.float32)
    for ky in range(5):
        for ox in range(w_up):
            for j in range(w_in):
                kx = ox + 2 - 2 * j
                if 0 <= kx < 5:
                    upM[ky][np.ix_(j * c_in + np.arange(c_in),
                                   (left + ox) * C + np.arange(C))] += wt_up[:, :, ky, kx]
    upb_band = np.zeros((1, WC), np.float32)             # bias only inside the un-padded W band
    upb_band[0, left * C:(left + w_up) * C] = np.tile(np.asarray(params["up_b"], np.float32), w_up)

    # --- 3x3, stride-1 transposed convs == same-size convs with flipped kernels.
    def conv_w(wt):                                      # (Ci, Co, 3, 3) -> (3, 3, Ci, Co), flipped
        return np.transpose(np.asarray(wt, np.float32)[:, :, ::-1, ::-1], (2, 3, 0, 1))

    def build_M(wc):                                     # out[r, w] uses in[r+ky-1, w+kx-1]
        KH, KW, Ci, Co = wc.shape
        M = np.zeros((KH, w_skip * Ci, w_skip * Co), np.float32)
        for ky in range(KH):
            for kx in range(KW):
                for w in range(w_skip):
                    iw = w + kx - 1
                    if 0 <= iw < w_skip:                 # W padding folded in (skip OOB taps)
                        M[ky][np.ix_(iw * Ci + np.arange(Ci),
                                     w * Co + np.arange(Co))] += wc[ky, kx]
        return M

    wc1 = conv_w(params["d1_w"])                         # (3,3,2C,C): ci<C = up plane, ci>=C = skip
    M1u = build_M(wc1[:, :, :C, :])
    M1s = build_M(wc1[:, :, C:, :])
    M2 = build_M(conv_w(params["d2_w"]))
    M3 = build_M(conv_w(params["d3_w"]))
    Mstack = np.stack([M1s, M1u, M2, M3], axis=0)        # (4, 3, WC, WC)

    def aux(b, g, bt_):                                  # rows: conv bias / gamma / beta lane tiles
        a = np.zeros((3, WC), np.float32)
        for i, v in enumerate((b, g, bt_)):
            a[i] = np.tile(np.asarray(v, np.float32), w_skip)
        return a

    auxs = np.stack([aux(params["d1_b"], params["d1_g"], params["d1_beta"]),
                     aux(params["d2_b"], params["d2_g"], params["d2_beta"]),
                     aux(params["d3_b"], params["d3_g"], params["d3_beta"])], axis=0)

    return dict(
        upM=jnp.asarray(upM, jnp.bfloat16),
        upb_band=jnp.asarray(upb_band, jnp.float32),
        M=jnp.asarray(Mstack, jnp.bfloat16),
        aux=jnp.asarray(auxs, jnp.float32),
    )


def _pick_batch_tile(N, h_skip):
    # Target ~128 matmul rows per grid step, but keep >=2 grid steps when N >= 2 so that
    # v7x's two TensorCores both get work (v5e/v6e have a single TC and are unaffected).
    bt = max(1, min(N, 128 // max(1, h_skip)))
    if N >= 2:
        bt = max(1, min(bt, N // 2))
    while N % bt:
        bt -= 1
    return bt


# -----------------------------------------------------------------------------
# Fused forward pass (one Pallas kernel).
# -----------------------------------------------------------------------------
def spec_decoder_forward(prep, x_nchw, skip_nchw, *, groups):
    N, c_in, h_in, w_in = x_nchw.shape
    _, C, h_skip, w_skip = skip_nchw.shape
    assert C % groups == 0
    assert h_skip >= 2 * h_in - 1 and w_skip >= 2 * w_in - 1
    G = groups
    cpg = C // G
    h_up = 2 * h_in - 1
    top = (h_skip - h_up) // 2
    Kx = w_in * c_in
    WC = w_skip * C
    f32, bf16 = jnp.float32, jnp.bfloat16

    bt = _pick_batch_tile(N, h_skip)
    R, Rin = bt * h_skip, bt * h_in
    inv_cnt = 1.0 / float(h_skip * w_skip * cpg)

    # ---- shape-only structural constants (numpy, built once at trace time) ----
    upR = np.zeros((5, R, Rin), np.float32)     # polyphase row placement (even/odd interleave + F.pad rows)
    uprow = np.zeros((R, 1), np.float32)        # rows that carry real up-conv output (get the bias)
    S = np.zeros((2, R, R), np.float32)         # per-sample H shifts (+/-1, zero padded) for the 3x3 convs
    rowM = np.zeros((bt, R), np.float32)        # per-sample row-sum / row-broadcast masks for GroupNorm
    for b in range(bt):
        ro, io = b * h_skip, b * h_in
        uprow[ro + top: ro + top + h_up, 0] = 1.0
        rowM[b, ro: ro + h_skip] = 1.0
        for m in range(h_in):                            # even up rows <- taps ky=4,2,0
            p = ro + top + 2 * m
            upR[2, p, io + m] = 1.0
            if m >= 1:
                upR[4, p, io + m - 1] = 1.0
            if m + 1 < h_in:
                upR[0, p, io + m + 1] = 1.0
        for m in range(h_in - 1):                        # odd up rows <- taps ky=3,1
            p = ro + top + 2 * m + 1
            upR[3, p, io + m] = 1.0
            upR[1, p, io + m + 1] = 1.0
        for r in range(h_skip):
            if r >= 1:
                S[0, ro + r, ro + r - 1] = 1.0
            if r + 1 < h_skip:
                S[1, ro + r, ro + r + 1] = 1.0
    rowMT = np.ascontiguousarray(rowM.T)

    # GroupNorm masks, hoisted out of the kernel; 1/count folded in (one-pass variance).
    statM = np.zeros((2 * WC, 2 * G), np.float32)        # [y | y*y] -> per-group (mean, E[y^2])
    grpT = np.zeros((G, WC), np.float32)
    for l in range(WC):
        g = (l % C) // cpg
        statM[l, g] = inv_cnt
        statM[WC + l, G + g] = inv_cnt
        grpT[g, l] = 1.0

    # ---- minimal boundary layout glue: NCHW -> lane-dense (N*H, W*C) bf16 slabs ----
    # TODO(synk): producers/consumers that keep activations in NHWC-flat layout can skip these.
    xr = jnp.transpose(x_nchw, (0, 2, 3, 1)).reshape(N * h_in, Kx).astype(bf16)
    sr = jnp.transpose(skip_nchw, (0, 2, 3, 1)).reshape(N * h_skip, WC).astype(bf16)
    ubias = jnp.asarray(uprow, f32) * prep["upb_band"]   # (R, WC) up-conv bias on real rows only

    def kernel(x_ref, skip_ref, upM_ref, upR_ref, ubias_ref, M_ref, S_ref,
               statM_ref, grpT_ref, rowM_ref, rowMT_ref, aux_ref, o_ref):
        xf = x_ref[...]                                  # (Rin, Kx)  bf16
        skf = skip_ref[...]                              # (R,  WC)  bf16

        # ---- up: ConvTranspose2d(k=5,s=2,p=2) + F.pad, as 5 (weight, row-placement) matmul pairs
        up = ubias_ref[...]
        for k in range(5):
            t = jnp.dot(xf, upM_ref[k], preferred_element_type=f32)        # (Rin, WC)
            up = up + jnp.dot(upR_ref[k], t, preferred_element_type=f32)   # (R,   WC)
        up_bf = up.astype(bf16)                          # cast once, reused by all 3 conv1 taps

        S_dn, S_up = S_ref[0], S_ref[1]

        def conv3(parts):
            # 3x3 stride-1 (transposed) conv: out[r] = sum_ky in[r+ky-1] @ M[ky]; the per-sample
            # H shifts ride the MXU as block-diagonal 0/1 matrices (no buffers, no row stores).
            y = []
            for ky in range(3):
                acc = None
                for a, m in parts:
                    d = jnp.dot(a, M_ref[m, ky], preferred_element_type=f32)
                    acc = d if acc is None else acc + d
                y.append(acc)
            return (jnp.dot(S_dn, y[0], preferred_element_type=f32) + y[1]
                    + jnp.dot(S_up, y[2], preferred_element_type=f32))

        def gn_gelu(y, aux):
            # GroupNorm (per sample, per group) + GELU; fused [y | y^2] stats matmul,
            # one-pass variance, all statistics in f32.
            y = y + aux[0:1, :]                                            # conv bias
            p = jnp.dot(jnp.concatenate([y, y * y], axis=-1), statM_ref[...],
                        preferred_element_type=f32)                        # (R, 2G), already /cnt
            s = jnp.dot(rowM_ref[...], p, preferred_element_type=f32)      # (bt, 2G) per-sample
            mean = s[:, :G]
            var = s[:, G:] - mean * mean
            inv = lax.rsqrt(var + _GN_EPS)
            a = jnp.dot(inv, grpT_ref[...], preferred_element_type=f32) * aux[1:2, :]    # (bt, WC)
            b = aux[2:3, :] - jnp.dot(mean, grpT_ref[...], preferred_element_type=f32) * a
            a_r = jnp.dot(rowMT_ref[...], a, preferred_element_type=f32)   # broadcast back to rows
            b_r = jnp.dot(rowMT_ref[...], b, preferred_element_type=f32)
            return _gelu_exact(y * a_r + b_r)
            # TODO(synk): nn.Dropout is identity in eval mode; training-mode dropout not implemented.

        g1 = gn_gelu(conv3([(up_bf, 1), (skf, 0)]), aux_ref[0])    # deconv1 on cat([up, skip])
        g2 = gn_gelu(conv3([(g1.astype(bf16), 2)]), aux_ref[1])    # deconv2
        g3 = gn_gelu(conv3([(g2.astype(bf16), 3)]), aux_ref[2])    # deconv3
        o_ref[...] = g3                                            # full 128-lane unmasked store

    def w_full(a):
        # Constant (grid-invariant) blocks: Pallas skips re-fetch since the block index never
        # changes.  NOTE: at production channel counts on v7x (64 MiB VMEM), single-buffer these
        # with pipeline_mode=pl.Buffered(1) and re-budget vmem_limit_bytes.
        shp = tuple(a.shape)
        return pl.BlockSpec(shp, lambda n, _nd=len(shp): (0,) * _nd)

    consts = (prep["upM"], jnp.asarray(upR, f32), ubias, prep["M"], jnp.asarray(S, f32),
              jnp.asarray(statM, f32), jnp.asarray(grpT, f32), jnp.asarray(rowM, f32),
              jnp.asarray(rowMT, f32), prep["aux"])

    grid_spec = pltpu.PrefetchScalarGridSpec(
        num_scalar_prefetch=0,
        grid=(N // bt,),
        in_specs=[pl.BlockSpec((Rin, Kx), lambda n: (n, 0)),
                  pl.BlockSpec((R, WC), lambda n: (n, 0))]
                 + [w_full(c) for c in consts],
        out_specs=pl.BlockSpec((R, WC), lambda n: (n, 0)),
    )
    out = pl.pallas_call(
        kernel,
        out_shape=jax.ShapeDtypeStruct((N * h_skip, WC), jnp.float32),
        grid_spec=grid_spec,
        compiler_params=pltpu.CompilerParams(dimension_semantics=("parallel",)),
    )(xr, sr, *consts)

    # boundary-only layout glue back to NCHW (output itself is stored lane-dense, f32).
    return jnp.transpose(out.reshape(N, h_skip, w_skip, C), (0, 3, 1, 2))


# -----------------------------------------------------------------------------
# Pure-JAX reference (for parity checking) and parameter init.
# -----------------------------------------------------------------------------
def _ref_conv_transpose(x, wt, b, stride, padding):
    k = wt.shape[-1]
    w = jnp.transpose(wt[:, :, ::-1, ::-1], (1, 0, 2, 3))     # OIHW, flipped
    pad = k - 1 - padding
    y = lax.conv_general_dilated(
        x, w, window_strides=(1, 1), padding=[(pad, pad), (pad, pad)],
        lhs_dilation=(stride, stride), dimension_numbers=("NCHW", "OIHW", "NCHW"))
    return y + b.reshape(1, -1, 1, 1)


def _ref_group_norm(x, gamma, beta, groups, eps=_GN_EPS):
    N, Cc, H, W = x.shape
    xg = x.reshape(N, groups, Cc // groups, H, W)
    m = jnp.mean(xg, axis=(2, 3, 4), keepdims=True)
    v = jnp.mean((xg - m) ** 2, axis=(2, 3, 4), keepdims=True)
    xn = ((xg - m) * lax.rsqrt(v + eps)).reshape(N, Cc, H, W)
    return xn * gamma.reshape(1, -1, 1, 1) + beta.reshape(1, -1, 1, 1)


def spec_decoder_reference(params, x, skip, groups):
    x = _ref_conv_transpose(x, params["up_w"], params["up_b"], 2, 2)
    dY = skip.shape[2] - x.shape[2]
    dX = skip.shape[3] - x.shape[3]
    x = jnp.pad(x, ((0, 0), (0, 0), (dY // 2, dY - dY // 2), (dX // 2, dX - dX // 2)))
    x = jnp.concatenate([x, skip], axis=1)
    for l in ("d1", "d2", "d3"):
        x = _ref_conv_transpose(x, params[l + "_w"], params[l + "_b"], 1, 1)
        x = _ref_group_norm(x, params[l + "_g"], params[l + "_beta"], groups)
        x = jax.nn.gelu(x, approximate=False)
    return x


def init_params(key, in_channels, out_channels):
    ks = jax.random.split(key, 14)

    def rnd(k, shape, scale):
        return (scale * jax.random.normal(k, shape)).astype(jnp.float32)

    p = {}
    p["up_w"] = rnd(ks[0], (in_channels, out_channels, 5, 5), 0.05)
    p["up_b"] = rnd(ks[1], (out_channels,), 0.05)
    p["d1_w"] = rnd(ks[2], (out_channels * 2, out_channels, 3, 3), 0.05)
    p["d1_b"] = rnd(ks[3], (out_channels,), 0.05)
    p["d1_g"] = 1.0 + rnd(ks[4], (out_channels,), 0.02)
    p["d1_beta"] = rnd(ks[5], (out_channels,), 0.02)
    p["d2_w"] = rnd(ks[6], (out_channels, out_channels, 3, 3), 0.05)
    p["d2_b"] = rnd(ks[7], (out_channels,), 0.05)
    p["d2_g"] = 1.0 + rnd(ks[8], (out_channels,), 0.02)
    p["d2_beta"] = rnd(ks[9], (out_channels,), 0.02)
    p["d3_w"] = rnd(ks[10], (out_channels, out_channels, 3, 3), 0.05)
    p["d3_b"] = rnd(ks[11], (out_channels,), 0.05)
    p["d3_g"] = 1.0 + rnd(ks[12], (out_channels,), 0.02)
    p["d3_beta"] = rnd(ks[13], (out_channels,), 0.02)
    return p


if __name__ == "__main__":
    in_channels, out_channels, groups = 8, 8, 4      # groups must divide out_channels
    key = jax.random.PRNGKey(0)
    kp, kx, ksk = jax.random.split(key, 3)

    params = init_params(kp, in_channels, out_channels)
    x = jax.random.normal(kx, (4, in_channels, 8, 8), jnp.float32)         # NCHW
    skip = jax.random.normal(ksk, (4, out_channels, 16, 16), jnp.float32)  # NCHW

    # hoisted weight preprocessing (run once per set of weights)
    prep = preprocess_params(params, w_in=x.shape[3], w_skip=skip.shape[3])

    fwd = jax.jit(partial(spec_decoder_forward, groups=groups))
    out = jax.block_until_ready(fwd(prep, x, skip))

    assert out.shape == (4, out_channels, 16, 16), out.shape
    assert bool(jnp.all(jnp.isfinite(out)))

    # parity vs. pure-JAX reference (conv weights rounded to bf16 to match the kernel's
    # MXU operand precision; tolerance guards against gross structural/GroupNorm bugs).
    params_bf = dict(params)
    for k in ("up_w", "d1_w", "d2_w", "d3_w"):
        params_bf[k] = params[k].astype(jnp.bfloat16).astype(jnp.float32)
    ref = spec_decoder_reference(params_bf, x, skip, groups)
    assert float(jnp.max(jnp.abs(out - ref))) < 0.2

    print("KERNEL_OK")
</pallas_src>

<mosaic_0001>
module attributes {stable_mosaic.version = 11 : i64} {
  func.func @kernel(%arg0: i32, %arg1: memref<16x64xbf16, #tpu.memory_space<vmem>>, %arg2: memref<32x128xbf16, #tpu.memory_space<vmem>>, %arg3: memref<5x64x128xbf16, #tpu.memory_space<vmem>>, %arg4: memref<5x32x16xf32, #tpu.memory_space<vmem>>, %arg5: memref<32x128xf32, #tpu.memory_space<vmem>>, %arg6: memref<4x3x128x128xbf16, #tpu.memory_space<vmem>>, %arg7: memref<2x32x32xf32, #tpu.memory_space<vmem>>, %arg8: memref<256x8xf32, #tpu.memory_space<vmem>>, %arg9: memref<4x128xf32, #tpu.memory_space<vmem>>, %arg10: memref<2x32xf32, #tpu.memory_space<vmem>>, %arg11: memref<32x2xf32, #tpu.memory_space<vmem>>, %arg12: memref<3x3x128xf32, #tpu.memory_space<vmem>>, %arg13: memref<32x128xf32, #tpu.memory_space<vmem>>) attributes {dimension_semantics = [#tpu.dimension_semantics<parallel>], iteration_bounds = array<i64: 2>, scalar_prefetch = 0 : i64, scratch_operands = 0 : i64, tpu.core_type = #tpu.core_type<tc>, window_params = [{transform_indices = @transform_0, window_bounds = array<i64: 16, 64>}, {transform_indices = @transform_1, window_bounds = array<i64: 32, 128>}, {pipeline_mode = #tpu.pipeline_mode<synchronous>, transform_indices = @transform_2, window_bounds = array<i64: 5, 64, 128>}, {pipeline_mode = #tpu.pipeline_mode<synchronous>, transform_indices = @transform_3, window_bounds = array<i64: 5, 32, 16>}, {pipeline_mode = #tpu.pipeline_mode<synchronous>, transform_indices = @transform_4, window_bounds = array<i64: 32, 128>}, {pipeline_mode = #tpu.pipeline_mode<synchronous>, transform_indices = @transform_5, window_bounds = array<i64: 4, 3, 128, 128>}, {pipeline_mode = #tpu.pipeline_mode<synchronous>, transform_indices = @transform_6, window_bounds = array<i64: 2, 32, 32>}, {pipeline_mode = #tpu.pipeline_mode<synchronous>, transform_indices = @transform_7, window_bounds = array<i64: 256, 8>}, {pipeline_mode = #tpu.pipeline_mode<synchronous>, transform_indices = @transform_8, window_bounds = array<i64: 4, 128>}, {pipeline_mode = #tpu.pipeline_mode<synchronous>, transform_indices = @transform_9, window_bounds = array<i64: 2, 32>}, {pipeline_mode = #tpu.pipeline_mode<synchronous>, transform_indices = @transform_10, window_bounds = array<i64: 32, 2>}, {pipeline_mode = #tpu.pipeline_mode<synchronous>, transform_indices = @transform_11, window_bounds = array<i64: 3, 3, 128>}, {transform_indices = @transform_12, window_bounds = array<i64: 32, 128>}]} {
    %c0 = arith.constant 0 : index
    %c0_0 = arith.constant 0 : index
    %0 = vector.load %arg1[%c0, %c0_0] : memref<16x64xbf16, #tpu.memory_space<vmem>>, vector<16x64xbf16>
    %c0_1 = arith.constant 0 : index
    %c0_2 = arith.constant 0 : index
    %1 = vector.load %arg2[%c0_1, %c0_2] : memref<32x128xbf16, #tpu.memory_space<vmem>>, vector<32x128xbf16>
    %c0_3 = arith.constant 0 : index
    %c0_4 = arith.constant 0 : index
    %2 = vector.load %arg5[%c0_3, %c0_4] : memref<32x128xf32, #tpu.memory_space<vmem>>, vector<32x128xf32>
    %c0_5 = arith.constant 0 : index
    %c0_6 = arith.constant 0 : index
    %c0_7 = arith.constant 0 : index
    %3 = vector.load %arg3[%c0_5, %c0_6, %c0_7] : memref<5x64x128xbf16, #tpu.memory_space<vmem>>, vector<1x64x128xbf16>
    %4 = vector.shape_cast %3 : vector<1x64x128xbf16> to vector<64x128xbf16>
    %cst = arith.constant dense<0.000000e+00> : vector<16x128xf32>
    %5 = tpu.matmul %0, %4, %cst {dimension_numbers = #tpu.dot_dimension_numbers<[1], [0], [0], [1], [0, 0, 1, 1], [], []>} : vector<16x64xbf16>, vector<64x128xbf16>, vector<16x128xf32> -> vector<16x128xf32>
    %c0_8 = arith.constant 0 : index
    %c0_9 = arith.constant 0 : index
    %c0_10 = arith.constant 0 : index
    %6 = vector.load %arg4[%c0_8, %c0_9, %c0_10] : memref<5x32x16xf32, #tpu.memory_space<vmem>>, vector<1x32x16xf32>
    %7 = vector.shape_cast %6 : vector<1x32x16xf32> to vector<32x16xf32>
    %cst_11 = arith.constant dense<0.000000e+00> : vector<32x128xf32>
    %8 = tpu.matmul %7, %5, %cst_11 {dimension_numbers = #tpu.dot_dimension_numbers<[1], [0], [0], [1], [0, 0, 1, 1], [], []>} : vector<32x16xf32>, vector<16x128xf32>, vector<32x128xf32> -> vector<32x128xf32>
    %9 = arith.addf %2, %8 : vector<32x128xf32>
    %c1 = arith.constant 1 : index
    %c0_12 = arith.constant 0 : index
    %c0_13 = arith.constant 0 : index
    %10 = vector.load %arg3[%c1, %c0_12, %c0_13] : memref<5x64x128xbf16, #tpu.memory_space<vmem>>, vector<1x64x128xbf16>
    %11 = vector.shape_cast %10 : vector<1x64x128xbf16> to vector<64x128xbf16>
    %cst_14 = arith.constant dense<0.000000e+00> : vector<16x128xf32>
    %12 = tpu.matmul %0, %11, %cst_14 {dimension_numbers = #tpu.dot_dimension_numbers<[1], [0], [0], [1], [0, 0, 1, 1], [], []>} : vector<16x64xbf16>, vector<64x128xbf16>, vector<16x128xf32> -> vector<16x128xf32>
    %c1_15 = arith.constant 1 : index
    %c0_16 = arith.constant 0 : index
    %c0_17 = arith.constant 0 : index
    %13 = vector.load %arg4[%c1_15, %c0_16, %c0_17] : memref<5x32x16xf32, #tpu.memory_space<vmem>>, vector<1x32x16xf32>
    %14 = vector.shape_cast %13 : vector<1x32x16xf32> to vector<32x16xf32>
    %cst_18 = arith.constant dense<0.000000e+00> : vector<32x128xf32>
    %15 = tpu.matmul %14, %12, %cst_18 {dimension_numbers = #tpu.dot_dimension_numbers<[1], [0], [0], [1], [0, 0, 1, 1], [], []>} : vector<32x16xf32>, vector<16x128xf32>, vector<32x128xf32> -> vector<32x128xf32>
    %16 = arith.addf %9, %15 : vector<32x128xf32>
    %c2 = arith.constant 2 : index
    %c0_19 = arith.constant 0 : index
    %c0_20 = arith.constant 0 : index
    %17 = vector.load %arg3[%c2, %c0_19, %c0_20] : memref<5x64x128xbf16, #tpu.memory_space<vmem>>, vector<1x64x128xbf16>
    %18 = vector.shape_cast %17 : vector<1x64x128xbf16> to vector<64x128xbf16>
    %cst_21 = arith.constant dense<0.000000e+00> : vector<16x128xf32>
    %19 = tpu.matmul %0, %18, %cst_21 {dimension_numbers = #tpu.dot_dimension_numbers<[1], [0], [0], [1], [0, 0, 1, 1], [], []>} : vector<16x64xbf16>, vector<64x128xbf16>, vector<16x128xf32> -> vector<16x128xf32>
    %c2_22 = arith.constant 2 : index
    %c0_23 = arith.constant 0 : index
    %c0_24 = arith.constant 0 : index
    %20 = vector.load %arg4[%c2_22, %c0_23, %c0_24] : memref<5x32x16xf32, #tpu.memory_space<vmem>>, vector<1x32x16xf32>
    %21 = vector.shape_cast %20 : vector<1x32x16xf32> to vector<32x16xf32>
    %cst_25 = arith.constant dense<0.000000e+00> : vector<32x128xf32>
    %22 = tpu.matmul %21, %19, %cst_25 {dimension_numbers = #tpu.dot_dimension_numbers<[1], [0], [0], [1], [0, 0, 1, 1], [], []>} : vector<32x16xf32>, vector<16x128xf32>, vector<32x128xf32> -> vector<32x128xf32>
    %23 = arith.addf %16, %22 : vector<32x128xf32>
    %c3 = arith.constant 3 : index
    %c0_26 = arith.constant 0 : index
    %c0_27 = arith.constant 0 : index
    %24 = vector.load %arg3[%c3, %c0_26, %c0_27] : memref<5x64x128xbf16, #tpu.memory_space<vmem>>, vector<1x64x128xbf16>
    %25 = vector.shape_cast %24 : vector<1x64x128xbf16> to vector<64x128xbf16>
    %cst_28 = arith.constant dense<0.000000e+00> : vector<16x128xf32>
    %26 = tpu.matmul %0, %25, %cst_28 {dimension_numbers = #tpu.dot_dimension_numbers<[1], [0], [0], [1], [0, 0, 1, 1], [], []>} : vector<16x64xbf16>, vector<64x128xbf16>, vector<16x128xf32> -> vector<16x128xf32>
    %c3_29 = arith.constant 3 : index
    %c0_30 = arith.constant 0 : index
    %c0_31 = arith.constant 0 : index
    %27 = vector.load %arg4[%c3_29, %c0_30, %c0_31] : memref<5x32x16xf32, #tpu.memory_space<vmem>>, vector<1x32x16xf32>
    %28 = vector.shape_cast %27 : vector<1x32x16xf32> to vector<32x16xf32>
    %cst_32 = arith.constant dense<0.000000e+00> : vector<32x128xf32>
    %29 = tpu.matmul %28, %26, %cst_32 {dimension_numbers = #tpu.dot_dimension_numbers<[1], [0], [0], [1], [0, 0, 1, 1], [], []>} : vector<32x16xf32>, vector<16x128xf32>, vector<32x128xf32> -> vector<32x128xf32>
    %30 = arith.addf %23, %29 : vector<32x128xf32>
    %c4 = arith.constant 4 : index
    %c0_33 = arith.constant 0 : index
    %c0_34 = arith.constant 0 : index
    %31 = vector.load %arg3[%c4, %c0_33, %c0_34] : memref<5x64x128xbf16, #tpu.memory_space<vmem>>, vector<1x64x128xbf16>
    %32 = vector.shape_cast %31 : vector<1x64x128xbf16> to vector<64x128xbf16>
    %cst_35 = arith.constant dense<0.000000e+00> : vector<16x128xf32>
    %33 = tpu.matmul %0, %32, %cst_35 {dimension_numbers = #tpu.dot_dimension_numbers<[1], [0], [0], [1], [0, 0, 1, 1], [], []>} : vector<16x64xbf16>, vector<64x128xbf16>, vector<16x128xf32> -> vector<16x128xf32>
    %c4_36 = arith.constant 4 : index
    %c0_37 = arith.constant 0 : index
    %c0_38 = arith.constant 0 : index
    %34 = vector.load %arg4[%c4_36, %c0_37, %c0_38] : memref<5x32x16xf32, #tpu.memory_space<vmem>>, vector<1x32x16xf32>
    %35 = vector.shape_cast %34 : vector<1x32x16xf32> to vector<32x16xf32>
    %cst_39 = arith.constant dense<0.000000e+00> : vector<32x128xf32>
    %36 = tpu.matmul %35, %33, %cst_39 {dimension_numbers = #tpu.dot_dimension_numbers<[1], [0], [0], [1], [0, 0, 1, 1], [], []>} : vector<32x16xf32>, vector<16x128xf32>, vector<32x128xf32> -> vector<32x128xf32>
    %37 = arith.addf %30, %36 : vector<32x128xf32>
    %38 = arith.truncf %37 : vector<32x128xf32> to vector<32x128xbf16>
    %c0_40 = arith.constant 0 : index
    %c0_41 = arith.constant 0 : index
    %c0_42 = arith.constant 0 : index
    %39 = vector.load %arg7[%c0_40, %c0_41, %c0_42] : memref<2x32x32xf32, #tpu.memory_space<vmem>>, vector<1x32x32xf32>
    %40 = vector.shape_cast %39 : vector<1x32x32xf32> to vector<32x32xf32>
    %c1_43 = arith.constant 1 : index
    %c0_44 = arith.constant 0 : index
    %c0_45 = arith.constant 0 : index
    %41 = vector.load %arg7[%c1_43, %c0_44, %c0_45] : memref<2x32x32xf32, #tpu.memory_space<vmem>>, vector<1x32x32xf32>
    %42 = vector.shape_cast %41 : vector<1x32x32xf32> to vector<32x32xf32>
    %c1_46 = arith.constant 1 : index
    %c0_47 = arith.constant 0 : index
    %c0_48 = arith.constant 0 : index
    %c0_49 = arith.constant 0 : index
    %43 = vector.load %arg6[%c1_46, %c0_47, %c0_48, %c0_49] : memref<4x3x128x128xbf16, #tpu.memory_space<vmem>>, vector<1x1x128x128xbf16>
    %44 = vector.shape_cast %43 : vector<1x1x128x128xbf16> to vector<128x128xbf16>
    %cst_50 = arith.constant dense<0.000000e+00> : vector<32x128xf32>
    %45 = tpu.matmul %38, %44, %cst_50 {dimension_numbers = #tpu.dot_dimension_numbers<[1], [0], [0], [1], [0, 0, 1, 1], [], []>} : vector<32x128xbf16>, vector<128x128xbf16>, vector<32x128xf32> -> vector<32x128xf32>
    %c0_51 = arith.constant 0 : index
    %c0_52 = arith.constant 0 : index
    %c0_53 = arith.constant 0 : index
    %c0_54 = arith.constant 0 : index
    %46 = vector.load %arg6[%c0_51, %c0_52, %c0_53, %c0_54] : memref<4x3x128x128xbf16, #tpu.memory_space<vmem>>, vector<1x1x128x128xbf16>
    %47 = vector.shape_cast %46 : vector<1x1x128x128xbf16> to vector<128x128xbf16>
    %cst_55 = arith.constant dense<0.000000e+00> : vector<32x128xf32>
    %48 = tpu.matmul %1, %47, %cst_55 {dimension_numbers = #tpu.dot_dimension_numbers<[1], [0], [0], [1], [0, 0, 1, 1], [], []>} : vector<32x128xbf16>, vector<128x128xbf16>, vector<32x128xf32> -> vector<32x128xf32>
    %49 = arith.addf %45, %48 : vector<32x128xf32>
    %c1_56 = arith.constant 1 : index
    %c1_57 = arith.constant 1 : index
    %c0_58 = arith.constant 0 : index
    %c0_59 = arith.constant 0 : index
    %50 = vector.load %arg6[%c1_56, %c1_57, %c0_58, %c0_59] : memref<4x3x128x128xbf16, #tpu.memory_space<vmem>>, vector<1x1x128x128xbf16>
    %51 = vector.shape_cast %50 : vector<1x1x128x128xbf16> to vector<128x128xbf16>
    %cst_60 = arith.constant dense<0.000000e+00> : vector<32x128xf32>
    %52 = tpu.matmul %38, %51, %cst_60 {dimension_numbers = #tpu.dot_dimension_numbers<[1], [0], [0], [1], [0, 0, 1, 1], [], []>} : vector<32x128xbf16>, vector<128x128xbf16>, vector<32x128xf32> -> vector<32x128xf32>
    %c0_61 = arith.constant 0 : index
    %c1_62 = arith.constant 1 : index
    %c0_63 = arith.constant 0 : index
    %c0_64 = arith.constant 0 : index
    %53 = vector.load %arg6[%c0_61, %c1_62, %c0_63, %c0_64] : memref<4x3x128x128xbf16, #tpu.memory_space<vmem>>, vector<1x1x128x128xbf16>
    %54 = vector.shape_cast %53 : vector<1x1x128x128xbf16> to vector<128x128xbf16>
    %cst_65 = arith.constant dense<0.000000e+00> : vector<32x128xf32>
    %55 = tpu.matmul %1, %54, %cst_65 {dimension_numbers = #tpu.dot_dimension_numbers<[1], [0], [0], [1], [0, 0, 1, 1], [], []>} : vector<32x128xbf16>, vector<128x128xbf16>, vector<32x128xf32> -> vector<32x128xf32>
    %56 = arith.addf %52, %55 : vector<32x128xf32>
    %c1_66 = arith.constant 1 : index
    %c2_67 = arith.constant 2 : index
    %c0_68 = arith.constant 0 : index
    %c0_69 = arith.constant 0 : index
    %57 = vector.load %arg6[%c1_66, %c2_67, %c0_68, %c0_69] : memref<4x3x128x128xbf16, #tpu.memory_space<vmem>>, vector<1x1x128x128xbf16>
    %58 = vector.shape_cast %57 : vector<1x1x128x128xbf16> to vector<128x128xbf16>
    %cst_70 = arith.constant dense<0.000000e+00> : vector<32x128xf32>
    %59 = tpu.matmul %38, %58, %cst_70 {dimension_numbers = #tpu.dot_dimension_numbers<[1], [0], [0], [1], [0, 0, 1, 1], [], []>} : vector<32x128xbf16>, vector<128x128xbf16>, vector<32x128xf32> -> vector<32x128xf32>
    %c0_71 = arith.constant 0 : index
    %c2_72 = arith.constant 2 : index
    %c0_73 = arith.constant 0 : index
    %c0_74 = arith.constant 0 : index
    %60 = vector.load %arg6[%c0_71, %c2_72, %c0_73, %c0_74] : memref<4x3x128x128xbf16, #tpu.memory_space<vmem>>, vector<1x1x128x128xbf16>
    %61 = vector.shape_cast %60 : vector<1x1x128x128xbf16> to vector<128x128xbf16>
    %cst_75 = arith.constant dense<0.000000e+00> : vector<32x128xf32>
    %62 = tpu.matmul %1, %61, %cst_75 {dimension_numbers = #tpu.dot_dimension_numbers<[1], [0], [0], [1], [0, 0, 1, 1], [], []>} : vector<32x128xbf16>, vector<128x128xbf16>, vector<32x128xf32> -> vector<32x128xf32>
    %63 = arith.addf %59, %62 : vector<32x128xf32>
    %cst_76 = arith.constant dense<0.000000e+00> : vector<32x128xf32>
    %64 = tpu.matmul %40, %49, %cst_76 {dimension_numbers = #tpu.dot_dimension_numbers<[1], [0], [0], [1], [0, 0, 1, 1], [], []>} : vector<32x32xf32>, vector<32x128xf32>, vector<32x128xf32> -> vector<32x128xf32>
    %65 = arith.addf %64, %56 : vector<32x128xf32>
    %cst_77 = arith.constant dense<0.000000e+00> : vector<32x128xf32>
    %66 = tpu.matmul %42, %63, %cst_77 {dimension_numbers = #tpu.dot_dimension_numbers<[1], [0], [0], [1], [0, 0, 1, 1], [], []>} : vector<32x32xf32>, vector<32x128xf32>, vector<32x128xf32> -> vector<32x128xf32>
    %67 = arith.addf %65, %66 : vector<32x128xf32>
    %c0_78 = arith.constant 0 : index
    %c0_79 = arith.constant 0 : index
    %c0_80 = arith.constant 0 : index
    %68 = vector.load %arg12[%c0_78, %c0_79, %c0_80] : memref<3x3x128xf32, #tpu.memory_space<vmem>>, vector<1x3x128xf32>
    %69 = vector.shape_cast %68 : vector<1x3x128xf32> to vector<3x128xf32>
    %70 = vector.extract_strided_slice %69 {offsets = [0, 0], sizes = [1, 128], strides = [1, 1]} : vector<3x128xf32> to vector<1x128xf32>
    %71 = vector.broadcast %70 : vector<1x128xf32> to vector<32x128xf32>
    %72 = arith.addf %67, %71 : vector<32x128xf32>
    %73 = arith.mulf %72, %72 : vector<32x128xf32>
    %74 = tpu.concatenate %72, %73 in 1 : vector<32x128xf32>, vector<32x128xf32> -> vector<32x256xf32>
    %c0_81 = arith.constant 0 : index
    %c0_82 = arith.constant 0 : index
    %75 = vector.load %arg8[%c0_81, %c0_82] : memref<256x8xf32, #tpu.memory_space<vmem>>, vector<256x8xf32>
    %cst_83 = arith.constant dense<0.000000e+00> : vector<32x8xf32>
    %76 = tpu.matmul %74, %75, %cst_83 {dimension_numbers = #tpu.dot_dimension_numbers<[1], [0], [0], [1], [0, 0, 1, 1], [], []>} : vector<32x256xf32>, vector<256x8xf32>, vector<32x8xf32> -> vector<32x8xf32>
    %c0_84 = arith.constant 0 : index
    %c0_85 = arith.constant 0 : index
    %77 = vector.load %arg10[%c0_84, %c0_85] : memref<2x32xf32, #tpu.memory_space<vmem>>, vector<2x32xf32>
    %cst_86 = arith.constant dense<0.000000e+00> : vector<2x8xf32>
    %78 = tpu.matmul %77, %76, %cst_86 {dimension_numbers = #tpu.dot_dimension_numbers<[1], [0], [0], [1], [0, 0, 1, 1], [], []>} : vector<2x32xf32>, vector<32x8xf32>, vector<2x8xf32> -> vector<2x8xf32>
    %79 = vector.extract_strided_slice %78 {offsets = [0, 0], sizes = [2, 4], strides = [1, 1]} : vector<2x8xf32> to vector<2x4xf32>
    %80 = vector.extract_strided_slice %78 {offsets = [0, 4], sizes = [2, 4], strides = [1, 1]} : vector<2x8xf32> to vector<2x4xf32>
    %81 = arith.mulf %79, %79 : vector<2x4xf32>
    %82 = arith.subf %80, %81 : vector<2x4xf32>
    %cst_87 = arith.constant 9.99999974E-6 : f32
    %83 = vector.broadcast %cst_87 : f32 to vector<2x4xf32>
    %84 = arith.addf %82, %83 : vector<2x4xf32>
    %85 = math.rsqrt %84 : vector<2x4xf32>
    %c0_88 = arith.constant 0 : index
    %c0_89 = arith.constant 0 : index
    %86 = vector.load %arg9[%c0_88, %c0_89] : memref<4x128xf32, #tpu.memory_space<vmem>>, vector<4x128xf32>
    %cst_90 = arith.constant dense<0.000000e+00> : vector<2x128xf32>
    %87 = tpu.matmul %85, %86, %cst_90 {dimension_numbers = #tpu.dot_dimension_numbers<[1], [0], [0], [1], [0, 0, 1, 1], [], []>} : vector<2x4xf32>, vector<4x128xf32>, vector<2x128xf32> -> vector<2x128xf32>
    %88 = vector.extract_strided_slice %69 {offsets = [1, 0], sizes = [1, 128], strides = [1, 1]} : vector<3x128xf32> to vector<1x128xf32>
    %89 = vector.broadcast %88 : vector<1x128xf32> to vector<2x128xf32>
    %90 = arith.mulf %87, %89 : vector<2x128xf32>
    %91 = vector.extract_strided_slice %69 {offsets = [2, 0], sizes = [1, 128], strides = [1, 1]} : vector<3x128xf32> to vector<1x128xf32>
    %c0_91 = arith.constant 0 : index
    %c0_92 = arith.constant 0 : index
    %92 = vector.load %arg9[%c0_91, %c0_92] : memref<4x128xf32, #tpu.memory_space<vmem>>, vector<4x128xf32>
    %cst_93 = arith.constant dense<0.000000e+00> : vector<2x128xf32>
    %93 = tpu.matmul %79, %92, %cst_93 {dimension_numbers = #tpu.dot_dimension_numbers<[1], [0], [0], [1], [0, 0, 1, 1], [], []>} : vector<2x4xf32>, vector<4x128xf32>, vector<2x128xf32> -> vector<2x128xf32>
    %94 = arith.mulf %93, %90 : vector<2x128xf32>
    %95 = vector.broadcast %91 : vector<1x128xf32> to vector<2x128xf32>
    %96 = arith.subf %95, %94 : vector<2x128xf32>
    %c0_94 = arith.constant 0 : index
    %c0_95 = arith.constant 0 : index
    %97 = vector.load %arg11[%c0_94, %c0_95] : memref<32x2xf32, #tpu.memory_space<vmem>>, vector<32x2xf32>
    %cst_96 = arith.constant dense<0.000000e+00> : vector<32x128xf32>
    %98 = tpu.matmul %97, %90, %cst_96 {dimension_numbers = #tpu.dot_dimension_numbers<[1], [0], [0], [1], [0, 0, 1, 1], [], []>} : vector<32x2xf32>, vector<2x128xf32>, vector<32x128xf32> -> vector<32x128xf32>
    %c0_97 = arith.constant 0 : index
    %c0_98 = arith.constant 0 : index
    %99 = vector.load %arg11[%c0_97, %c0_98] : memref<32x2xf32, #tpu.memory_space<vmem>>, vector<32x2xf32>
    %cst_99 = arith.constant dense<0.000000e+00> : vector<32x128xf32>
    %100 = tpu.matmul %99, %96, %cst_99 {dimension_numbers = #tpu.dot_dimension_numbers<[1], [0], [0], [1], [0, 0, 1, 1], [], []>} : vector<32x2xf32>, vector<2x128xf32>, vector<32x128xf32> -> vector<32x128xf32>
    %101 = arith.mulf %72, %98 : vector<32x128xf32>
    %102 = arith.addf %101, %100 : vector<32x128xf32>
    %103 = math.absf %102 : vector<32x128xf32>
    %cst_100 = arith.constant 0.707106769 : f32
    %104 = vector.broadcast %cst_100 : f32 to vector<32x128xf32>
    %105 = arith.mulf %103, %104 : vector<32x128xf32>
    %cst_101 = arith.constant 0.327591091 : f32
    %106 = vector.broadcast %cst_101 : f32 to vector<32x128xf32>
    %107 = arith.mulf %106, %105 : vector<32x128xf32>
    %cst_102 = arith.constant 1.000000e+00 : f32
    %108 = vector.broadcast %cst_102 : f32 to vector<32x128xf32>
    %109 = arith.addf %108, %107 : vector<32x128xf32>
    %110 = tpu.reciprocal %109 {approx = true} : vector<32x128xf32> -> vector<32x128xf32>
    %cst_103 = arith.constant 1.06140542 : f32
    %111 = vector.broadcast %cst_103 : f32 to vector<32x128xf32>
    %112 = arith.mulf %110, %111 : vector<32x128xf32>
    %cst_104 = arith.constant -1.45315206 : f32
    %113 = vector.broadcast %cst_104 : f32 to vector<32x128xf32>
    %114 = arith.addf %113, %112 : vector<32x128xf32>
    %115 = arith.mulf %110, %114 : vector<32x128xf32>
    %cst_105 = arith.constant 1.42141378 : f32
    %116 = vector.broadcast %cst_105 : f32 to vector<32x128xf32>
    %117 = arith.addf %116, %115 : vector<32x128xf32>
    %118 = arith.mulf %110, %117 : vector<32x128xf32>
    %cst_106 = arith.constant -0.284496725 : f32
    %119 = vector.broadcast %cst_106 : f32 to vector<32x128xf32>
    %120 = arith.addf %119, %118 : vector<32x128xf32>
    %121 = arith.mulf %110, %120 : vector<32x128xf32>
    %cst_107 = arith.constant 0.254829586 : f32
    %122 = vector.broadcast %cst_107 : f32 to vector<32x128xf32>
    %123 = arith.addf %122, %121 : vector<32x128xf32>
    %124 = arith.mulf %110, %123 : vector<32x128xf32>
    %cst_108 = arith.constant 0.000000e+00 : f32
    %125 = vector.broadcast %cst_108 : f32 to vector<32x128xf32>
    %126 = arith.subf %125, %105 : vector<32x128xf32>
    %127 = arith.mulf %126, %105 : vector<32x128xf32>
    %128 = math.exp %127 : vector<32x128xf32>
    %129 = arith.mulf %124, %128 : vector<32x128xf32>
    %cst_109 = arith.constant 1.000000e+00 : f32
    %130 = vector.broadcast %cst_109 : f32 to vector<32x128xf32>
    %131 = arith.subf %130, %129 : vector<32x128xf32>
    %cst_110 = arith.constant 0.000000e+00 : f32
    %132 = vector.broadcast %cst_110 : f32 to vector<32x128xf32>
    %133 = arith.cmpf oge, %102, %132 : vector<32x128xf32>
    %cst_111 = arith.constant 0.000000e+00 : f32
    %134 = vector.broadcast %cst_111 : f32 to vector<32x128xf32>
    %135 = arith.subf %134, %131 : vector<32x128xf32>
    %136 = arith.select %133, %131, %135 : vector<32x128xi1>, vector<32x128xf32>
    %cst_112 = arith.constant 5.000000e-01 : f32
    %137 = vector.broadcast %cst_112 : f32 to vector<32x128xf32>
    %138 = arith.mulf %137, %102 : vector<32x128xf32>
    %cst_113 = arith.constant 1.000000e+00 : f32
    %139 = vector.broadcast %cst_113 : f32 to vector<32x128xf32>
    %140 = arith.addf %139, %136 : vector<32x128xf32>
    %141 = arith.mulf %138, %140 : vector<32x128xf32>
    %142 = arith.truncf %141 : vector<32x128xf32> to vector<32x128xbf16>
    %c2_114 = arith.constant 2 : index
    %c0_115 = arith.constant 0 : index
    %c0_116 = arith.constant 0 : index
    %c0_117 = arith.constant 0 : index
    %143 = vector.load %arg6[%c2_114, %c0_115, %c0_116, %c0_117] : memref<4x3x128x128xbf16, #tpu.memory_space<vmem>>, vector<1x1x128x128xbf16>
    %144 = vector.shape_cast %143 : vector<1x1x128x128xbf16> to vector<128x128xbf16>
    %cst_118 = arith.constant dense<0.000000e+00> : vector<32x128xf32>
    %145 = tpu.matmul %142, %144, %cst_118 {dimension_numbers = #tpu.dot_dimension_numbers<[1], [0], [0], [1], [0, 0, 1, 1], [], []>} : vector<32x128xbf16>, vector<128x128xbf16>, vector<32x128xf32> -> vector<32x128xf32>
    %c2_119 = arith.constant 2 : index
    %c1_120 = arith.constant 1 : index
    %c0_121 = arith.constant 0 : index
    %c0_122 = arith.constant 0 : index
    %146 = vector.load %arg6[%c2_119, %c1_120, %c0_121, %c0_122] : memref<4x3x128x128xbf16, #tpu.memory_space<vmem>>, vector<1x1x128x128xbf16>
    %147 = vector.shape_cast %146 : vector<1x1x128x128xbf16> to vector<128x128xbf16>
    %cst_123 = arith.constant dense<0.000000e+00> : vector<32x128xf32>
    %148 = tpu.matmul %142, %147, %cst_123 {dimension_numbers = #tpu.dot_dimension_numbers<[1], [0], [0], [1], [0, 0, 1, 1], [], []>} : vector<32x128xbf16>, vector<128x128xbf16>, vector<32x128xf32> -> vector<32x128xf32>
    %c2_124 = arith.constant 2 : index
    %c2_125 = arith.constant 2 : index
    %c0_126 = arith.constant 0 : index
    %c0_127 = arith.constant 0 : index
    %149 = vector.load %arg6[%c2_124, %c2_125, %c0_126, %c0_127] : memref<4x3x128x128xbf16, #tpu.memory_space<vmem>>, vector<1x1x128x128xbf16>
    %150 = vector.shape_cast %149 : vector<1x1x128x128xbf16> to vector<128x128xbf16>
    %cst_128 = arith.constant dense<0.000000e+00> : vector<32x128xf32>
    %151 = tpu.matmul %142, %150, %cst_128 {dimension_numbers = #tpu.dot_dimension_numbers<[1], [0], [0], [1], [0, 0, 1, 1], [], []>} : vector<32x128xbf16>, vector<128x128xbf16>, vector<32x128xf32> -> vector<32x128xf32>
    %cst_129 = arith.constant dense<0.000000e+00> : vector<32x128xf32>
    %152 = tpu.matmul %40, %145, %cst_129 {dimension_numbers = #tpu.dot_dimension_numbers<[1], [0], [0], [1], [0, 0, 1, 1], [], []>} : vector<32x32xf32>, vector<32x128xf32>, vector<32x128xf32> -> vector<32x128xf32>
    %153 = arith.addf %152, %148 : vector<32x128xf32>
    %cst_130 = arith.constant dense<0.000000e+00> : vector<32x128xf32>
    %154 = tpu.matmul %42, %151, %cst_130 {dimension_numbers = #tpu.dot_dimension_numbers<[1], [0], [0], [1], [0, 0, 1, 1], [], []>} : vector<32x32xf32>, vector<32x128xf32>, vector<32x128xf32> -> vector<32x128xf32>
    %155 = arith.addf %153, %154 : vector<32x128xf32>
    %c1_131 = arith.constant 1 : index
    %c0_132 = arith.constant 0 : index
    %c0_133 = arith.constant 0 : index
    %156 = vector.load %arg12[%c1_131, %c0_132, %c0_133] : memref<3x3x128xf32, #tpu.memory_space<vmem>>, vector<1x3x128xf32>
    %157 = vector.shape_cast %156 : vector<1x3x128xf32> to vector<3x128xf32>
    %158 = vector.extract_strided_slice %157 {offsets = [0, 0], sizes = [1, 128], strides = [1, 1]} : vector<3x128xf32> to vector<1x128xf32>
    %159 = vector.broadcast %158 : vector<1x128xf32> to vector<32x128xf32>
    %160 = arith.addf %155, %159 : vector<32x128xf32>
    %161 = arith.mulf %160, %160 : vector<32x128xf32>
    %162 = tpu.concatenate %160, %161 in 1 : vector<32x128xf32>, vector<32x128xf32> -> vector<32x256xf32>
    %c0_134 = arith.constant 0 : index
    %c0_135 = arith.constant 0 : index
    %163 = vector.load %arg8[%c0_134, %c0_135] : memref<256x8xf32, #tpu.memory_space<vmem>>, vector<256x8xf32>
    %cst_136 = arith.constant dense<0.000000e+00> : vector<32x8xf32>
    %164 = tpu.matmul %162, %163, %cst_136 {dimension_numbers = #tpu.dot_dimension_numbers<[1], [0], [0], [1], [0, 0, 1, 1], [], []>} : vector<32x256xf32>, vector<256x8xf32>, vector<32x8xf32> -> vector<32x8xf32>
    %c0_137 = arith.constant 0 : index
    %c0_138 = arith.constant 0 : index
    %165 = vector.load %arg10[%c0_137, %c0_138] : memref<2x32xf32, #tpu.memory_space<vmem>>, vector<2x32xf32>
    %cst_139 = arith.constant dense<0.000000e+00> : vector<2x8xf32>
    %166 = tpu.matmul %165, %164, %cst_139 {dimension_numbers = #tpu.dot_dimension_numbers<[1], [0], [0], [1], [0, 0, 1, 1], [], []>} : vector<2x32xf32>, vector<32x8xf32>, vector<2x8xf32> -> vector<2x8xf32>
    %167 = vector.extract_strided_slice %166 {offsets = [0, 0], sizes = [2, 4], strides = [1, 1]} : vector<2x8xf32> to vector<2x4xf32>
    %168 = vector.extract_strided_slice %166 {offsets = [0, 4], sizes = [2, 4], strides = [1, 1]} : vector<2x8xf32> to vector<2x4xf32>
    %169 = arith.mulf %167, %167 : vector<2x4xf32>
    %170 = arith.subf %168, %169 : vector<2x4xf32>
    %cst_140 = arith.constant 9.99999974E-6 : f32
    %171 = vector.broadcast %cst_140 : f32 to vector<2x4xf32>
    %172 = arith.addf %170, %171 : vector<2x4xf32>
    %173 = math.rsqrt %172 : vector<2x4xf32>
    %c0_141 = arith.constant 0 : index
    %c0_142 = arith.constant 0 : index
    %174 = vector.load %arg9[%c0_141, %c0_142] : memref<4x128xf32, #tpu.memory_space<vmem>>, vector<4x128xf32>
    %cst_143 = arith.constant dense<0.000000e+00> : vector<2x128xf32>
    %175 = tpu.matmul %173, %174, %cst_143 {dimension_numbers = #tpu.dot_dimension_numbers<[1], [0], [0], [1], [0, 0, 1, 1], [], []>} : vector<2x4xf32>, vector<4x128xf32>, vector<2x128xf32> -> vector<2x128xf32>
    %176 = vector.extract_strided_slice %157 {offsets = [1, 0], sizes = [1, 128], strides = [1, 1]} : vector<3x128xf32> to vector<1x128xf32>
    %177 = vector.broadcast %176 : vector<1x128xf32> to vector<2x128xf32>
    %178 = arith.mulf %175, %177 : vector<2x128xf32>
    %179 = vector.extract_strided_slice %157 {offsets = [2, 0], sizes = [1, 128], strides = [1, 1]} : vector<3x128xf32> to vector<1x128xf32>
    %c0_144 = arith.constant 0 : index
    %c0_145 = arith.constant 0 : index
    %180 = vector.load %arg9[%c0_144, %c0_145] : memref<4x128xf32, #tpu.memory_space<vmem>>, vector<4x128xf32>
    %cst_146 = arith.constant dense<0.000000e+00> : vector<2x128xf32>
    %181 = tpu.matmul %167, %180, %cst_146 {dimension_numbers = #tpu.dot_dimension_numbers<[1], [0], [0], [1], [0, 0, 1, 1], [], []>} : vector<2x4xf32>, vector<4x128xf32>, vector<2x128xf32> -> vector<2x128xf32>
    %182 = arith.mulf %181, %178 : vector<2x128xf32>
    %183 = vector.broadcast %179 : vector<1x128xf32> to vector<2x128xf32>
    %184 = arith.subf %183, %182 : vector<2x128xf32>
    %c0_147 = arith.constant 0 : index
    %c0_148 = arith.constant 0 : index
    %185 = vector.load %arg11[%c0_147, %c0_148] : memref<32x2xf32, #tpu.memory_space<vmem>>, vector<32x2xf32>
    %cst_149 = arith.constant dense<0.000000e+00> : vector<32x128xf32>
    %186 = tpu.matmul %185, %178, %cst_149 {dimension_numbers = #tpu.dot_dimension_numbers<[1], [0], [0], [1], [0, 0, 1, 1], [], []>} : vector<32x2xf32>, vector<2x128xf32>, vector<32x128xf32> -> vector<32x128xf32>
    %c0_150 = arith.constant 0 : index
    %c0_151 = arith.constant 0 : index
    %187 = vector.load %arg11[%c0_150, %c0_151] : memref<32x2xf32, #tpu.memory_space<vmem>>, vector<32x2xf32>
    %cst_152 = arith.constant dense<0.000000e+00> : vector<32x128xf32>
    %188 = tpu.matmul %187, %184, %cst_152 {dimension_numbers = #tpu.dot_dimension_numbers<[1], [0], [0], [1], [0, 0, 1, 1], [], []>} : vector<32x2xf32>, vector<2x128xf32>, vector<32x128xf32> -> vector<32x128xf32>
    %189 = arith.mulf %160, %186 : vector<32x128xf32>
    %190 = arith.addf %189, %188 : vector<32x128xf32>
    %191 = math.absf %190 : vector<32x128xf32>
    %cst_153 = arith.constant 0.707106769 : f32
    %192 = vector.broadcast %cst_153 : f32 to vector<32x128xf32>
    %193 = arith.mulf %191, %192 : vector<32x128xf32>
    %cst_154 = arith.constant 0.327591091 : f32
    %194 = vector.broadcast %cst_154 : f32 to vector<32x128xf32>
    %195 = arith.mulf %194, %193 : vector<32x128xf32>
    %cst_155 = arith.constant 1.000000e+00 : f32
    %196 = vector.broadcast %cst_155 : f32 to vector<32x128xf32>
    %197 = arith.addf %196, %195 : vector<32x128xf32>
    %198 = tpu.reciprocal %197 {approx = true} : vector<32x128xf32> -> vector<32x128xf32>
    %cst_156 = arith.constant 1.06140542 : f32
    %199 = vector.broadcast %cst_156 : f32 to vector<32x128xf32>
    %200 = arith.mulf %198, %199 : vector<32x128xf32>
    %cst_157 = arith.constant -1.45315206 : f32
    %201 = vector.broadcast %cst_157 : f32 to vector<32x128xf32>
    %202 = arith.addf %201, %200 : vector<32x128xf32>
    %203 = arith.mulf %198, %202 : vector<32x128xf32>
    %cst_158 = arith.constant 1.42141378 : f32
    %204 = vector.broadcast %cst_158 : f32 to vector<32x128xf32>
    %205 = arith.addf %204, %203 : vector<32x128xf32>
    %206 = arith.mulf %198, %205 : vector<32x128xf32>
    %cst_159 = arith.constant -0.284496725 : f32
    %207 = vector.broadcast %cst_159 : f32 to vector<32x128xf32>
    %208 = arith.addf %207, %206 : vector<32x128xf32>
    %209 = arith.mulf %198, %208 : vector<32x128xf32>
    %cst_160 = arith.constant 0.254829586 : f32
    %210 = vector.broadcast %cst_160 : f32 to vector<32x128xf32>
    %211 = arith.addf %210, %209 : vector<32x128xf32>
    %212 = arith.mulf %198, %211 : vector<32x128xf32>
    %cst_161 = arith.constant 0.000000e+00 : f32
    %213 = vector.broadcast %cst_161 : f32 to vector<32x128xf32>
    %214 = arith.subf %213, %193 : vector<32x128xf32>
    %215 = arith.mulf %214, %193 : vector<32x128xf32>
    %216 = math.exp %215 : vector<32x128xf32>
    %217 = arith.mulf %212, %216 : vector<32x128xf32>
    %cst_162 = arith.constant 1.000000e+00 : f32
    %218 = vector.broadcast %cst_162 : f32 to vector<32x128xf32>
    %219 = arith.subf %218, %217 : vector<32x128xf32>
    %cst_163 = arith.constant 0.000000e+00 : f32
    %220 = vector.broadcast %cst_163 : f32 to vector<32x128xf32>
    %221 = arith.cmpf oge, %190, %220 : vector<32x128xf32>
    %cst_164 = arith.constant 0.000000e+00 : f32
    %222 = vector.broadcast %cst_164 : f32 to vector<32x128xf32>
    %223 = arith.subf %222, %219 : vector<32x128xf32>
    %224 = arith.select %221, %219, %223 : vector<32x128xi1>, vector<32x128xf32>
    %cst_165 = arith.constant 5.000000e-01 : f32
    %225 = vector.broadcast %cst_165 : f32 to vector<32x128xf32>
    %226 = arith.mulf %225, %190 : vector<32x128xf32>
    %cst_166 = arith.constant 1.000000e+00 : f32
    %227 = vector.broadcast %cst_166 : f32 to vector<32x128xf32>
    %228 = arith.addf %227, %224 : vector<32x128xf32>
    %229 = arith.mulf %226, %228 : vector<32x128xf32>
    %230 = arith.truncf %229 : vector<32x128xf32> to vector<32x128xbf16>
    %c3_167 = arith.constant 3 : index
    %c0_168 = arith.constant 0 : index
    %c0_169 = arith.constant 0 : index
    %c0_170 = arith.constant 0 : index
    %231 = vector.load %arg6[%c3_167, %c0_168, %c0_169, %c0_170] : memref<4x3x128x128xbf16, #tpu.memory_space<vmem>>, vector<1x1x128x128xbf16>
    %232 = vector.shape_cast %231 : vector<1x1x128x128xbf16> to vector<128x128xbf16>
    %cst_171 = arith.constant dense<0.000000e+00> : vector<32x128xf32>
    %233 = tpu.matmul %230, %232, %cst_171 {dimension_numbers = #tpu.dot_dimension_numbers<[1], [0], [0], [1], [0, 0, 1, 1], [], []>} : vector<32x128xbf16>, vector<128x128xbf16>, vector<32x128xf32> -> vector<32x128xf32>
    %c3_172 = arith.constant 3 : index
    %c1_173 = arith.constant 1 : index
    %c0_174 = arith.constant 0 : index
    %c0_175 = arith.constant 0 : index
    %234 = vector.load %arg6[%c3_172, %c1_173, %c0_174, %c0_175] : memref<4x3x128x128xbf16, #tpu.memory_space<vmem>>, vector<1x1x128x128xbf16>
    %235 = vector.shape_cast %234 : vector<1x1x128x128xbf16> to vector<128x128xbf16>
    %cst_176 = arith.constant dense<0.000000e+00> : vector<32x128xf32>
    %236 = tpu.matmul %230, %235, %cst_176 {dimension_numbers = #tpu.dot_dimension_numbers<[1], [0], [0], [1], [0, 0, 1, 1], [], []>} : vector<32x128xbf16>, vector<128x128xbf16>, vector<32x128xf32> -> vector<32x128xf32>
    %c3_177 = arith.constant 3 : index
    %c2_178 = arith.constant 2 : index
    %c0_179 = arith.constant 0 : index
    %c0_180 = arith.constant 0 : index
    %237 = vector.load %arg6[%c3_177, %c2_178, %c0_179, %c0_180] : memref<4x3x128x128xbf16, #tpu.memory_space<vmem>>, vector<1x1x128x128xbf16>
    %238 = vector.shape_cast %237 : vector<1x1x128x128xbf16> to vector<128x128xbf16>
    %cst_181 = arith.constant dense<0.000000e+00> : vector<32x128xf32>
    %239 = tpu.matmul %230, %238, %cst_181 {dimension_numbers = #tpu.dot_dimension_numbers<[1], [0], [0], [1], [0, 0, 1, 1], [], []>} : vector<32x128xbf16>, vector<128x128xbf16>, vector<32x128xf32> -> vector<32x128xf32>
    %cst_182 = arith.constant dense<0.000000e+00> : vector<32x128xf32>
    %240 = tpu.matmul %40, %233, %cst_182 {dimension_numbers = #tpu.dot_dimension_numbers<[1], [0], [0], [1], [0, 0, 1, 1], [], []>} : vector<32x32xf32>, vector<32x128xf32>, vector<32x128xf32> -> vector<32x128xf32>
    %241 = arith.addf %240, %236 : vector<32x128xf32>
    %cst_183 = arith.constant dense<0.000000e+00> : vector<32x128xf32>
    %242 = tpu.matmul %42, %239, %cst_183 {dimension_numbers = #tpu.dot_dimension_numbers<[1], [0], [0], [1], [0, 0, 1, 1], [], []>} : vector<32x32xf32>, vector<32x128xf32>, vector<32x128xf32> -> vector<32x128xf32>
    %243 = arith.addf %241, %242 : vector<32x128xf32>
    %c2_184 = arith.constant 2 : index
    %c0_185 = arith.constant 0 : index
    %c0_186 = arith.constant 0 : index
    %244 = vector.load %arg12[%c2_184, %c0_185, %c0_186] : memref<3x3x128xf32, #tpu.memory_space<vmem>>, vector<1x3x128xf32>
    %245 = vector.shape_cast %244 : vector<1x3x128xf32> to vector<3x128xf32>
    %246 = vector.extract_strided_slice %245 {offsets = [0, 0], sizes = [1, 128], strides = [1, 1]} : vector<3x128xf32> to vector<1x128xf32>
    %247 = vector.broadcast %246 : vector<1x128xf32> to vector<32x128xf32>
    %248 = arith.addf %243, %247 : vector<32x128xf32>
    %249 = arith.mulf %248, %248 : vector<32x128xf32>
    %250 = tpu.concatenate %248, %249 in 1 : vector<32x128xf32>, vector<32x128xf32> -> vector<32x256xf32>
    %c0_187 = arith.constant 0 : index
    %c0_188 = arith.constant 0 : index
    %251 = vector.load %arg8[%c0_187, %c0_188] : memref<256x8xf32, #tpu.memory_space<vmem>>, vector<256x8xf32>
    %cst_189 = arith.constant dense<0.000000e+00> : vector<32x8xf32>
    %252 = tpu.matmul %250, %251, %cst_189 {dimension_numbers = #tpu.dot_dimension_numbers<[1], [0], [0], [1], [0, 0, 1, 1], [], []>} : vector<32x256xf32>, vector<256x8xf32>, vector<32x8xf32> -> vector<32x8xf32>
    %c0_190 = arith.constant 0 : index
    %c0_191 = arith.constant 0 : index
    %253 = vector.load %arg10[%c0_190, %c0_191] : memref<2x32xf32, #tpu.memory_space<vmem>>, vector<2x32xf32>
    %cst_192 = arith.constant dense<0.000000e+00> : vector<2x8xf32>
    %254 = tpu.matmul %253, %252, %cst_192 {dimension_numbers = #tpu.dot_dimension_numbers<[1], [0], [0], [1], [0, 0, 1, 1], [], []>} : vector<2x32xf32>, vector<32x8xf32>, vector<2x8xf32> -> vector<2x8xf32>
    %255 = vector.extract_strided_slice %254 {offsets = [0, 0], sizes = [2, 4], strides = [1, 1]} : vector<2x8xf32> to vector<2x4xf32>
    %256 = vector.extract_strided_slice %254 {offsets = [0, 4], sizes = [2, 4], strides = [1, 1]} : vector<2x8xf32> to vector<2x4xf32>
    %257 = arith.mulf %255, %255 : vector<2x4xf32>
    %258 = arith.subf %256, %257 : vector<2x4xf32>
    %cst_193 = arith.constant 9.99999974E-6 : f32
    %259 = vector.broadcast %cst_193 : f32 to vector<2x4xf32>
    %260 = arith.addf %258, %259 : vector<2x4xf32>
    %261 = math.rsqrt %260 : vector<2x4xf32>
    %c0_194 = arith.constant 0 : index
    %c0_195 = arith.constant 0 : index
    %262 = vector.load %arg9[%c0_194, %c0_195] : memref<4x128xf32, #tpu.memory_space<vmem>>, vector<4x128xf32>
    %cst_196 = arith.constant dense<0.000000e+00> : vector<2x128xf32>
    %263 = tpu.matmul %261, %262, %cst_196 {dimension_numbers = #tpu.dot_dimension_numbers<[1], [0], [0], [1], [0, 0, 1, 1], [], []>} : vector<2x4xf32>, vector<4x128xf32>, vector<2x128xf32> -> vector<2x128xf32>
    %264 = vector.extract_strided_slice %245 {offsets = [1, 0], sizes = [1, 128], strides = [1, 1]} : vector<3x128xf32> to vector<1x128xf32>
    %265 = vector.broadcast %264 : vector<1x128xf32> to vector<2x128xf32>
    %266 = arith.mulf %263, %265 : vector<2x128xf32>
    %267 = vector.extract_strided_slice %245 {offsets = [2, 0], sizes = [1, 128], strides = [1, 1]} : vector<3x128xf32> to vector<1x128xf32>
    %c0_197 = arith.constant 0 : index
    %c0_198 = arith.constant 0 : index
    %268 = vector.load %arg9[%c0_197, %c0_198] : memref<4x128xf32, #tpu.memory_space<vmem>>, vector<4x128xf32>
    %cst_199 = arith.constant dense<0.000000e+00> : vector<2x128xf32>
    %269 = tpu.matmul %255, %268, %cst_199 {dimension_numbers = #tpu.dot_dimension_numbers<[1], [0], [0], [1], [0, 0, 1, 1], [], []>} : vector<2x4xf32>, vector<4x128xf32>, vector<2x128xf32> -> vector<2x128xf32>
    %270 = arith.mulf %269, %266 : vector<2x128xf32>
    %271 = vector.broadcast %267 : vector<1x128xf32> to vector<2x128xf32>
    %272 = arith.subf %271, %270 : vector<2x128xf32>
    %c0_200 = arith.constant 0 : index
    %c0_201 = arith.constant 0 : index
    %273 = vector.load %arg11[%c0_200, %c0_201] : memref<32x2xf32, #tpu.memory_space<vmem>>, vector<32x2xf32>
    %cst_202 = arith.constant dense<0.000000e+00> : vector<32x128xf32>
    %274 = tpu.matmul %273, %266, %cst_202 {dimension_numbers = #tpu.dot_dimension_numbers<[1], [0], [0], [1], [0, 0, 1, 1], [], []>} : vector<32x2xf32>, vector<2x128xf32>, vector<32x128xf32> -> vector<32x128xf32>
    %c0_203 = arith.constant 0 : index
    %c0_204 = arith.constant 0 : index
    %275 = vector.load %arg11[%c0_203, %c0_204] : memref<32x2xf32, #tpu.memory_space<vmem>>, vector<32x2xf32>
    %cst_205 = arith.constant dense<0.000000e+00> : vector<32x128xf32>
    %276 = tpu.matmul %275, %272, %cst_205 {dimension_numbers = #tpu.dot_dimension_numbers<[1], [0], [0], [1], [0, 0, 1, 1], [], []>} : vector<32x2xf32>, vector<2x128xf32>, vector<32x128xf32> -> vector<32x128xf32>
    %277 = arith.mulf %248, %274 : vector<32x128xf32>
    %278 = arith.addf %277, %276 : vector<32x128xf32>
    %279 = math.absf %278 : vector<32x128xf32>
    %cst_206 = arith.constant 0.707106769 : f32
    %280 = vector.broadcast %cst_206 : f32 to vector<32x128xf32>
    %281 = arith.mulf %279, %280 : vector<32x128xf32>
    %cst_207 = arith.constant 0.327591091 : f32
    %282 = vector.broadcast %cst_207 : f32 to vector<32x128xf32>
    %283 = arith.mulf %282, %281 : vector<32x128xf32>
    %cst_208 = arith.constant 1.000000e+00 : f32
    %284 = vector.broadcast %cst_208 : f32 to vector<32x128xf32>
    %285 = arith.addf %284, %283 : vector<32x128xf32>
    %286 = tpu.reciprocal %285 {approx = true} : vector<32x128xf32> -> vector<32x128xf32>
    %cst_209 = arith.constant 1.06140542 : f32
    %287 = vector.broadcast %cst_209 : f32 to vector<32x128xf32>
    %288 = arith.mulf %286, %287 : vector<32x128xf32>
    %cst_210 = arith.constant -1.45315206 : f32
    %289 = vector.broadcast %cst_210 : f32 to vector<32x128xf32>
    %290 = arith.addf %289, %288 : vector<32x128xf32>
    %291 = arith.mulf %286, %290 : vector<32x128xf32>
    %cst_211 = arith.constant 1.42141378 : f32
    %292 = vector.broadcast %cst_211 : f32 to vector<32x128xf32>
    %293 = arith.addf %292, %291 : vector<32x128xf32>
    %294 = arith.mulf %286, %293 : vector<32x128xf32>
    %cst_212 = arith.constant -0.284496725 : f32
    %295 = vector.broadcast %cst_212 : f32 to vector<32x128xf32>
    %296 = arith.addf %295, %294 : vector<32x128xf32>
    %297 = arith.mulf %286, %296 : vector<32x128xf32>
    %cst_213 = arith.constant 0.254829586 : f32
    %298 = vector.broadcast %cst_213 : f32 to vector<32x128xf32>
    %299 = arith.addf %298, %297 : vector<32x128xf32>
    %300 = arith.mulf %286, %299 : vector<32x128xf32>
    %cst_214 = arith.constant 0.000000e+00 : f32
    %301 = vector.broadcast %cst_214 : f32 to vector<32x128xf32>
    %302 = arith.subf %301, %281 : vector<32x128xf32>
    %303 = arith.mulf %302, %281 : vector<32x128xf32>
    %304 = math.exp %303 : vector<32x128xf32>
    %305 = arith.mulf %300, %304 : vector<32x128xf32>
    %cst_215 = arith.constant 1.000000e+00 : f32
    %306 = vector.broadcast %cst_215 : f32 to vector<32x128xf32>
    %307 = arith.subf %306, %305 : vector<32x128xf32>
    %cst_216 = arith.constant 0.000000e+00 : f32
    %308 = vector.broadcast %cst_216 : f32 to vector<32x128xf32>
    %309 = arith.cmpf oge, %278, %308 : vector<32x128xf32>
    %cst_217 = arith.constant 0.000000e+00 : f32
    %310 = vector.broadcast %cst_217 : f32 to vector<32x128xf32>
    %311 = arith.subf %310, %307 : vector<32x128xf32>
    %312 = arith.select %309, %307, %311 : vector<32x128xi1>, vector<32x128xf32>
    %cst_218 = arith.constant 5.000000e-01 : f32
    %313 = vector.broadcast %cst_218 : f32 to vector<32x128xf32>
    %314 = arith.mulf %313, %278 : vector<32x128xf32>
    %cst_219 = arith.constant 1.000000e+00 : f32
    %315 = vector.broadcast %cst_219 : f32 to vector<32x128xf32>
    %316 = arith.addf %315, %312 : vector<32x128xf32>
    %317 = arith.mulf %314, %316 : vector<32x128xf32>
    %c0_220 = arith.constant 0 : index
    %c0_221 = arith.constant 0 : index
    %318 = vector.load %arg13[%c0_220, %c0_221] : memref<32x128xf32, #tpu.memory_space<vmem>>, vector<32x128xf32>
    tpu.vector_store %arg13[%c0_220, %c0_221], %317 {strides = array<i32>} : memref<32x128xf32, #tpu.memory_space<vmem>>, vector<32x128xf32>,
    return
  }
  func.func @transform_0(%arg0: i32) -> (i32, i32) {
    %c0_i32 = arith.constant 0 : i32
    %c0_i32_0 = arith.constant 0 : i32
    return %arg0, %c0_i32 : i32, i32
  }
  func.func @transform_1(%arg0: i32) -> (i32, i32) {
    %c0_i32 = arith.constant 0 : i32
    %c0_i32_0 = arith.constant 0 : i32
    return %arg0, %c0_i32 : i32, i32
  }
  func.func @transform_2(%arg0: i32) -> (i32, i32, i32) {
    %c0_i32 = arith.constant 0 : i32
    %c0_i32_0 = arith.constant 0 : i32
    %c0_i32_1 = arith.constant 0 : i32
    %c0_i32_2 = arith.constant 0 : i32
    return %c0_i32, %c0_i32_0, %c0_i32_1 : i32, i32, i32
  }
  func.func @transform_3(%arg0: i32) -> (i32, i32, i32) {
    %c0_i32 = arith.constant 0 : i32
    %c0_i32_0 = arith.constant 0 : i32
    %c0_i32_1 = arith.constant 0 : i32
    %c0_i32_2 = arith.constant 0 : i32
    return %c0_i32, %c0_i32_0, %c0_i32_1 : i32, i32, i32
  }
  func.func @transform_4(%arg0: i32) -> (i32, i32) {
    %c0_i32 = arith.constant 0 : i32
    %c0_i32_0 = arith.constant 0 : i32
    %c0_i32_1 = arith.constant 0 : i32
    return %c0_i32, %c0_i32_0 : i32, i32
  }
  func.func @transform_5(%arg0: i32) -> (i32, i32, i32, i32) {
    %c0_i32 = arith.constant 0 : i32
    %c0_i32_0 = arith.constant 0 : i32
    %c0_i32_1 = arith.constant 0 : i32
    %c0_i32_2 = arith.constant 0 : i32
    %c0_i32_3 = arith.constant 0 : i32
    return %c0_i32, %c0_i32_0, %c0_i32_1, %c0_i32_2 : i32, i32, i32, i32
  }
  func.func @transform_6(%arg0: i32) -> (i32, i32, i32) {
    %c0_i32 = arith.constant 0 : i32
    %c0_i32_0 = arith.constant 0 : i32
    %c0_i32_1 = arith.constant 0 : i32
    %c0_i32_2 = arith.constant 0 : i32
    return %c0_i32, %c0_i32_0, %c0_i32_1 : i32, i32, i32
  }
  func.func @transform_7(%arg0: i32) -> (i32, i32) {
    %c0_i32 = arith.constant 0 : i32
    %c0_i32_0 = arith.constant 0 : i32
    %c0_i32_1 = arith.constant 0 : i32
    return %c0_i32, %c0_i32_0 : i32, i32
  }
  func.func @transform_8(%arg0: i32) -> (i32, i32) {
    %c0_i32 = arith.constant 0 : i32
    %c0_i32_0 = arith.constant 0 : i32
    %c0_i32_1 = arith.constant 0 : i32
    return %c0_i32, %c0_i32_0 : i32, i32
  }
  func.func @transform_9(%arg0: i32) -> (i32, i32) {
    %c0_i32 = arith.constant 0 : i32
    %c0_i32_0 = arith.constant 0 : i32
    %c0_i32_1 = arith.constant 0 : i32
    return %c0_i32, %c0_i32_0 : i32, i32
  }
  func.func @transform_10(%arg0: i32) -> (i32, i32) {
    %c0_i32 = arith.constant 0 : i32
    %c0_i32_0 = arith.constant 0 : i32
    %c0_i32_1 = arith.constant 0 : i32
    return %c0_i32, %c0_i32_0 : i32, i32
  }
  func.func @transform_11(%arg0: i32) -> (i32, i32, i32) {
    %c0_i32 = arith.constant 0 : i32
    %c0_i32_0 = arith.constant 0 : i32
    %c0_i32_1 = arith.constant 0 : i32
    %c0_i32_2 = arith.constant 0 : i32
    return %c0_i32, %c0_i32_0, %c0_i32_1 : i32, i32, i32
  }
  func.func @transform_12(%arg0: i32) -> (i32, i32) {
    %c0_i32 = arith.constant 0 : i32
    %c0_i32_0 = arith.constant 0 : i32
    return %arg0, %c0_i32 : i32, i32
  }
}

</mosaic_0001>

<llo_original>
// kernel: spec_decoder_forward.1
$region0: #{spec_decoder_forward.1}
  #allocation0 [shape = 'u32[]', space=smem, size = 0x4, offset = 0x4, fixed_abs, tag = 'smem constant byte address 0x4 - core index']
  #allocation1 [shape = 'u32[144,128]{1,0:T(1,128)}', space=vmem, size = 0x12000, scoped, tag = 'internal scratch']
  %s0 = inlined_call_operand.vmem [shape: bf16[32,64], index: 0, kind: input, shape index: {}]
  %s1 = inlined_call_operand.vmem [shape: bf16[64,128], index: 1, kind: input, shape index: {}]
  %s2 = inlined_call_operand.vmem [shape: bf16[5,64,128], index: 2, kind: input, shape index: {}]
  %s3 = inlined_call_operand.vmem [shape: f32[5,32,16], index: 3, kind: input, shape index: {}]
  %s4 = inlined_call_operand.vmem [shape: f32[32,128], index: 4, kind: input, shape index: {}]
  %s5 = inlined_call_operand.vmem [shape: bf16[4,3,128,128], index: 5, kind: input, shape index: {}]
  %s6 = inlined_call_operand.vmem [shape: f32[2,32,32], index: 6, kind: input, shape index: {}]
  %s7 = inlined_call_operand.vmem [shape: f32[256,8], index: 7, kind: input, shape index: {}]
  %s8 = inlined_call_operand.vmem [shape: f32[4,128], index: 8, kind: input, shape index: {}]
  %s9 = inlined_call_operand.vmem [shape: f32[2,32], index: 9, kind: input, shape index: {}]
  %s10 = inlined_call_operand.vmem [shape: f32[32,2], index: 10, kind: input, shape index: {}]
  %s11 = inlined_call_operand.vmem [shape: f32[3,3,128], index: 11, kind: input, shape index: {}]
  %s12 = inlined_call_operand.vmem [shape: f32[64,128], index: 12, kind: output, shape index: {}]
  %s13 = sld [smem:[#allocation0]]
  $region81: #{spec_decoder_forward.1} parent=0
    _
  %s15 = ssub.s32 1, %s13
  %s16 = scalar_select 0, %s15, %s13
  loop: start=0, step=1, limit=4
  $region2: #{spec_decoder_forward.1} parent=0 // loop_pre_header
    _
  $region3: #{spec_decoder_forward.1} parent=0 // loop_header
    %s18 = sphi 0, %s22
    %p19 = scmp.ge.s32.totalorder %s18, 4
    %s28 = sphi 0, %s30
    %s31 = sphi 0, %s28
    %s32 = sphi 0, %s31
    %s48 = sphi 0, %s32
    %s54 = sphi 0, %s56
    %s57 = sphi 0, %s54
    %s58 = sphi 0, %s57
    %s74 = sphi 0, %s58
    %s78 = sphi 0, %s78
    %s80 = sphi 0, %s78
    %s81 = sphi 0, %s80
    %s95 = sphi 0, %s81
    %s99 = sphi 0, %s99
    %s101 = sphi 0, %s99
    %s102 = sphi 0, %s101
    %s116 = sphi 0, %s102
    %s120 = sphi 0, %s120
    %s122 = sphi 0, %s120
    %s123 = sphi 0, %s122
    %s137 = sphi 0, %s123
    %s141 = sphi 0, %s141
    %s143 = sphi 0, %s141
    %s144 = sphi 0, %s143
    %s158 = sphi 0, %s144
    %s162 = sphi 0, %s162
    %s164 = sphi 0, %s162
    %s165 = sphi 0, %s164
    %s179 = sphi 0, %s165
    %s183 = sphi 0, %s183
    %s185 = sphi 0, %s183
    %s186 = sphi 0, %s185
    %s200 = sphi 0, %s186
    %s204 = sphi 0, %s204
    %s206 = sphi 0, %s204
    %s207 = sphi 0, %s206
    %s221 = sphi 0, %s207
    %s225 = sphi 0, %s225
    %s227 = sphi 0, %s225
    %s228 = sphi 0, %s227
    %s242 = sphi 0, %s228
    %s246 = sphi 0, %s246
    %s248 = sphi 0, %s246
    %s249 = sphi 0, %s248
    %s263 = sphi 0, %s249
    %s267 = sphi 0, %s267
    %s269 = sphi 0, %s267
    %s270 = sphi 0, %s269
    %s284 = sphi 0, %s270
    %s290 = sphi 0, %s292
    %s293 = sphi 0, %s290
    %s294 = sphi 0, %s293
    %s310 = sphi 0, %s294
  $region4: #{spec_decoder_forward.1} parent=0 // loop_header_branch
    %21 = sbr.rel (%p19) target = $region8
  $region5: #{spec_decoder_forward.1} parent=0 // loop_body
    %s23 = ssub.s32 %s18, 1
    %s24 = ssub.s32 %s18, 2
    %s25 = sadd.s32 %s18, 1
    %s26 = ssub.s32 %s18, %s25
    %p27 = scmp.eq.s32.totalorder %s26, 0
    %s29 = sadd.s32 %s28, 1
    %s30 = scalar_select %p27, %s28, %s29
    %p33 = pneg %p27
    %p34 = scmp.eq.s32.totalorder %s18, 1
    %p35 = por %p33, %p34
    %p36 = scmp.ne.s32.totalorder %s28, %s31
    %p37 = scmp.eq.s32.totalorder %s18, 0
    %p38 = por %p36, %p37
    %p39 = scmp.ne.s32.totalorder %s28, %s31
    %p40 = scmp.eq.s32.totalorder %s23, 1
    %p41 = por %p39, %p40
    %p42 = scmp.ne.s32.totalorder %s31, %s32
    %p43 = scmp.eq.s32.totalorder %s23, 0
    %p44 = por %p42, %p43
    %p45 = scmp.ne.s32.totalorder %s31, %s32
    %p46 = scmp.eq.s32.totalorder %s24, 1
    %p47 = por %p45, %p46
    %p49 = scmp.ne.s32.totalorder %s32, %s48
    %p50 = scmp.eq.s32.totalorder %s24, 0
    %p51 = por %p49, %p50
    %s52 = ssub.s32 %s18, %s25
    %p53 = scmp.eq.s32.totalorder %s52, 0
    %s55 = sadd.s32 %s54, 1
    %s56 = scalar_select %p53, %s54, %s55
    %p59 = pneg %p53
    %p60 = scmp.eq.s32.totalorder %s18, 1
    %p61 = por %p59, %p60
    %p62 = scmp.ne.s32.totalorder %s54, %s57
    %p63 = scmp.eq.s32.totalorder %s18, 0
    %p64 = por %p62, %p63
    %p65 = scmp.ne.s32.totalorder %s54, %s57
    %p66 = scmp.eq.s32.totalorder %s23, 1
    %p67 = por %p65, %p66
    %p68 = scmp.ne.s32.totalorder %s57, %s58
    %p69 = scmp.eq.s32.totalorder %s23, 0
    %p70 = por %p68, %p69
    %p71 = scmp.ne.s32.totalorder %s57, %s58
    %p72 = scmp.eq.s32.totalorder %s24, 1
    %p73 = por %p71, %p72
    %p75 = scmp.ne.s32.totalorder %s58, %s74
    %p76 = scmp.eq.s32.totalorder %s24, 0
    %p77 = por %p75, %p76
    %s79 = sadd.s32 %s78, 1
    %p82 = scmp.eq.s32.totalorder %s18, 1
    %p83 = scmp.ne.s32.totalorder %s78, %s80
    %p84 = scmp.eq.s32.totalorder %s18, 0
    %p85 = por %p83, %p84
    %p86 = scmp.ne.s32.totalorder %s78, %s80
    %p87 = scmp.eq.s32.totalorder %s23, 1
    %p88 = por %p86, %p87
    %p89 = scmp.ne.s32.totalorder %s80, %s81
    %p90 = scmp.eq.s32.totalorder %s23, 0
    %p91 = por %p89, %p90
    %p92 = scmp.ne.s32.totalorder %s80, %s81
    %p93 = scmp.eq.s32.totalorder %s24, 1
    %p94 = por %p92, %p93
    %p96 = scmp.ne.s32.totalorder %s81, %s95
    %p97 = scmp.eq.s32.totalorder %s24, 0
    %p98 = por %p96, %p97
    %s100 = sadd.s32 %s99, 1
    %p103 = scmp.eq.s32.totalorder %s18, 1
    %p104 = scmp.ne.s32.totalorder %s99, %s101
    %p105 = scmp.eq.s32.totalorder %s18, 0
    %p106 = por %p104, %p105
    %p107 = scmp.ne.s32.totalorder %s99, %s101
    %p108 = scmp.eq.s32.totalorder %s23, 1
    %p109 = por %p107, %p108
    %p110 = scmp.ne.s32.totalorder %s101, %s102
    %p111 = scmp.eq.s32.totalorder %s23, 0
    %p112 = por %p110, %p111
    %p113 = scmp.ne.s32.totalorder %s101, %s102
    %p114 = scmp.eq.s32.totalorder %s24, 1
    %p115 = por %p113, %p114
    %p117 = scmp.ne.s32.totalorder %s102, %s116
    %p118 = scmp.eq.s32.totalorder %s24, 0
    %p119 = por %p117, %p118
    %s121 = sadd.s32 %s120, 1
    %p124 = scmp.eq.s32.totalorder %s18, 1
    %p125 = scmp.ne.s32.totalorder %s120, %s122
    %p126 = scmp.eq.s32.totalorder %s18, 0
    %p127 = por %p125, %p126
    %p128 = scmp.ne.s32.totalorder %s120, %s122
    %p129 = scmp.eq.s32.totalorder %s23, 1
    %p130 = por %p128, %p129
    %p131 = scmp.ne.s32.totalorder %s122, %s123
    %p132 = scmp.eq.s32.totalorder %s23, 0
    %p133 = por %p131, %p132
    %p134 = scmp.ne.s32.totalorder %s122, %s123
    %p135 = scmp.eq.s32.totalorder %s24, 1
    %p136 = por %p134, %p135
    %p138 = scmp.ne.s32.totalorder %s123, %s137
    %p139 = scmp.eq.s32.totalorder %s24, 0
    %p140 = por %p138, %p139
    %s142 = sadd.s32 %s141, 1
    %p145 = scmp.eq.s32.totalorder %s18, 1
    %p146 = scmp.ne.s32.totalorder %s141, %s143
    %p147 = scmp.eq.s32.totalorder %s18, 0
    %p148 = por %p146, %p147
    %p149 = scmp.ne.s32.totalorder %s141, %s143
    %p150 = scmp.eq.s32.totalorder %s23, 1
    %p151 = por %p149, %p150
    %p152 = scmp.ne.s32.totalorder %s143, %s144
    %p153 = scmp.eq.s32.totalorder %s23, 0
    %p154 = por %p152, %p153
    %p155 = scmp.ne.s32.totalorder %s143, %s144
    %p156 = scmp.eq.s32.totalorder %s24, 1
    %p157 = por %p155, %p156
    %p159 = scmp.ne.s32.totalorder %s144, %s158
    %p160 = scmp.eq.s32.totalorder %s24, 0
    %p161 = por %p159, %p160
    %s163 = sadd.s32 %s162, 1
    %p166 = scmp.eq.s32.totalorder %s18, 1
    %p167 = scmp.ne.s32.totalorder %s162, %s164
    %p168 = scmp.eq.s32.totalorder %s18, 0
    %p169 = por %p167, %p168
    %p170 = scmp.ne.s32.totalorder %s162, %s164
    %p171 = scmp.eq.s32.totalorder %s23, 1
    %p172 = por %p170, %p171
    %p173 = scmp.ne.s32.totalorder %s164, %s165
    %p174 = scmp.eq.s32.totalorder %s23, 0
    %p175 = por %p173, %p174
    %p176 = scmp.ne.s32.totalorder %s164, %s165
    %p177 = scmp.eq.s32.totalorder %s24, 1
    %p178 = por %p176, %p177
    %p180 = scmp.ne.s32.totalorder %s165, %s179
    %p181 = scmp.eq.s32.totalorder %s24, 0
    %p182 = por %p180, %p181
    %s184 = sadd.s32 %s183, 1
    %p187 = scmp.eq.s32.totalorder %s18, 1
    %p188 = scmp.ne.s32.totalorder %s183, %s185
    %p189 = scmp.eq.s32.totalorder %s18, 0
    %p190 = por %p188, %p189
    %p191 = scmp.ne.s32.totalorder %s183, %s185
    %p192 = scmp.eq.s32.totalorder %s23, 1
    %p193 = por %p191, %p192
    %p194 = scmp.ne.s32.totalorder %s185, %s186
    %p195 = scmp.eq.s32.totalorder %s23, 0
    %p196 = por %p194, %p195
    %p197 = scmp.ne.s32.totalorder %s185, %s186
    %p198 = scmp.eq.s32.totalorder %s24, 1
    %p199 = por %p197, %p198
    %p201 = scmp.ne.s32.totalorder %s186, %s200
    %p202 = scmp.eq.s32.totalorder %s24, 0
    %p203 = por %p201, %p202
    %s205 = sadd.s32 %s204, 1
    %p208 = scmp.eq.s32.totalorder %s18, 1
    %p209 = scmp.ne.s32.totalorder %s204, %s206
    %p210 = scmp.eq.s32.totalorder %s18, 0
    %p211 = por %p209, %p210
    %p212 = scmp.ne.s32.totalorder %s204, %s206
    %p213 = scmp.eq.s32.totalorder %s23, 1
    %p214 = por %p212, %p213
    %p215 = scmp.ne.s32.totalorder %s206, %s207
    %p216 = scmp.eq.s32.totalorder %s23, 0
    %p217 = por %p215, %p216
    %p218 = scmp.ne.s32.totalorder %s206, %s207
    %p219 = scmp.eq.s32.totalorder %s24, 1
    %p220 = por %p218, %p219
    %p222 = scmp.ne.s32.totalorder %s207, %s221
    %p223 = scmp.eq.s32.totalorder %s24, 0
    %p224 = por %p222, %p223
    %s226 = sadd.s32 %s225, 1
    %p229 = scmp.eq.s32.totalorder %s18, 1
    %p230 = scmp.ne.s32.totalorder %s225, %s227
    %p231 = scmp.eq.s32.totalorder %s18, 0
    %p232 = por %p230, %p231
    %p233 = scmp.ne.s32.totalorder %s225, %s227
    %p234 = scmp.eq.s32.totalorder %s23, 1
    %p235 = por %p233, %p234
    %p236 = scmp.ne.s32.totalorder %s227, %s228
    %p237 = scmp.eq.s32.totalorder %s23, 0
    %p238 = por %p236, %p237
    %p239 = scmp.ne.s32.totalorder %s227, %s228
    %p240 = scmp.eq.s32.totalorder %s24, 1
    %p241 = por %p239, %p240
    %p243 = scmp.ne.s32.totalorder %s228, %s242
    %p244 = scmp.eq.s32.totalorder %s24, 0
    %p245 = por %p243, %p244
    %s247 = sadd.s32 %s246, 1
    %p250 = scmp.eq.s32.totalorder %s18, 1
    %p251 = scmp.ne.s32.totalorder %s246, %s248
    %p252 = scmp.eq.s32.totalorder %s18, 0
    %p253 = por %p251, %p252
    %p254 = scmp.ne.s32.totalorder %s246, %s248
    %p255 = scmp.eq.s32.totalorder %s23, 1
    %p256 = por %p254, %p255
    %p257 = scmp.ne.s32.totalorder %s248, %s249
    %p258 = scmp.eq.s32.totalorder %s23, 0
    %p259 = por %p257, %p258
    %p260 = scmp.ne.s32.totalorder %s248, %s249
    %p261 = scmp.eq.s32.totalorder %s24, 1
    %p262 = por %p260, %p261
    %p264 = scmp.ne.s32.totalorder %s249, %s263
    %p265 = scmp.eq.s32.totalorder %s24, 0
    %p266 = por %p264, %p265
    %s268 = sadd.s32 %s267, 1
    %p271 = scmp.eq.s32.totalorder %s18, 1
    %p272 = scmp.ne.s32.totalorder %s267, %s269
    %p273 = scmp.eq.s32.totalorder %s18, 0
    %p274 = por %p272, %p273
    %p275 = scmp.ne.s32.totalorder %s267, %s269
    %p276 = scmp.eq.s32.totalorder %s23, 1
    %p277 = por %p275, %p276
    %p278 = scmp.ne.s32.totalorder %s269, %s270
    %p279 = scmp.eq.s32.totalorder %s23, 0
    %p280 = por %p278, %p279
    %p281 = scmp.ne.s32.totalorder %s269, %s270
    %p282 = scmp.eq.s32.totalorder %s24, 1
    %p283 = por %p281, %p282
    %p285 = scmp.ne.s32.totalorder %s270, %s284
    %p286 = scmp.eq.s32.totalorder %s24, 0
    %p287 = por %p285, %p286
    %s288 = ssub.s32 %s18, %s25
    %p289 = scmp.eq.s32.totalorder %s288, 0
    %s291 = sadd.s32 %s290, 1
    %s292 = scalar_select %p289, %s290, %s291
    %p295 = pneg %p289
    %p296 = scmp.eq.s32.totalorder %s18, 1
    %p297 = por %p295, %p296
    %p298 = scmp.ne.s32.totalorder %s290, %s293
    %p299 = scmp.eq.s32.totalorder %s18, 0
    %p300 = por %p298, %p299
    %p301 = scmp.ne.s32.totalorder %s290, %s293
    %p302 = scmp.eq.s32.totalorder %s23, 1
    %p303 = por %p301, %p302
    %p304 = scmp.ne.s32.totalorder %s293, %s294
    %p305 = scmp.eq.s32.totalorder %s23, 0
    %p306 = por %p304, %p305
    %p307 = scmp.ne.s32.totalorder %s293, %s294
    %p308 = scmp.eq.s32.totalorder %s24, 1
    %p309 = por %p307, %p308
    %p311 = scmp.ne.s32.totalorder %s294, %s310
    %p312 = scmp.eq.s32.totalorder %s24, 0
    %p313 = por %p311, %p312
    %p314 = scmp.le.s32.totalorder 1, %s18
    %p315 = scmp.lt.s32.totalorder %s18, 3
    %p316 = pnand %p314, %p315
    %p317 = pneg %p316
    // Predicated region
    $region9: #{spec_decoder_forward.1} parent=5 // pred_check
      _
    $region10: #{spec_decoder_forward.1} parent=5 // pred_check_branch
      %319 = sbr.rel (%p316) target = $region12
    $region11: #{spec_decoder_forward.1} parent=5 // pred_region
      %s320 = ssub.s32 %s18, 1
      // Predicated region
      $region13: #{spec_decoder_forward.1} parent=11 // pred_check
        %p321 = pneg %p91
      $region14: #{spec_decoder_forward.1} parent=11 // pred_check_branch
        %323 = sbr.rel (%p321) target = $region16
      $region15: #{spec_decoder_forward.1} parent=11 // pred_region
        _
      $region16: #{spec_decoder_forward.1} parent=11 // pred_fallthru
        _
      // Predicated region
      $region17: #{spec_decoder_forward.1} parent=11 // pred_check
        %p324 = pneg %p112
      $region18: #{spec_decoder_forward.1} parent=11 // pred_check_branch
        %326 = sbr.rel (%p324) target = $region20
      $region19: #{spec_decoder_forward.1} parent=11 // pred_region
        _
      $region20: #{spec_decoder_forward.1} parent=11 // pred_fallthru
        _
      // Predicated region
      $region21: #{spec_decoder_forward.1} parent=11 // pred_check
        %p327 = pneg %p133
      $region22: #{spec_decoder_forward.1} parent=11 // pred_check_branch
        %329 = sbr.rel (%p327) target = $region24
      $region23: #{spec_decoder_forward.1} parent=11 // pred_region
        _
      $region24: #{spec_decoder_forward.1} parent=11 // pred_fallthru
        _
      // Predicated region
      $region25: #{spec_decoder_forward.1} parent=11 // pred_check
        %p330 = pneg %p154
      $region26: #{spec_decoder_forward.1} parent=11 // pred_check_branch
        %332 = sbr.rel (%p330) target = $region28
      $region27: #{spec_decoder_forward.1} parent=11 // pred_region
        _
      $region28: #{spec_decoder_forward.1} parent=11 // pred_fallthru
        _
      // Predicated region
      $region29: #{spec_decoder_forward.1} parent=11 // pred_check
        %p333 = pneg %p175
      $region30: #{spec_decoder_forward.1} parent=11 // pred_check_branch
        %335 = sbr.rel (%p333) target = $region32
      $region31: #{spec_decoder_forward.1} parent=11 // pred_region
        _
      $region32: #{spec_decoder_forward.1} parent=11 // pred_fallthru
        _
      // Predicated region
      $region33: #{spec_decoder_forward.1} parent=11 // pred_check
        %p336 = pneg %p196
      $region34: #{spec_decoder_forward.1} parent=11 // pred_check_branch
        %338 = sbr.rel (%p336) target = $region36
      $region35: #{spec_decoder_forward.1} parent=11 // pred_region
        _
      $region36: #{spec_decoder_forward.1} parent=11 // pred_fallthru
        _
      // Predicated region
      $region37: #{spec_decoder_forward.1} parent=11 // pred_check
        %p339 = pneg %p217
      $region38: #{spec_decoder_forward.1} parent=11 // pred_check_branch
        %341 = sbr.rel (%p339) target = $region40
      $region39: #{spec_decoder_forward.1} parent=11 // pred_region
        _
      $region40: #{spec_decoder_forward.1} parent=11 // pred_fallthru
        _
      // Predicated region
      $region41: #{spec_decoder_forward.1} parent=11 // pred_check
        %p342 = pneg %p238
      $region42: #{spec_decoder_forward.1} parent=11 // pred_check_branch
        %344 = sbr.rel (%p342) target = $region44
      $region43: #{spec_decoder_forward.1} parent=11 // pred_region
        _
      $region44: #{spec_decoder_forward.1} parent=11 // pred_fallthru
        _
      // Predicated region
      $region45: #{spec_decoder_forward.1} parent=11 // pred_check
        %p345 = pneg %p259
      $region46: #{spec_decoder_forward.1} parent=11 // pred_check_branch
        %347 = sbr.rel (%p345) target = $region48
      $region47: #{spec_decoder_forward.1} parent=11 // pred_region
        _
      $region48: #{spec_decoder_forward.1} parent=11 // pred_fallthru
        _
      // Predicated region
      $region49: #{spec_decoder_forward.1} parent=11 // pred_check
        %p348 = pneg %p280
      $region50: #{spec_decoder_forward.1} parent=11 // pred_check_branch
        %350 = sbr.rel (%p348) target = $region52
      $region51: #{spec_decoder_forward.1} parent=11 // pred_region
        _
      $region52: #{spec_decoder_forward.1} parent=11 // pred_fallthru
        _
    $region12: #{spec_decoder_forward.1} parent=5 // pred_fallthru
      _
    %p351 = scmp.lt.s32.totalorder %s18, 2
    // Predicated region
    $region53: #{spec_decoder_forward.1} parent=5 // pred_check
      %p352 = pneg %p351
    $region54: #{spec_decoder_forward.1} parent=5 // pred_check_branch
      %354 = sbr.rel (%p352) target = $region56
    $region55: #{spec_decoder_forward.1} parent=5 // pred_region
      // Predicated region
      $region57: #{spec_decoder_forward.1} parent=55 // pred_check
        %p355 = pneg %p38
      $region58: #{spec_decoder_forward.1} parent=55 // pred_check_branch
        %357 = sbr.rel (%p355) target = $region60
      $region59: #{spec_decoder_forward.1} parent=55 // pred_region
        %s358 = smul.u32 2, %s18
        %p359 = scmp.lt.s32.totalorder %s358, 3
        %s360 = scalar_select %p359, %s358, 3
        %s361 = smul.addr %s360, 4
        %s362 = scalar_lea.vmem %s0, %s361
        %s363 = smul.u32 2, %s18
      $region60: #{spec_decoder_forward.1} parent=55 // pred_fallthru
        _
      // Predicated region
      $region61: #{spec_decoder_forward.1} parent=55 // pred_check
        %p364 = pneg %p64
      $region62: #{spec_decoder_forward.1} parent=55 // pred_check_branch
        %366 = sbr.rel (%p364) target = $region64
      $region63: #{spec_decoder_forward.1} parent=55 // pred_region
        %s367 = smul.u32 4, %s18
        %p368 = scmp.lt.s32.totalorder %s367, 7
        %s369 = scalar_select %p368, %s367, 7
        %s370 = smul.addr %s369, 4
        %s371 = scalar_lea.vmem %s1, %s370
        %s372 = smul.u32 4, %s18
      $region64: #{spec_decoder_forward.1} parent=55 // pred_fallthru
        _
    $region56: #{spec_decoder_forward.1} parent=5 // pred_fallthru
      _
    %p373 = scmp.le.s32.totalorder 1, %s18
    %p374 = scmp.lt.s32.totalorder %s18, 3
    %p375 = pnand %p373, %p374
    %p376 = pneg %p375
    // Predicated region
    $region65: #{spec_decoder_forward.1} parent=5 // pred_check
      _
    $region66: #{spec_decoder_forward.1} parent=5 // pred_check_branch
      %378 = sbr.rel (%p375) target = $region68
    $region67: #{spec_decoder_forward.1} parent=5 // pred_region
      %s379 = ssub.s32 %s18, 1
      %s380 = smul.u32 2, %s23
      %p381 = scmp.lt.s32.totalorder %s380, 3
      %s382 = scalar_select %p381, %s380, 3
      %s383 = smul.addr %s382, 4
      %s384 = scalar_lea.vmem %s0, %s383
      %p385 = pneg %p44
      %p386 = pneg %p41
      %s387 = smul.u32 4, %s23
      %p388 = scmp.lt.s32.totalorder %s387, 7
      %s389 = scalar_select %p388, %s387, 7
      %s390 = smul.addr %s389, 4
      %s391 = scalar_lea.vmem %s1, %s390
      %p392 = pneg %p70
      %p393 = pneg %p67
      %p394 = pneg %p91
      %p395 = pneg %p88
      %p396 = pneg %p112
      %p397 = pneg %p109
      %p398 = pneg %p133
      %p399 = pneg %p130
      %p400 = pneg %p154
      %p401 = pneg %p151
      %p402 = pneg %p175
      %p403 = pneg %p172
      %p404 = pneg %p196
      %p405 = pneg %p193
      %p406 = pneg %p217
      %p407 = pneg %p214
      %p408 = pneg %p238
      %p409 = pneg %p235
      %p410 = pneg %p259
      %p411 = pneg %p256
      %p412 = pneg %p280
      %p413 = pneg %p277
      %p414 = pneg %p306
      %p415 = pneg %p303
      %s416 = smul.u32 4, %s23
      %p417 = scmp.lt.s32.totalorder %s416, 7
      %s418 = scalar_select %p417, %s416, 7
      %s419 = smul.addr %s418, 8
      %s420 = scalar_lea.vmem %s12, %s419
      %s421 = smul.u32 2, %s23
      %p422 = scmp.lt.s32.totalorder %s421, 3
      %s423 = scalar_select %p422, %s421, 3
      %s424 = smul.addr %s423, 4
      %s425 = scalar_lea.vmem %s0, %s424
      %s426 = smul.u32 2, %s23
      %s427 = smul.u32 4, %s23
      %p428 = scmp.lt.s32.totalorder %s427, 7
      %s429 = scalar_select %p428, %s427, 7
      %s430 = smul.addr %s429, 4
      %s431 = scalar_lea.vmem %s1, %s430
      %s432 = smul.u32 4, %s23
      %s433 = smul.u32 4, %s23
      %p434 = scmp.lt.s32.totalorder %s433, 7
      %s435 = scalar_select %p434, %s433, 7
      %s436 = smul.addr %s435, 8
      %s437 = scalar_lea.vmem %s12, %s436
      %s438 = smul.u32 4, %s23
      %v440 = vld [vmem:[%s425] sm:$0xf]
      %v441 = vld [vmem:[%s425 + $0x4] sm:$0xf]
      %v442 = vld [vmem:[%s431] sm:$0xf]
      %v443 = vld [vmem:[%s431 + $0x4] sm:$0xf]
      %v444 = vld [vmem:[%s431 + $0x8] sm:$0xf]
      %v445 = vld [vmem:[%s431 + $0xc] sm:$0xf]
      %v446 = vld [vmem:[%s4] sm:$0xff]
      %v447 = vld [vmem:[%s4 + $0x8] sm:$0xff]
      %v448 = vld [vmem:[%s4 + $0x10] sm:$0xff]
      %v449 = vld [vmem:[%s4 + $0x18] sm:$0xff]
      %v450 = vld [vmem:[%s2] sm:$0xf]
      %v451 = vld [vmem:[%s2 + $0x4] sm:$0xf]
      %v452 = vld [vmem:[%s2 + $0x8] sm:$0xf]
      %v453 = vld [vmem:[%s2 + $0xc] sm:$0xf]
      %v454 = vld [vmem:[%s2 + $0x10] sm:$0xf]
      %v455 = vld [vmem:[%s2 + $0x14] sm:$0xf]
      %v456 = vld [vmem:[%s2 + $0x18] sm:$0xf]
      %v457 = vld [vmem:[%s2 + $0x1c] sm:$0xf]
      %v460 = vunpack.c.l.b16 %v440
      %v461 = vunpack.c.l.b16 %v441
      %v462 = vpack.c.b16 %v461, %v460
      %v471 = vunpack.c.l.b16 %v450
      %v472 = vunpack.c.l.b16 %v451
      %v473 = vunpack.c.l.b16 %v452
      %v474 = vunpack.c.l.b16 %v453
      %v475 = vunpack.c.l.b16 %v454
      %v476 = vunpack.c.l.b16 %v455
      %v477 = vunpack.c.l.b16 %v456
      %v478 = vunpack.c.l.b16 %v457
      %v479 = vpack.c.b16 %v472, %v471
      %v480 = vpack.c.b16 %v474, %v473
      %v481 = vpack.c.b16 %v476, %v475
      %v482 = vpack.c.b16 %v478, %v477
      %vm487 = vcmask 523264
      %v489 = vsel %vm487, %v462, 0
      %491 = vmatprep.subr.bf16.mxu0 0
      %492 = vmatpush1.bf16.msra.mxu0 0
      %493 = vmatprep.subr.bf16.mxu0 0
      %494 = vmatpush1.bf16.msra.mxu0 0
      %495 = vmatprep.subr.bf16.mxu0 0
      %496 = vmatpush1.bf16.msra.mxu0 0
      %497 = vmatprep.subr.bf16.mxu0 0
      %498 = vmatpush1.bf16.msra.mxu0 0
      %499 = vmatprep.subr.bf16.mxu0 0
      %500 = vmatpush1.bf16.msra.mxu0 %v482
      %501 = vmatprep.subr.bf16.mxu0 0
      %502 = vmatpush1.bf16.msra.mxu0 %v481
      %503 = vmatprep.subr.bf16.mxu0 0
      %504 = vmatpush1.bf16.msra.mxu0 %v480
      %505 = vmatprep.subr.bf16.mxu0 0
      %506 = vmatpush1.bf16.msra.mxu0 %v479
      %507 = vmatprep.subr.bf16.mxu0 0
      %508 = vmatpush2.bf16.msra.mxu0 0
      %509 = vmatprep.subr.bf16.mxu0 0
      %510 = vmatpush2.bf16.msra.mxu0 0
      %511 = vmatprep.subr.bf16.mxu0 0
      %512 = vmatpush2.bf16.msra.mxu0 0
      %513 = vmatprep.subr.bf16.mxu0 0
      %514 = vmatpush2.bf16.msra.mxu0 0
      %515 = vmatprep.subr.bf16.mxu0 0
      %516 = vmatpush2.bf16.msra.mxu0 0
      %517 = vmatprep.subr.bf16.mxu0 0
      %518 = vmatpush2.bf16.msra.mxu0 0
      %519 = vmatprep.subr.bf16.mxu0 0
      %520 = vmatpush2.bf16.msra.mxu0 0
      %521 = vmatprep.subr.bf16.mxu0 0
      %522 = vmatpush2.bf16.msra.mxu0 0
      %523 = vmatprep.mubr.bf16.mxu0 0
      %524 = vmatmul.mubr.bf16.gmra.mxu0 %v489
      %v525 = vpop.f32.mrf.mxu0
      %v526 = vadd.f32 0.0, %v525
      %v527 = vpop.f32.mrf.mxu0
      %v528 = vpop.f32.mrf.mxu0
      %v529 = vadd.f32 0.0, %v528
      %v530 = vpop.f32.mrf.mxu0
      %531 = vdwg.mxu0
      %v532 = vld [vmem:[%s3] sm:$0xff]
      %v533 = vld [vmem:[%s3 + $0x8] sm:$0xff]
      %v534 = vld [vmem:[%s3 + $0x10] sm:$0xff]
      %v535 = vld [vmem:[%s3 + $0x18] sm:$0xff]
      %vm536 = vcmask 130048
      %v538 = vsel %vm536, %v532, 0
      %v541 = vsel %vm536, %v533, 0
      %v544 = vsel %vm536, %v534, 0
      %v547 = vsel %vm536, %v535, 0
      %549 = vmatprep.subr.mxu0 0.0
      %550 = vmatpush1.msra.mxu0 0.0
      %551 = vmatprep.subr.mxu0 0.0
      %552 = vmatpush1.msra.mxu0 0.0
      %553 = vmatprep.subr.mxu0 0.0
      %554 = vmatpush1.msra.mxu0 0.0
      %555 = vmatprep.subr.mxu0 0.0
      %556 = vmatpush1.msra.mxu0 0.0
      %557 = vmatprep.subr.mxu0 0.0
      %558 = vmatpush1.msra.mxu0 0.0
      %559 = vmatprep.subr.mxu0 0.0
      %560 = vmatpush1.msra.mxu0 0.0
      %561 = vmatprep.subr.mxu0 0.0
      %562 = vmatpush1.msra.mxu0 0.0
      %563 = vmatprep.subr.mxu0 0.0
      %564 = vmatpush1.msra.mxu0 0.0
      %565 = vmatprep.subr.mxu0 0.0
      %566 = vmatpush1.msra.mxu0 0.0
      %567 = vmatprep.subr.mxu0 0.0
      %568 = vmatpush1.msra.mxu0 0.0
      %569 = vmatprep.subr.mxu0 0.0
      %570 = vmatpush1.msra.mxu0 0.0
      %571 = vmatprep.subr.mxu0 0.0
      %572 = vmatpush1.msra.mxu0 0.0
      %573 = vmatprep.subr.mxu0 0.0
      %574 = vmatpush1.msra.mxu0 0.0
      %575 = vmatprep.subr.mxu0 0.0
      %576 = vmatpush1.msra.mxu0 0.0
      %577 = vmatprep.subr.mxu0 0.0
      %578 = vmatpush1.msra.mxu0 %v529
      %579 = vmatprep.subr.mxu0 0.0
      %580 = vmatpush1.msra.mxu0 %v526
      %581 = vmatprep.subr.mxu0 0.0
      %582 = vmatpush2.msra.mxu0 0.0
      %583 = vmatprep.subr.mxu0 0.0
      %584 = vmatpush2.msra.mxu0 0.0
      %585 = vmatprep.subr.mxu0 0.0
      %586 = vmatpush2.msra.mxu0 0.0
      %587 = vmatprep.subr.mxu0 0.0
      %588 = vmatpush2.msra.mxu0 0.0
      %589 = vmatprep.subr.mxu0 0.0
      %590 = vmatpush2.msra.mxu0 0.0
      %591 = vmatprep.subr.mxu0 0.0
      %592 = vmatpush2.msra.mxu0 0.0
      %593 = vmatprep.subr.mxu0 0.0
      %594 = vmatpush2.msra.mxu0 0.0
      %595 = vmatprep.subr.mxu0 0.0
      %596 = vmatpush2.msra.mxu0 0.0
      %597 = vmatprep.subr.mxu0 0.0
      %598 = vmatpush2.msra.mxu0 0.0
      %599 = vmatprep.subr.mxu0 0.0
      %600 = vmatpush2.msra.mxu0 0.0
      %601 = vmatprep.subr.mxu0 0.0
      %602 = vmatpush2.msra.mxu0 0.0
      %603 = vmatprep.subr.mxu0 0.0
      %604 = vmatpush2.msra.mxu0 0.0
      %605 = vmatprep.subr.mxu0 0.0
      %606 = vmatpush2.msra.mxu0 0.0
      %607 = vmatprep.subr.mxu0 0.0
      %608 = vmatpush2.msra.mxu0 0.0
      %609 = vmatprep.subr.mxu0 0.0
      %610 = vmatpush2.msra.mxu0 0.0
      %611 = vmatprep.subr.mxu0 0.0
      %612 = vmatpush2.msra.mxu0 0.0
      %613 = vmatprep.mubr.f32.mxu0 0.0
      %614 = vmatmul.mubr.f32.gmra.mxu0 %v538
      %v615 = vpop.f32.mrf.mxu0
      %v616 = vadd.f32 0.0, %v615
      %v617 = vpop.f32.mrf.mxu0
      %618 = vmatprep.mubr.f32.mxu0 0.0
      %619 = vmatmul.mubr.f32.gmra.mxu0 %v541
      %v620 = vpop.f32.mrf.mxu0
      %v621 = vadd.f32 0.0, %v620
      %v622 = vpop.f32.mrf.mxu0
      %623 = vmatprep.mubr.f32.mxu0 0.0
      %624 = vmatmul.mubr.f32.gmra.mxu0 %v544
      %v625 = vpop.f32.mrf.mxu0
      %v626 = vadd.f32 0.0, %v625
      %v627 = vpop.f32.mrf.mxu0
      %628 = vmatprep.mubr.f32.mxu0 0.0
      %629 = vmatmul.mubr.f32.gmra.mxu0 %v547
      %v630 = vpop.f32.mrf.mxu0
      %v631 = vadd.f32 0.0, %v630
      %v632 = vpop.f32.mrf.mxu0
      %633 = vdwg.mxu0
      %v634 = vadd.f32 %v446, %v616
      %v635 = vadd.f32 %v447, %v621
      %v636 = vadd.f32 %v448, %v626
      %v637 = vadd.f32 %v449, %v631
      %s638 = scalar_lea.vmem %s2, 32
      %v639 = vld [vmem:[%s638] sm:$0xf]
      %v640 = vld [vmem:[%s638 + $0x4] sm:$0xf]
      %v641 = vld [vmem:[%s638 + $0x8] sm:$0xf]
      %v642 = vld [vmem:[%s638 + $0xc] sm:$0xf]
      %v643 = vld [vmem:[%s638 + $0x10] sm:$0xf]
      %v644 = vld [vmem:[%s638 + $0x14] sm:$0xf]
      %v645 = vld [vmem:[%s638 + $0x18] sm:$0xf]
      %v646 = vld [vmem:[%s638 + $0x1c] sm:$0xf]
      %v655 = vunpack.c.l.b16 %v639
      %v656 = vunpack.c.l.b16 %v640
      %v657 = vunpack.c.l.b16 %v641
      %v658 = vunpack.c.l.b16 %v642
      %v659 = vunpack.c.l.b16 %v643
      %v660 = vunpack.c.l.b16 %v644
      %v661 = vunpack.c.l.b16 %v645
      %v662 = vunpack.c.l.b16 %v646
      %v663 = vpack.c.b16 %v656, %v655
      %v664 = vpack.c.b16 %v658, %v657
      %v665 = vpack.c.b16 %v660, %v659
      %v666 = vpack.c.b16 %v662, %v661
      %671 = vmatprep.subr.bf16.mxu0 0
      %672 = vmatpush1.bf16.msra.mxu0 0
      %673 = vmatprep.subr.bf16.mxu0 0
      %674 = vmatpush1.bf16.msra.mxu0 0
      %675 = vmatprep.subr.bf16.mxu0 0
      %676 = vmatpush1.bf16.msra.mxu0 0
      %677 = vmatprep.subr.bf16.mxu0 0
      %678 = vmatpush1.bf16.msra.mxu0 0
      %679 = vmatprep.subr.bf16.mxu0 0
      %680 = vmatpush1.bf16.msra.mxu0 %v666
      %681 = vmatprep.subr.bf16.mxu0 0
      %682 = vmatpush1.bf16.msra.mxu0 %v665
      %683 = vmatprep.subr.bf16.mxu0 0
      %684 = vmatpush1.bf16.msra.mxu0 %v664
      %685 = vmatprep.subr.bf16.mxu0 0
      %686 = vmatpush1.bf16.msra.mxu0 %v663
      %687 = vmatprep.subr.bf16.mxu0 0
      %688 = vmatpush2.bf16.msra.mxu0 0
      %689 = vmatprep.subr.bf16.mxu0 0
      %690 = vmatpush2.bf16.msra.mxu0 0
      %691 = vmatprep.subr.bf16.mxu0 0
      %692 = vmatpush2.bf16.msra.mxu0 0
      %693 = vmatprep.subr.bf16.mxu0 0
      %694 = vmatpush2.bf16.msra.mxu0 0
      %695 = vmatprep.subr.bf16.mxu0 0
      %696 = vmatpush2.bf16.msra.mxu0 0
      %697 = vmatprep.subr.bf16.mxu0 0
      %698 = vmatpush2.bf16.msra.mxu0 0
      %699 = vmatprep.subr.bf16.mxu0 0
      %700 = vmatpush2.bf16.msra.mxu0 0
      %701 = vmatprep.subr.bf16.mxu0 0
      %702 = vmatpush2.bf16.msra.mxu0 0
      %703 = vmatprep.mubr.bf16.mxu0 0
      %704 = vmatmul.mubr.bf16.gmra.mxu0 %v489
      %v705 = vpop.f32.mrf.mxu0
      %v706 = vadd.f32 0.0, %v705
      %v707 = vpop.f32.mrf.mxu0
      %v708 = vpop.f32.mrf.mxu0
      %v709 = vadd.f32 0.0, %v708
      %v710 = vpop.f32.mrf.mxu0
      %711 = vdwg.mxu0
      %s712 = scalar_lea.vmem %s3, 32
      %v713 = vld [vmem:[%s712] sm:$0xff]
      %v714 = vld [vmem:[%s712 + $0x8] sm:$0xff]
      %v715 = vld [vmem:[%s712 + $0x10] sm:$0xff]
      %v716 = vld [vmem:[%s712 + $0x18] sm:$0xff]
      %v718 = vsel %vm536, %v713, 0
      %v721 = vsel %vm536, %v714, 0
      %v724 = vsel %vm536, %v715, 0
      %v727 = vsel %vm536, %v716, 0
      %729 = vmatprep.subr.mxu0 0.0
      %730 = vmatpush1.msra.mxu0 0.0
      %731 = vmatprep.subr.mxu0 0.0
      %732 = vmatpush1.msra.mxu0 0.0
      %733 = vmatprep.subr.mxu0 0.0
      %734 = vmatpush1.msra.mxu0 0.0
      %735 = vmatprep.subr.mxu0 0.0
      %736 = vmatpush1.msra.mxu0 0.0
      %737 = vmatprep.subr.mxu0 0.0
      %738 = vmatpush1.msra.mxu0 0.0
      %739 = vmatprep.subr.mxu0 0.0
      %740 = vmatpush1.msra.mxu0 0.0
      %741 = vmatprep.subr.mxu0 0.0
      %742 = vmatpush1.msra.mxu0 0.0
      %743 = vmatprep.subr.mxu0 0.0
      %744 = vmatpush1.msra.mxu0 0.0
      %745 = vmatprep.subr.mxu0 0.0
      %746 = vmatpush1.msra.mxu0 0.0
      %747 = vmatprep.subr.mxu0 0.0
      %748 = vmatpush1.msra.mxu0 0.0
      %749 = vmatprep.subr.mxu0 0.0
      %750 = vmatpush1.msra.mxu0 0.0
      %751 = vmatprep.subr.mxu0 0.0
      %752 = vmatpush1.msra.mxu0 0.0
      %753 = vmatprep.subr.mxu0 0.0
      %754 = vmatpush1.msra.mxu0 0.0
      %755 = vmatprep.subr.mxu0 0.0
      %756 = vmatpush1.msra.mxu0 0.0
      %757 = vmatprep.subr.mxu0 0.0
      %758 = vmatpush1.msra.mxu0 %v709
      %759 = vmatprep.subr.mxu0 0.0
      %760 = vmatpush1.msra.mxu0 %v706
      %761 = vmatprep.subr.mxu0 0.0
      %762 = vmatpush2.msra.mxu0 0.0
      %763 = vmatprep.subr.mxu0 0.0
      %764 = vmatpush2.msra.mxu0 0.0
      %765 = vmatprep.subr.mxu0 0.0
      %766 = vmatpush2.msra.mxu0 0.0
      %767 = vmatprep.subr.mxu0 0.0
      %768 = vmatpush2.msra.mxu0 0.0
      %769 = vmatprep.subr.mxu0 0.0
      %770 = vmatpush2.msra.mxu0 0.0
      %771 = vmatprep.subr.mxu0 0.0
      %772 = vmatpush2.msra.mxu0 0.0
      %773 = vmatprep.subr.mxu0 0.0
      %774 = vmatpush2.msra.mxu0 0.0
      %775 = vmatprep.subr.mxu0 0.0
      %776 = vmatpush2.msra.mxu0 0.0
      %777 = vmatprep.subr.mxu0 0.0
      %778 = vmatpush2.msra.mxu0 0.0
      %779 = vmatprep.subr.mxu0 0.0
      %780 = vmatpush2.msra.mxu0 0.0
      %781 = vmatprep.subr.mxu0 0.0
      %782 = vmatpush2.msra.mxu0 0.0
      %783 = vmatprep.subr.mxu0 0.0
      %784 = vmatpush2.msra.mxu0 0.0
      %785 = vmatprep.subr.mxu0 0.0
      %786 = vmatpush2.msra.mxu0 0.0
      %787 = vmatprep.subr.mxu0 0.0
      %788 = vmatpush2.msra.mxu0 0.0
      %789 = vmatprep.subr.mxu0 0.0
      %790 = vmatpush2.msra.mxu0 0.0
      %791 = vmatprep.subr.mxu0 0.0
      %792 = vmatpush2.msra.mxu0 0.0
      %793 = vmatprep.mubr.f32.mxu0 0.0
      %794 = vmatmul.mubr.f32.gmra.mxu0 %v718
      %v795 = vpop.f32.mrf.mxu0
      %v796 = vadd.f32 0.0, %v795
      %v797 = vpop.f32.mrf.mxu0
      %798 = vmatprep.mubr.f32.mxu0 0.0
      %799 = vmatmul.mubr.f32.gmra.mxu0 %v721
      %v800 = vpop.f32.mrf.mxu0
      %v801 = vadd.f32 0.0, %v800
      %v802 = vpop.f32.mrf.mxu0
      %803 = vmatprep.mubr.f32.mxu0 0.0
      %804 = vmatmul.mubr.f32.gmra.mxu0 %v724
      %v805 = vpop.f32.mrf.mxu0
      %v806 = vadd.f32 0.0, %v805
      %v807 = vpop.f32.mrf.mxu0
      %808 = vmatprep.mubr.f32.mxu0 0.0
      %809 = vmatmul.mubr.f32.gmra.mxu0 %v727
      %v810 = vpop.f32.mrf.mxu0
      %v811 = vadd.f32 0.0, %v810
      %v812 = vpop.f32.mrf.mxu0
      %813 = vdwg.mxu0
      %v814 = vadd.f32 %v634, %v796
      %v815 = vadd.f32 %v635, %v801
      %v816 = vadd.f32 %v636, %v806
      %v817 = vadd.f32 %v637, %v811
      %s818 = scalar_lea.vmem %s2, 64
      %v819 = vld [vmem:[%s818] sm:$0xf]
      %v820 = vld [vmem:[%s818 + $0x4] sm:$0xf]
      %v821 = vld [vmem:[%s818 + $0x8] sm:$0xf]
      %v822 = vld [vmem:[%s818 + $0xc] sm:$0xf]
      %v823 = vld [vmem:[%s818 + $0x10] sm:$0xf]
      %v824 = vld [vmem:[%s818 + $0x14] sm:$0xf]
      %v825 = vld [vmem:[%s818 + $0x18] sm:$0xf]
      %v826 = vld [vmem:[%s818 + $0x1c] sm:$0xf]
      %v835 = vunpack.c.l.b16 %v819
      %v836 = vunpack.c.l.b16 %v820
      %v837 = vunpack.c.l.b16 %v821
      %v838 = vunpack.c.l.b16 %v822
      %v839 = vunpack.c.l.b16 %v823
      %v840 = vunpack.c.l.b16 %v824
      %v841 = vunpack.c.l.b16 %v825
      %v842 = vunpack.c.l.b16 %v826
      %v843 = vpack.c.b16 %v836, %v835
      %v844 = vpack.c.b16 %v838, %v837
      %v845 = vpack.c.b16 %v840, %v839
      %v846 = vpack.c.b16 %v842, %v841
      %851 = vmatprep.subr.bf16.mxu0 0
      %852 = vmatpush1.bf16.msra.mxu0 0
      %853 = vmatprep.subr.bf16.mxu0 0
      %854 = vmatpush1.bf16.msra.mxu0 0
      %855 = vmatprep.subr.bf16.mxu0 0
      %856 = vmatpush1.bf16.msra.mxu0 0
      %857 = vmatprep.subr.bf16.mxu0 0
      %858 = vmatpush1.bf16.msra.mxu0 0
      %859 = vmatprep.subr.bf16.mxu0 0
      %860 = vmatpush1.bf16.msra.mxu0 %v846
      %861 = vmatprep.subr.bf16.mxu0 0
      %862 = vmatpush1.bf16.msra.mxu0 %v845
      %863 = vmatprep.subr.bf16.mxu0 0
      %864 = vmatpush1.bf16.msra.mxu0 %v844
      %865 = vmatprep.subr.bf16.mxu0 0
      %866 = vmatpush1.bf16.msra.mxu0 %v843
      %867 = vmatprep.subr.bf16.mxu0 0
      %868 = vmatpush2.bf16.msra.mxu0 0
      %869 = vmatprep.subr.bf16.mxu0 0
      %870 = vmatpush2.bf16.msra.mxu0 0
      %871 = vmatprep.subr.bf16.mxu0 0
      %872 = vmatpush2.bf16.msra.mxu0 0
      %873 = vmatprep.subr.bf16.mxu0 0
      %874 = vmatpush2.bf16.msra.mxu0 0
      %875 = vmatprep.subr.bf16.mxu0 0
      %876 = vmatpush2.bf16.msra.mxu0 0
      %877 = vmatprep.subr.bf16.mxu0 0
      %878 = vmatpush2.bf16.msra.mxu0 0
      %879 = vmatprep.subr.bf16.mxu0 0
      %880 = vmatpush2.bf16.msra.mxu0 0
      %881 = vmatprep.subr.bf16.mxu0 0
      %882 = vmatpush2.bf16.msra.mxu0 0
      %883 = vmatprep.mubr.bf16.mxu0 0
      %884 = vmatmul.mubr.bf16.gmra.mxu0 %v489
      %v885 = vpop.f32.mrf.mxu0
      %v886 = vadd.f32 0.0, %v885
      %v887 = vpop.f32.mrf.mxu0
      %v888 = vpop.f32.mrf.mxu0
      %v889 = vadd.f32 0.0, %v888
      %v890 = vpop.f32.mrf.mxu0
      %891 = vdwg.mxu0
      %s892 = scalar_lea.vmem %s3, 64
      %v893 = vld [vmem:[%s892] sm:$0xff]
      %v894 = vld [vmem:[%s892 + $0x8] sm:$0xff]
      %v895 = vld [vmem:[%s892 + $0x10] sm:$0xff]
      %v896 = vld [vmem:[%s892 + $0x18] sm:$0xff]
      %v898 = vsel %vm536, %v893, 0
      %v901 = vsel %vm536, %v894, 0
      %v904 = vsel %vm536, %v895, 0
      %v907 = vsel %vm536, %v896, 0
      %909 = vmatprep.subr.mxu0 0.0
      %910 = vmatpush1.msra.mxu0 0.0
      %911 = vmatprep.subr.mxu0 0.0
      %912 = vmatpush1.msra.mxu0 0.0
      %913 = vmatprep.subr.mxu0 0.0
      %914 = vmatpush1.msra.mxu0 0.0
      %915 = vmatprep.subr.mxu0 0.0
      %916 = vmatpush1.msra.mxu0 0.0
      %917 = vmatprep.subr.mxu0 0.0
      %918 = vmatpush1.msra.mxu0 0.0
      %919 = vmatprep.subr.mxu0 0.0
      %920 = vmatpush1.msra.mxu0 0.0
      %921 = vmatprep.subr.mxu0 0.0
      %922 = vmatpush1.msra.mxu0 0.0
      %923 = vmatprep.subr.mxu0 0.0
      %924 = vmatpush1.msra.mxu0 0.0
      %925 = vmatprep.subr.mxu0 0.0
      %926 = vmatpush1.msra.mxu0 0.0
      %927 = vmatprep.subr.mxu0 0.0
      %928 = vmatpush1.msra.mxu0 0.0
      %929 = vmatprep.subr.mxu0 0.0
      %930 = vmatpush1.msra.mxu0 0.0
      %931 = vmatprep.subr.mxu0 0.0
      %932 = vmatpush1.msra.mxu0 0.0
      %933 = vmatprep.subr.mxu0 0.0
      %934 = vmatpush1.msra.mxu0 0.0
      %935 = vmatprep.subr.mxu0 0.0
      %936 = vmatpush1.msra.mxu0 0.0
      %937 = vmatprep.subr.mxu0 0.0
      %938 = vmatpush1.msra.mxu0 %v889
      %939 = vmatprep.subr.mxu0 0.0
      %940 = vmatpush1.msra.mxu0 %v886
      %941 = vmatprep.subr.mxu0 0.0
      %942 = vmatpush2.msra.mxu0 0.0
      %943 = vmatprep.subr.mxu0 0.0
      %944 = vmatpush2.msra.mxu0 0.0
      %945 = vmatprep.subr.mxu0 0.0
      %946 = vmatpush2.msra.mxu0 0.0
      %947 = vmatprep.subr.mxu0 0.0
      %948 = vmatpush2.msra.mxu0 0.0
      %949 = vmatprep.subr.mxu0 0.0
      %950 = vmatpush2.msra.mxu0 0.0
      %951 = vmatprep.subr.mxu0 0.0
      %952 = vmatpush2.msra.mxu0 0.0
      %953 = vmatprep.subr.mxu0 0.0
      %954 = vmatpush2.msra.mxu0 0.0
      %955 = vmatprep.subr.mxu0 0.0
      %956 = vmatpush2.msra.mxu0 0.0
      %957 = vmatprep.subr.mxu0 0.0
      %958 = vmatpush2.msra.mxu0 0.0
      %959 = vmatprep.subr.mxu0 0.0
      %960 = vmatpush2.msra.mxu0 0.0
      %961 = vmatprep.subr.mxu0 0.0
      %962 = vmatpush2.msra.mxu0 0.0
      %963 = vmatprep.subr.mxu0 0.0
      %964 = vmatpush2.msra.mxu0 0.0
      %965 = vmatprep.subr.mxu0 0.0
      %966 = vmatpush2.msra.mxu0 0.0
      %967 = vmatprep.subr.mxu0 0.0
      %968 = vmatpush2.msra.mxu0 0.0
      %969 = vmatprep.subr.mxu0 0.0
      %970 = vmatpush2.msra.mxu0 0.0
      %971 = vmatprep.subr.mxu0 0.0
      %972 = vmatpush2.msra.mxu0 0.0
      %973 = vmatprep.mubr.f32.mxu0 0.0
      %974 = vmatmul.mubr.f32.gmra.mxu0 %v898
      %v975 = vpop.f32.mrf.mxu0
      %v976 = vadd.f32 0.0, %v975
      %v977 = vpop.f32.mrf.mxu0
      %978 = vmatprep.mubr.f32.mxu0 0.0
      %979 = vmatmul.mubr.f32.gmra.mxu0 %v901
      %v980 = vpop.f32.mrf.mxu0
      %v981 = vadd.f32 0.0, %v980
      %v982 = vpop.f32.mrf.mxu0
      %983 = vmatprep.mubr.f32.mxu0 0.0
      %984 = vmatmul.mubr.f32.gmra.mxu0 %v904
      %v985 = vpop.f32.mrf.mxu0
      %v986 = vadd.f32 0.0, %v985
      %v987 = vpop.f32.mrf.mxu0
      %988 = vmatprep.mubr.f32.mxu0 0.0
      %989 = vmatmul.mubr.f32.gmra.mxu0 %v907
      %v990 = vpop.f32.mrf.mxu0
      %v991 = vadd.f32 0.0, %v990
      %v992 = vpop.f32.mrf.mxu0
      %993 = vdwg.mxu0
      %v994 = vadd.f32 %v814, %v976
      %v995 = vadd.f32 %v815, %v981
      %v996 = vadd.f32 %v816, %v986
      %v997 = vadd.f32 %v817, %v991
      %s998 = scalar_lea.vmem %s2, 96
      %v999 = vld [vmem:[%s998] sm:$0xf]
      %v1000 = vld [vmem:[%s998 + $0x4] sm:$0xf]
      %v1001 = vld [vmem:[%s998 + $0x8] sm:$0xf]
      %v1002 = vld [vmem:[%s998 + $0xc] sm:$0xf]
      %v1003 = vld [vmem:[%s998 + $0x10] sm:$0xf]
      %v1004 = vld [vmem:[%s998 + $0x14] sm:$0xf]
      %v1005 = vld [vmem:[%s998 + $0x18] sm:$0xf]
      %v1006 = vld [vmem:[%s998 + $0x1c] sm:$0xf]
      %v1015 = vunpack.c.l.b16 %v999
      %v1016 = vunpack.c.l.b16 %v1000
      %v1017 = vunpack.c.l.b16 %v1001
      %v1018 = vunpack.c.l.b16 %v1002
      %v1019 = vunpack.c.l.b16 %v1003
      %v1020 = vunpack.c.l.b16 %v1004
      %v1021 = vunpack.c.l.b16 %v1005
      %v1022 = vunpack.c.l.b16 %v1006
      %v1023 = vpack.c.b16 %v1016, %v1015
      %v1024 = vpack.c.b16 %v1018, %v1017
      %v1025 = vpack.c.b16 %v1020, %v1019
      %v1026 = vpack.c.b16 %v1022, %v1021
      %1031 = vmatprep.subr.bf16.mxu0 0
      %1032 = vmatpush1.bf16.msra.mxu0 0
      %1033 = vmatprep.subr.bf16.mxu0 0
      %1034 = vmatpush1.bf16.msra.mxu0 0
      %1035 = vmatprep.subr.bf16.mxu0 0
      %1036 = vmatpush1.bf16.msra.mxu0 0
      %1037 = vmatprep.subr.bf16.mxu0 0
      %1038 = vmatpush1.bf16.msra.mxu0 0
      %1039 = vmatprep.subr.bf16.mxu0 0
      %1040 = vmatpush1.bf16.msra.mxu0 %v1026
      %1041 = vmatprep.subr.bf16.mxu0 0
      %1042 = vmatpush1.bf16.msra.mxu0 %v1025
      %1043 = vmatprep.subr.bf16.mxu0 0
      %1044 = vmatpush1.bf16.msra.mxu0 %v1024
      %1045 = vmatprep.subr.bf16.mxu0 0
      %1046 = vmatpush1.bf16.msra.mxu0 %v1023
      %1047 = vmatprep.subr.bf16.mxu0 0
      %1048 = vmatpush2.bf16.msra.mxu0 0
      %1049 = vmatprep.subr.bf16.mxu0 0
      %1050 = vmatpush2.bf16.msra.mxu0 0
      %1051 = vmatprep.subr.bf16.mxu0 0
      %1052 = vmatpush2.bf16.msra.mxu0 0
      %1053 = vmatprep.subr.bf16.mxu0 0
      %1054 = vmatpush2.bf16.msra.mxu0 0
      %1055 = vmatprep.subr.bf16.mxu0 0
      %1056 = vmatpush2.bf16.msra.mxu0 0
      %1057 = vmatprep.subr.bf16.mxu0 0
      %1058 = vmatpush2.bf16.msra.mxu0 0
      %1059 = vmatprep.subr.bf16.mxu0 0
      %1060 = vmatpush2.bf16.msra.mxu0 0
      %1061 = vmatprep.subr.bf16.mxu0 0
      %1062 = vmatpush2.bf16.msra.mxu0 0
      %1063 = vmatprep.mubr.bf16.mxu0 0
      %1064 = vmatmul.mubr.bf16.gmra.mxu0 %v489
      %v1065 = vpop.f32.mrf.mxu0
      %v1066 = vadd.f32 0.0, %v1065
      %v1067 = vpop.f32.mrf.mxu0
      %v1068 = vpop.f32.mrf.mxu0
      %v1069 = vadd.f32 0.0, %v1068
      %v1070 = vpop.f32.mrf.mxu0
      %1071 = vdwg.mxu0
      %s1072 = scalar_lea.vmem %s3, 96
      %v1073 = vld [vmem:[%s1072] sm:$0xff]
      %v1074 = vld [vmem:[%s1072 + $0x8] sm:$0xff]
      %v1075 = vld [vmem:[%s1072 + $0x10] sm:$0xff]
      %v1076 = vld [vmem:[%s1072 + $0x18] sm:$0xff]
      %v1078 = vsel %vm536, %v1073, 0
      %v1081 = vsel %vm536, %v1074, 0
      %v1084 = vsel %vm536, %v1075, 0
      %v1087 = vsel %vm536, %v1076, 0
      %1089 = vmatprep.subr.mxu0 0.0
      %1090 = vmatpush1.msra.mxu0 0.0
      %1091 = vmatprep.subr.mxu0 0.0
      %1092 = vmatpush1.msra.mxu0 0.0
      %1093 = vmatprep.subr.mxu0 0.0
      %1094 = vmatpush1.msra.mxu0 0.0
      %1095 = vmatprep.subr.mxu0 0.0
      %1096 = vmatpush1.msra.mxu0 0.0
      %1097 = vmatprep.subr.mxu0 0.0
      %1098 = vmatpush1.msra.mxu0 0.0
      %1099 = vmatprep.subr.mxu0 0.0
      %1100 = vmatpush1.msra.mxu0 0.0
      %1101 = vmatprep.subr.mxu0 0.0
      %1102 = vmatpush1.msra.mxu0 0.0
      %1103 = vmatprep.subr.mxu0 0.0
      %1104 = vmatpush1.msra.mxu0 0.0
      %1105 = vmatprep.subr.mxu0 0.0
      %1106 = vmatpush1.msra.mxu0 0.0
      %1107 = vmatprep.subr.mxu0 0.0
      %1108 = vmatpush1.msra.mxu0 0.0
      %1109 = vmatprep.subr.mxu0 0.0
      %1110 = vmatpush1.msra.mxu0 0.0
      %1111 = vmatprep.subr.mxu0 0.0
      %1112 = vmatpush1.msra.mxu0 0.0
      %1113 = vmatprep.subr.mxu0 0.0
      %1114 = vmatpush1.msra.mxu0 0.0
      %1115 = vmatprep.subr.mxu0 0.0
      %1116 = vmatpush1.msra.mxu0 0.0
      %1117 = vmatprep.subr.mxu0 0.0
      %1118 = vmatpush1.msra.mxu0 %v1069
      %1119 = vmatprep.subr.mxu0 0.0
      %1120 = vmatpush1.msra.mxu0 %v1066
      %1121 = vmatprep.subr.mxu0 0.0
      %1122 = vmatpush2.msra.mxu0 0.0
      %1123 = vmatprep.subr.mxu0 0.0
      %1124 = vmatpush2.msra.mxu0 0.0
      %1125 = vmatprep.subr.mxu0 0.0
      %1126 = vmatpush2.msra.mxu0 0.0
      %1127 = vmatprep.subr.mxu0 0.0
      %1128 = vmatpush2.msra.mxu0 0.0
      %1129 = vmatprep.subr.mxu0 0.0
      %1130 = vmatpush2.msra.mxu0 0.0
      %1131 = vmatprep.subr.mxu0 0.0
      %1132 = vmatpush2.msra.mxu0 0.0
      %1133 = vmatprep.subr.mxu0 0.0
      %1134 = vmatpush2.msra.mxu0 0.0
      %1135 = vmatprep.subr.mxu0 0.0
      %1136 = vmatpush2.msra.mxu0 0.0
      %1137 = vmatprep.subr.mxu0 0.0
      %1138 = vmatpush2.msra.mxu0 0.0
      %1139 = vmatprep.subr.mxu0 0.0
      %1140 = vmatpush2.msra.mxu0 0.0
      %1141 = vmatprep.subr.mxu0 0.0
      %1142 = vmatpush2.msra.mxu0 0.0
      %1143 = vmatprep.subr.mxu0 0.0
      %1144 = vmatpush2.msra.mxu0 0.0
      %1145 = vmatprep.subr.mxu0 0.0
      %1146 = vmatpush2.msra.mxu0 0.0
      %1147 = vmatprep.subr.mxu0 0.0
      %1148 = vmatpush2.msra.mxu0 0.0
      %1149 = vmatprep.subr.mxu0 0.0
      %1150 = vmatpush2.msra.mxu0 0.0
      %1151 = vmatprep.subr.mxu0 0.0
      %1152 = vmatpush2.msra.mxu0 0.0
      %1153 = vmatprep.mubr.f32.mxu0 0.0
      %1154 = vmatmul.mubr.f32.gmra.mxu0 %v1078
      %v1155 = vpop.f32.mrf.mxu0
      %v1156 = vadd.f32 0.0, %v1155
      %v1157 = vpop.f32.mrf.mxu0
      %1158 = vmatprep.mubr.f32.mxu0 0.0
      %1159 = vmatmul.mubr.f32.gmra.mxu0 %v1081
      %v1160 = vpop.f32.mrf.mxu0
      %v1161 = vadd.f32 0.0, %v1160
      %v1162 = vpop.f32.mrf.mxu0
      %1163 = vmatprep.mubr.f32.mxu0 0.0
      %1164 = vmatmul.mubr.f32.gmra.mxu0 %v1084
      %v1165 = vpop.f32.mrf.mxu0
      %v1166 = vadd.f32 0.0, %v1165
      %v1167 = vpop.f32.mrf.mxu0
      %1168 = vmatprep.mubr.f32.mxu0 0.0
      %1169 = vmatmul.mubr.f32.gmra.mxu0 %v1087
      %v1170 = vpop.f32.mrf.mxu0
      %v1171 = vadd.f32 0.0, %v1170
      %v1172 = vpop.f32.mrf.mxu0
      %1173 = vdwg.mxu0
      %v1174 = vadd.f32 %v994, %v1156
      %v1175 = vadd.f32 %v995, %v1161
      %v1176 = vadd.f32 %v996, %v1166
      %v1177 = vadd.f32 %v997, %v1171
      %s1178 = scalar_lea.vmem %s2, 128
      %v1179 = vld [vmem:[%s1178] sm:$0xf]
      %v1180 = vld [vmem:[%s1178 + $0x4] sm:$0xf]
      %v1181 = vld [vmem:[%s1178 + $0x8] sm:$0xf]
      %v1182 = vld [vmem:[%s1178 + $0xc] sm:$0xf]
      %v1183 = vld [vmem:[%s1178 + $0x10] sm:$0xf]
      %v1184 = vld [vmem:[%s1178 + $0x14] sm:$0xf]
      %v1185 = vld [vmem:[%s1178 + $0x18] sm:$0xf]
      %v1186 = vld [vmem:[%s1178 + $0x1c] sm:$0xf]
      %v1195 = vunpack.c.l.b16 %v1179
      %v1196 = vunpack.c.l.b16 %v1180
      %v1197 = vunpack.c.l.b16 %v1181
      %v1198 = vunpack.c.l.b16 %v1182
      %v1199 = vunpack.c.l.b16 %v1183
      %v1200 = vunpack.c.l.b16 %v1184
      %v1201 = vunpack.c.l.b16 %v1185
      %v1202 = vunpack.c.l.b16 %v1186
      %v1203 = vpack.c.b16 %v1196, %v1195
      %v1204 = vpack.c.b16 %v1198, %v1197
      %v1205 = vpack.c.b16 %v1200, %v1199
      %v1206 = vpack.c.b16 %v1202, %v1201
      %1211 = vmatprep.subr.bf16.mxu0 0
      %1212 = vmatpush1.bf16.msra.mxu0 0
      %1213 = vmatprep.subr.bf16.mxu0 0
      %1214 = vmatpush1.bf16.msra.mxu0 0
      %1215 = vmatprep.subr.bf16.mxu0 0
      %1216 = vmatpush1.bf16.msra.mxu0 0
      %1217 = vmatprep.subr.bf16.mxu0 0
      %1218 = vmatpush1.bf16.msra.mxu0 0
      %1219 = vmatprep.subr.bf16.mxu0 0
      %1220 = vmatpush1.bf16.msra.mxu0 %v1206
      %1221 = vmatprep.subr.bf16.mxu0 0
      %1222 = vmatpush1.bf16.msra.mxu0 %v1205
      %1223 = vmatprep.subr.bf16.mxu0 0
      %1224 = vmatpush1.bf16.msra.mxu0 %v1204
      %1225 = vmatprep.subr.bf16.mxu0 0
      %1226 = vmatpush1.bf16.msra.mxu0 %v1203
      %1227 = vmatprep.subr.bf16.mxu0 0
      %1228 = vmatpush2.bf16.msra.mxu0 0
      %1229 = vmatprep.subr.bf16.mxu0 0
      %1230 = vmatpush2.bf16.msra.mxu0 0
      %1231 = vmatprep.subr.bf16.mxu0 0
      %1232 = vmatpush2.bf16.msra.mxu0 0
      %1233 = vmatprep.subr.bf16.mxu0 0
      %1234 = vmatpush2.bf16.msra.mxu0 0
      %1235 = vmatprep.subr.bf16.mxu0 0
      %1236 = vmatpush2.bf16.msra.mxu0 0
      %1237 = vmatprep.subr.bf16.mxu0 0
      %1238 = vmatpush2.bf16.msra.mxu0 0
      %1239 = vmatprep.subr.bf16.mxu0 0
      %1240 = vmatpush2.bf16.msra.mxu0 0
      %1241 = vmatprep.subr.bf16.mxu0 0
      %1242 = vmatpush2.bf16.msra.mxu0 0
      %1243 = vmatprep.mubr.bf16.mxu0 0
      %1244 = vmatmul.mubr.bf16.gmra.mxu0 %v489
      %v1245 = vpop.f32.mrf.mxu0
      %v1246 = vadd.f32 0.0, %v1245
      %v1247 = vpop.f32.mrf.mxu0
      %v1248 = vpop.f32.mrf.mxu0
      %v1249 = vadd.f32 0.0, %v1248
      %v1250 = vpop.f32.mrf.mxu0
      %1251 = vdwg.mxu0
      %s1252 = scalar_lea.vmem %s3, 128
      %v1253 = vld [vmem:[%s1252] sm:$0xff]
      %v1254 = vld [vmem:[%s1252 + $0x8] sm:$0xff]
      %v1255 = vld [vmem:[%s1252 + $0x10] sm:$0xff]
      %v1256 = vld [vmem:[%s1252 + $0x18] sm:$0xff]
      %v1258 = vsel %vm536, %v1253, 0
      %v1261 = vsel %vm536, %v1254, 0
      %v1264 = vsel %vm536, %v1255, 0
      %v1267 = vsel %vm536, %v1256, 0
      %1269 = vmatprep.subr.mxu0 0.0
      %1270 = vmatpush1.msra.mxu0 0.0
      %1271 = vmatprep.subr.mxu0 0.0
      %1272 = vmatpush1.msra.mxu0 0.0
      %1273 = vmatprep.subr.mxu0 0.0
      %1274 = vmatpush1.msra.mxu0 0.0
      %1275 = vmatprep.subr.mxu0 0.0
      %1276 = vmatpush1.msra.mxu0 0.0
      %1277 = vmatprep.subr.mxu0 0.0
      %1278 = vmatpush1.msra.mxu0 0.0
      %1279 = vmatprep.subr.mxu0 0.0
      %1280 = vmatpush1.msra.mxu0 0.0
      %1281 = vmatprep.subr.mxu0 0.0
      %1282 = vmatpush1.msra.mxu0 0.0
      %1283 = vmatprep.subr.mxu0 0.0
      %1284 = vmatpush1.msra.mxu0 0.0
      %1285 = vmatprep.subr.mxu0 0.0
      %1286 = vmatpush1.msra.mxu0 0.0
      %1287 = vmatprep.subr.mxu0 0.0
      %1288 = vmatpush1.msra.mxu0 0.0
      %1289 = vmatprep.subr.mxu0 0.0
      %1290 = vmatpush1.msra.mxu0 0.0
      %1291 = vmatprep.subr.mxu0 0.0
      %1292 = vmatpush1.msra.mxu0 0.0
      %1293 = vmatprep.subr.mxu0 0.0
      %1294 = vmatpush1.msra.mxu0 0.0
      %1295 = vmatprep.subr.mxu0 0.0
      %1296 = vmatpush1.msra.mxu0 0.0
      %1297 = vmatprep.subr.mxu0 0.0
      %1298 = vmatpush1.msra.mxu0 %v1249
      %1299 = vmatprep.subr.mxu0 0.0
      %1300 = vmatpush1.msra.mxu0 %v1246
      %1301 = vmatprep.subr.mxu0 0.0
      %1302 = vmatpush2.msra.mxu0 0.0
      %1303 = vmatprep.subr.mxu0 0.0
      %1304 = vmatpush2.msra.mxu0 0.0
      %1305 = vmatprep.subr.mxu0 0.0
      %1306 = vmatpush2.msra.mxu0 0.0
      %1307 = vmatprep.subr.mxu0 0.0
      %1308 = vmatpush2.msra.mxu0 0.0
      %1309 = vmatprep.subr.mxu0 0.0
      %1310 = vmatpush2.msra.mxu0 0.0
      %1311 = vmatprep.subr.mxu0 0.0
      %1312 = vmatpush2.msra.mxu0 0.0
      %1313 = vmatprep.subr.mxu0 0.0
      %1314 = vmatpush2.msra.mxu0 0.0
      %1315 = vmatprep.subr.mxu0 0.0
      %1316 = vmatpush2.msra.mxu0 0.0
      %1317 = vmatprep.subr.mxu0 0.0
      %1318 = vmatpush2.msra.mxu0 0.0
      %1319 = vmatprep.subr.mxu0 0.0
      %1320 = vmatpush2.msra.mxu0 0.0
      %1321 = vmatprep.subr.mxu0 0.0
      %1322 = vmatpush2.msra.mxu0 0.0
      %1323 = vmatprep.subr.mxu0 0.0
      %1324 = vmatpush2.msra.mxu0 0.0
      %1325 = vmatprep.subr.mxu0 0.0
      %1326 = vmatpush2.msra.mxu0 0.0
      %1327 = vmatprep.subr.mxu0 0.0
      %1328 = vmatpush2.msra.mxu0 0.0
      %1329 = vmatprep.subr.mxu0 0.0
      %1330 = vmatpush2.msra.mxu0 0.0
      %1331 = vmatprep.subr.mxu0 0.0
      %1332 = vmatpush2.msra.mxu0 0.0
      %1333 = vmatprep.mubr.f32.mxu0 0.0
      %1334 = vmatmul.mubr.f32.gmra.mxu0 %v1258
      %v1335 = vpop.f32.mrf.mxu0
      %v1336 = vadd.f32 0.0, %v1335
      %v1337 = vpop.f32.mrf.mxu0
      %1338 = vmatprep.mubr.f32.mxu0 0.0
      %1339 = vmatmul.mubr.f32.gmra.mxu0 %v1261
      %v1340 = vpop.f32.mrf.mxu0
      %v1341 = vadd.f32 0.0, %v1340
      %v1342 = vpop.f32.mrf.mxu0
      %1343 = vmatprep.mubr.f32.mxu0 0.0
      %1344 = vmatmul.mubr.f32.gmra.mxu0 %v1264
      %v1345 = vpop.f32.mrf.mxu0
      %v1346 = vadd.f32 0.0, %v1345
      %v1347 = vpop.f32.mrf.mxu0
      %1348 = vmatprep.mubr.f32.mxu0 0.0
      %1349 = vmatmul.mubr.f32.gmra.mxu0 %v1267
      %v1350 = vpop.f32.mrf.mxu0
      %v1351 = vadd.f32 0.0, %v1350
      %v1352 = vpop.f32.mrf.mxu0
      %1353 = vdwg.mxu0
      %v1354 = vadd.f32 %v1174, %v1336
      %v1355 = vadd.f32 %v1175, %v1341
      %v1356 = vadd.f32 %v1176, %v1346
      %v1357 = vadd.f32 %v1177, %v1351
      %v1358 = vpack.c.bf16 %v1355, %v1354
      %v1359 = vpack.c.bf16 %v1357, %v1356
      %v1360 = vld [vmem:[%s6] sm:$0xff]
      %v1361 = vld [vmem:[%s6 + $0x8] sm:$0xff]
      %v1362 = vld [vmem:[%s6 + $0x10] sm:$0xff]
      %v1363 = vld [vmem:[%s6 + $0x18] sm:$0xff]
      %s1364 = scalar_lea.vmem %s6, 32
      %v1365 = vld [vmem:[%s1364] sm:$0xff]
      %v1366 = vld [vmem:[%s1364 + $0x8] sm:$0xff]
      %v1367 = vld [vmem:[%s1364 + $0x10] sm:$0xff]
      %v1368 = vld [vmem:[%s1364 + $0x18] sm:$0xff]
      %s1369 = scalar_lea.vmem %s5, 192
      %v1370 = vld [vmem:[%s1369] sm:$0xf]
      %v1371 = vld [vmem:[%s1369 + $0x4] sm:$0xf]
      %v1372 = vld [vmem:[%s1369 + $0x8] sm:$0xf]
      %v1373 = vld [vmem:[%s1369 + $0xc] sm:$0xf]
      %v1374 = vld [vmem:[%s1369 + $0x10] sm:$0xf]
      %v1375 = vld [vmem:[%s1369 + $0x14] sm:$0xf]
      %v1376 = vld [vmem:[%s1369 + $0x18] sm:$0xf]
      %v1377 = vld [vmem:[%s1369 + $0x1c] sm:$0xf]
      %v1378 = vld [vmem:[%s1369 + $0x20] sm:$0xf]
      %v1379 = vld [vmem:[%s1369 + $0x24] sm:$0xf]
      %v1380 = vld [vmem:[%s1369 + $0x28] sm:$0xf]
      %v1381 = vld [vmem:[%s1369 + $0x2c] sm:$0xf]
      %v1382 = vld [vmem:[%s1369 + $0x30] sm:$0xf]
      %v1383 = vld [vmem:[%s1369 + $0x34] sm:$0xf]
      %v1384 = vld [vmem:[%s1369 + $0x38] sm:$0xf]
      %v1385 = vld [vmem:[%s1369 + $0x3c] sm:$0xf]
      %v1386 = vld [vmem:[%s5] sm:$0xf]
      %v1387 = vld [vmem:[%s5 + $0x4] sm:$0xf]
      %v1388 = vld [vmem:[%s5 + $0x8] sm:$0xf]
      %v1389 = vld [vmem:[%s5 + $0xc] sm:$0xf]
      %v1390 = vld [vmem:[%s5 + $0x10] sm:$0xf]
      %v1391 = vld [vmem:[%s5 + $0x14] sm:$0xf]
      %v1392 = vld [vmem:[%s5 + $0x18] sm:$0xf]
      %v1393 = vld [vmem:[%s5 + $0x1c] sm:$0xf]
      %v1394 = vld [vmem:[%s5 + $0x20] sm:$0xf]
      %v1395 = vld [vmem:[%s5 + $0x24] sm:$0xf]
      %v1396 = vld [vmem:[%s5 + $0x28] sm:$0xf]
      %v1397 = vld [vmem:[%s5 + $0x2c] sm:$0xf]
      %v1398 = vld [vmem:[%s5 + $0x30] sm:$0xf]
      %v1399 = vld [vmem:[%s5 + $0x34] sm:$0xf]
      %v1400 = vld [vmem:[%s5 + $0x38] sm:$0xf]
      %v1401 = vld [vmem:[%s5 + $0x3c] sm:$0xf]
      %v1406 = vunpack.c.l.b16 %v442
      %v1407 = vunpack.c.l.b16 %v443
      %v1408 = vunpack.c.l.b16 %v444
      %v1409 = vunpack.c.l.b16 %v445
      %v1410 = vpack.c.b16 %v1407, %v1406
      %v1411 = vpack.c.b16 %v1409, %v1408
      %v1430 = vunpack.c.l.b16 %v1386
      %v1431 = vunpack.c.l.b16 %v1387
      %v1432 = vunpack.c.l.b16 %v1388
      %v1433 = vunpack.c.l.b16 %v1389
      %v1434 = vunpack.c.l.b16 %v1390
      %v1435 = vunpack.c.l.b16 %v1391
      %v1436 = vunpack.c.l.b16 %v1392
      %v1437 = vunpack.c.l.b16 %v1393
      %v1438 = vunpack.c.l.b16 %v1394
      %v1439 = vunpack.c.l.b16 %v1395
      %v1440 = vunpack.c.l.b16 %v1396
      %v1441 = vunpack.c.l.b16 %v1397
      %v1442 = vunpack.c.l.b16 %v1398
      %v1443 = vunpack.c.l.b16 %v1399
      %v1444 = vunpack.c.l.b16 %v1400
      %v1445 = vunpack.c.l.b16 %v1401
      %v1446 = vpack.c.b16 %v1431, %v1430
      %v1447 = vpack.c.b16 %v1433, %v1432
      %v1448 = vpack.c.b16 %v1435, %v1434
      %v1449 = vpack.c.b16 %v1437, %v1436
      %v1450 = vpack.c.b16 %v1439, %v1438
      %v1451 = vpack.c.b16 %v1441, %v1440
      %v1452 = vpack.c.b16 %v1443, %v1442
      %v1453 = vpack.c.b16 %v1445, %v1444
      %1462 = vmatprep.subr.bf16.mxu0 0
      %1463 = vmatpush1.bf16.msra.mxu0 %v1453
      %1464 = vmatprep.subr.bf16.mxu0 0
      %1465 = vmatpush1.bf16.msra.mxu0 %v1452
      %1466 = vmatprep.subr.bf16.mxu0 0
      %1467 = vmatpush1.bf16.msra.mxu0 %v1451
      %1468 = vmatprep.subr.bf16.mxu0 0
      %1469 = vmatpush1.bf16.msra.mxu0 %v1450
      %1470 = vmatprep.subr.bf16.mxu0 0
      %1471 = vmatpush1.bf16.msra.mxu0 %v1449
      %1472 = vmatprep.subr.bf16.mxu0 0
      %1473 = vmatpush1.bf16.msra.mxu0 %v1448
      %1474 = vmatprep.subr.bf16.mxu0 0
      %1475 = vmatpush1.bf16.msra.mxu0 %v1447
      %1476 = vmatprep.subr.bf16.mxu0 0
      %1477 = vmatpush1.bf16.msra.mxu0 %v1446
      %1478 = vmatprep.subr.bf16.mxu0 0
      %1479 = vmatpush2.bf16.msra.mxu0 0
      %1480 = vmatprep.subr.bf16.mxu0 0
      %1481 = vmatpush2.bf16.msra.mxu0 0
      %1482 = vmatprep.subr.bf16.mxu0 0
      %1483 = vmatpush2.bf16.msra.mxu0 0
      %1484 = vmatprep.subr.bf16.mxu0 0
      %1485 = vmatpush2.bf16.msra.mxu0 0
      %1486 = vmatprep.subr.bf16.mxu0 0
      %1487 = vmatpush2.bf16.msra.mxu0 0
      %1488 = vmatprep.subr.bf16.mxu0 0
      %1489 = vmatpush2.bf16.msra.mxu0 0
      %1490 = vmatprep.subr.bf16.mxu0 0
      %1491 = vmatpush2.bf16.msra.mxu0 0
      %1492 = vmatprep.subr.bf16.mxu0 0
      %1493 = vmatpush2.bf16.msra.mxu0 0
      %1494 = vmatprep.mubr.bf16.mxu0 0
      %1495 = vmatmul.mubr.bf16.gmra.mxu0 %v1410
      %v1496 = vpop.f32.mrf.mxu0
      %v1497 = vadd.f32 0.0, %v1496
      %v1498 = vpop.f32.mrf.mxu0
      %v1499 = vpop.f32.mrf.mxu0
      %v1500 = vadd.f32 0.0, %v1499
      %v1501 = vpop.f32.mrf.mxu0
      %1502 = vmatprep.mubr.bf16.mxu0 0
      %1503 = vmatmul.mubr.bf16.gmra.mxu0 %v1411
      %v1504 = vpop.f32.mrf.mxu0
      %v1505 = vadd.f32 0.0, %v1504
      %v1506 = vpop.f32.mrf.mxu0
      %v1507 = vpop.f32.mrf.mxu0
      %v1508 = vadd.f32 0.0, %v1507
      %v1509 = vpop.f32.mrf.mxu0
      %1510 = vdwg.mxu0
      %v1527 = vunpack.c.l.b16 %v1370
      %v1528 = vunpack.c.l.b16 %v1371
      %v1529 = vunpack.c.l.b16 %v1372
      %v1530 = vunpack.c.l.b16 %v1373
      %v1531 = vunpack.c.l.b16 %v1374
      %v1532 = vunpack.c.l.b16 %v1375
      %v1533 = vunpack.c.l.b16 %v1376
      %v1534 = vunpack.c.l.b16 %v1377
      %v1535 = vunpack.c.l.b16 %v1378
      %v1536 = vunpack.c.l.b16 %v1379
      %v1537 = vunpack.c.l.b16 %v1380
      %v1538 = vunpack.c.l.b16 %v1381
      %v1539 = vunpack.c.l.b16 %v1382
      %v1540 = vunpack.c.l.b16 %v1383
      %v1541 = vunpack.c.l.b16 %v1384
      %v1542 = vunpack.c.l.b16 %v1385
      %v1543 = vpack.c.b16 %v1528, %v1527
      %v1544 = vpack.c.b16 %v1530, %v1529
      %v1545 = vpack.c.b16 %v1532, %v1531
      %v1546 = vpack.c.b16 %v1534, %v1533
      %v1547 = vpack.c.b16 %v1536, %v1535
      %v1548 = vpack.c.b16 %v1538, %v1537
      %v1549 = vpack.c.b16 %v1540, %v1539
      %v1550 = vpack.c.b16 %v1542, %v1541
      %1559 = vmatprep.subr.bf16.mxu0 0
      %1560 = vmatpush1.bf16.msra.mxu0 %v1550
      %1561 = vmatprep.subr.bf16.mxu0 0
      %1562 = vmatpush1.bf16.msra.mxu0 %v1549
      %1563 = vmatprep.subr.bf16.mxu0 0
      %1564 = vmatpush1.bf16.msra.mxu0 %v1548
      %1565 = vmatprep.subr.bf16.mxu0 0
      %1566 = vmatpush1.bf16.msra.mxu0 %v1547
      %1567 = vmatprep.subr.bf16.mxu0 0
      %1568 = vmatpush1.bf16.msra.mxu0 %v1546
      %1569 = vmatprep.subr.bf16.mxu0 0
      %1570 = vmatpush1.bf16.msra.mxu0 %v1545
      %1571 = vmatprep.subr.bf16.mxu0 0
      %1572 = vmatpush1.bf16.msra.mxu0 %v1544
      %1573 = vmatprep.subr.bf16.mxu0 0
      %1574 = vmatpush1.bf16.msra.mxu0 %v1543
      %1575 = vmatprep.subr.bf16.mxu0 0
      %1576 = vmatpush2.bf16.msra.mxu0 0
      %1577 = vmatprep.subr.bf16.mxu0 0
      %1578 = vmatpush2.bf16.msra.mxu0 0
      %1579 = vmatprep.subr.bf16.mxu0 0
      %1580 = vmatpush2.bf16.msra.mxu0 0
      %1581 = vmatprep.subr.bf16.mxu0 0
      %1582 = vmatpush2.bf16.msra.mxu0 0
      %1583 = vmatprep.subr.bf16.mxu0 0
      %1584 = vmatpush2.bf16.msra.mxu0 0
      %1585 = vmatprep.subr.bf16.mxu0 0
      %1586 = vmatpush2.bf16.msra.mxu0 0
      %1587 = vmatprep.subr.bf16.mxu0 0
      %1588 = vmatpush2.bf16.msra.mxu0 0
      %1589 = vmatprep.subr.bf16.mxu0 0
      %1590 = vmatpush2.bf16.msra.mxu0 0
      %1591 = vmatprep.mubr.bf16.mxu0 0
      %1592 = vmatmul.mubr.bf16.gmra.mxu0 %v1358
      %v1593 = vpop.f32.mrf.mxu0
      %v1594 = vadd.f32 %v1497, %v1593
      %v1595 = vpop.f32.mrf.mxu0
      %v1596 = vpop.f32.mrf.mxu0
      %v1597 = vadd.f32 %v1500, %v1596
      %v1598 = vpop.f32.mrf.mxu0
      %1599 = vmatprep.mubr.bf16.mxu0 0
      %1600 = vmatmul.mubr.bf16.gmra.mxu0 %v1359
      %v1601 = vpop.f32.mrf.mxu0
      %v1602 = vadd.f32 %v1505, %v1601
      %v1603 = vpop.f32.mrf.mxu0
      %v1604 = vpop.f32.mrf.mxu0
      %v1605 = vadd.f32 %v1508, %v1604
      %v1606 = vpop.f32.mrf.mxu0
      %1607 = vdwg.mxu0
      %s1608 = scalar_lea.vmem %s5, 256
      %v1609 = vld [vmem:[%s1608] sm:$0xf]
      %v1610 = vld [vmem:[%s1608 + $0x4] sm:$0xf]
      %v1611 = vld [vmem:[%s1608 + $0x8] sm:$0xf]
      %v1612 = vld [vmem:[%s1608 + $0xc] sm:$0xf]
      %v1613 = vld [vmem:[%s1608 + $0x10] sm:$0xf]
      %v1614 = vld [vmem:[%s1608 + $0x14] sm:$0xf]
      %v1615 = vld [vmem:[%s1608 + $0x18] sm:$0xf]
      %v1616 = vld [vmem:[%s1608 + $0x1c] sm:$0xf]
      %v1617 = vld [vmem:[%s1608 + $0x20] sm:$0xf]
      %v1618 = vld [vmem:[%s1608 + $0x24] sm:$0xf]
      %v1619 = vld [vmem:[%s1608 + $0x28] sm:$0xf]
      %v1620 = vld [vmem:[%s1608 + $0x2c] sm:$0xf]
      %v1621 = vld [vmem:[%s1608 + $0x30] sm:$0xf]
      %v1622 = vld [vmem:[%s1608 + $0x34] sm:$0xf]
      %v1623 = vld [vmem:[%s1608 + $0x38] sm:$0xf]
      %v1624 = vld [vmem:[%s1608 + $0x3c] sm:$0xf]
      %s1625 = scalar_lea.vmem %s5, 64
      %v1626 = vld [vmem:[%s1625] sm:$0xf]
      %v1627 = vld [vmem:[%s1625 + $0x4] sm:$0xf]
      %v1628 = vld [vmem:[%s1625 + $0x8] sm:$0xf]
      %v1629 = vld [vmem:[%s1625 + $0xc] sm:$0xf]
      %v1630 = vld [vmem:[%s1625 + $0x10] sm:$0xf]
      %v1631 = vld [vmem:[%s1625 + $0x14] sm:$0xf]
      %v1632 = vld [vmem:[%s1625 + $0x18] sm:$0xf]
      %v1633 = vld [vmem:[%s1625 + $0x1c] sm:$0xf]
      %v1634 = vld [vmem:[%s1625 + $0x20] sm:$0xf]
      %v1635 = vld [vmem:[%s1625 + $0x24] sm:$0xf]
      %v1636 = vld [vmem:[%s1625 + $0x28] sm:$0xf]
      %v1637 = vld [vmem:[%s1625 + $0x2c] sm:$0xf]
      %v1638 = vld [vmem:[%s1625 + $0x30] sm:$0xf]
      %v1639 = vld [vmem:[%s1625 + $0x34] sm:$0xf]
      %v1640 = vld [vmem:[%s1625 + $0x38] sm:$0xf]
      %v1641 = vld [vmem:[%s1625 + $0x3c] sm:$0xf]
      %v1658 = vunpack.c.l.b16 %v1626
      %v1659 = vunpack.c.l.b16 %v1627
      %v1660 = vunpack.c.l.b16 %v1628
      %v1661 = vunpack.c.l.b16 %v1629
      %v1662 = vunpack.c.l.b16 %v1630
      %v1663 = vunpack.c.l.b16 %v1631
      %v1664 = vunpack.c.l.b16 %v1632
      %v1665 = vunpack.c.l.b16 %v1633
      %v1666 = vunpack.c.l.b16 %v1634
      %v1667 = vunpack.c.l.b16 %v1635
      %v1668 = vunpack.c.l.b16 %v1636
      %v1669 = vunpack.c.l.b16 %v1637
      %v1670 = vunpack.c.l.b16 %v1638
      %v1671 = vunpack.c.l.b16 %v1639
      %v1672 = vunpack.c.l.b16 %v1640
      %v1673 = vunpack.c.l.b16 %v1641
      %v1674 = vpack.c.b16 %v1659, %v1658
      %v1675 = vpack.c.b16 %v1661, %v1660
      %v1676 = vpack.c.b16 %v1663, %v1662
      %v1677 = vpack.c.b16 %v1665, %v1664
      %v1678 = vpack.c.b16 %v1667, %v1666
      %v1679 = vpack.c.b16 %v1669, %v1668
      %v1680 = vpack.c.b16 %v1671, %v1670
      %v1681 = vpack.c.b16 %v1673, %v1672
      %1690 = vmatprep.subr.bf16.mxu0 0
      %1691 = vmatpush1.bf16.msra.mxu0 %v1681
      %1692 = vmatprep.subr.bf16.mxu0 0
      %1693 = vmatpush1.bf16.msra.mxu0 %v1680
      %1694 = vmatprep.subr.bf16.mxu0 0
      %1695 = vmatpush1.bf16.msra.mxu0 %v1679
      %1696 = vmatprep.subr.bf16.mxu0 0
      %1697 = vmatpush1.bf16.msra.mxu0 %v1678
      %1698 = vmatprep.subr.bf16.mxu0 0
      %1699 = vmatpush1.bf16.msra.mxu0 %v1677
      %1700 = vmatprep.subr.bf16.mxu0 0
      %1701 = vmatpush1.bf16.msra.mxu0 %v1676
      %1702 = vmatprep.subr.bf16.mxu0 0
      %1703 = vmatpush1.bf16.msra.mxu0 %v1675
      %1704 = vmatprep.subr.bf16.mxu0 0
      %1705 = vmatpush1.bf16.msra.mxu0 %v1674
      %1706 = vmatprep.subr.bf16.mxu0 0
      %1707 = vmatpush2.bf16.msra.mxu0 0
      %1708 = vmatprep.subr.bf16.mxu0 0
      %1709 = vmatpush2.bf16.msra.mxu0 0
      %1710 = vmatprep.subr.bf16.mxu0 0
      %1711 = vmatpush2.bf16.msra.mxu0 0
      %1712 = vmatprep.subr.bf16.mxu0 0
      %1713 = vmatpush2.bf16.msra.mxu0 0
      %1714 = vmatprep.subr.bf16.mxu0 0
      %1715 = vmatpush2.bf16.msra.mxu0 0
      %1716 = vmatprep.subr.bf16.mxu0 0
      %1717 = vmatpush2.bf16.msra.mxu0 0
      %1718 = vmatprep.subr.bf16.mxu0 0
      %1719 = vmatpush2.bf16.msra.mxu0 0
      %1720 = vmatprep.subr.bf16.mxu0 0
      %1721 = vmatpush2.bf16.msra.mxu0 0
      %1722 = vmatprep.mubr.bf16.mxu0 0
      %1723 = vmatmul.mubr.bf16.gmra.mxu0 %v1410
      %v1724 = vpop.f32.mrf.mxu0
      %v1725 = vadd.f32 0.0, %v1724
      %v1726 = vpop.f32.mrf.mxu0
      %v1727 = vpop.f32.mrf.mxu0
      %v1728 = vadd.f32 0.0, %v1727
      %v1729 = vpop.f32.mrf.mxu0
      %1730 = vmatprep.mubr.bf16.mxu0 0
      %1731 = vmatmul.mubr.bf16.gmra.mxu0 %v1411
      %v1732 = vpop.f32.mrf.mxu0
      %v1733 = vadd.f32 0.0, %v1732
      %v1734 = vpop.f32.mrf.mxu0
      %v1735 = vpop.f32.mrf.mxu0
      %v1736 = vadd.f32 0.0, %v1735
      %v1737 = vpop.f32.mrf.mxu0
      %1738 = vdwg.mxu0
      %v1755 = vunpack.c.l.b16 %v1609
      %v1756 = vunpack.c.l.b16 %v1610
      %v1757 = vunpack.c.l.b16 %v1611
      %v1758 = vunpack.c.l.b16 %v1612
      %v1759 = vunpack.c.l.b16 %v1613
      %v1760 = vunpack.c.l.b16 %v1614
      %v1761 = vunpack.c.l.b16 %v1615
      %v1762 = vunpack.c.l.b16 %v1616
      %v1763 = vunpack.c.l.b16 %v1617
      %v1764 = vunpack.c.l.b16 %v1618
      %v1765 = vunpack.c.l.b16 %v1619
      %v1766 = vunpack.c.l.b16 %v1620
      %v1767 = vunpack.c.l.b16 %v1621
      %v1768 = vunpack.c.l.b16 %v1622
      %v1769 = vunpack.c.l.b16 %v1623
      %v1770 = vunpack.c.l.b16 %v1624
      %v1771 = vpack.c.b16 %v1756, %v1755
      %v1772 = vpack.c.b16 %v1758, %v1757
      %v1773 = vpack.c.b16 %v1760, %v1759
      %v1774 = vpack.c.b16 %v1762, %v1761
      %v1775 = vpack.c.b16 %v1764, %v1763
      %v1776 = vpack.c.b16 %v1766, %v1765
      %v1777 = vpack.c.b16 %v1768, %v1767
      %v1778 = vpack.c.b16 %v1770, %v1769
      %1787 = vmatprep.subr.bf16.mxu0 0
      %1788 = vmatpush1.bf16.msra.mxu0 %v1778
      %1789 = vmatprep.subr.bf16.mxu0 0
      %1790 = vmatpush1.bf16.msra.mxu0 %v1777
      %1791 = vmatprep.subr.bf16.mxu0 0
      %1792 = vmatpush1.bf16.msra.mxu0 %v1776
      %1793 = vmatprep.subr.bf16.mxu0 0
      %1794 = vmatpush1.bf16.msra.mxu0 %v1775
      %1795 = vmatprep.subr.bf16.mxu0 0
      %1796 = vmatpush1.bf16.msra.mxu0 %v1774
      %1797 = vmatprep.subr.bf16.mxu0 0
      %1798 = vmatpush1.bf16.msra.mxu0 %v1773
      %1799 = vmatprep.subr.bf16.mxu0 0
      %1800 = vmatpush1.bf16.msra.mxu0 %v1772
      %1801 = vmatprep.subr.bf16.mxu0 0
      %1802 = vmatpush1.bf16.msra.mxu0 %v1771
      %1803 = vmatprep.subr.bf16.mxu0 0
      %1804 = vmatpush2.bf16.msra.mxu0 0
      %1805 = vmatprep.subr.bf16.mxu0 0
      %1806 = vmatpush2.bf16.msra.mxu0 0
      %1807 = vmatprep.subr.bf16.mxu0 0
      %1808 = vmatpush2.bf16.msra.mxu0 0
      %1809 = vmatprep.subr.bf16.mxu0 0
      %1810 = vmatpush2.bf16.msra.mxu0 0
      %1811 = vmatprep.subr.bf16.mxu0 0
      %1812 = vmatpush2.bf16.msra.mxu0 0
      %1813 = vmatprep.subr.bf16.mxu0 0
      %1814 = vmatpush2.bf16.msra.mxu0 0
      %1815 = vmatprep.subr.bf16.mxu0 0
      %1816 = vmatpush2.bf16.msra.mxu0 0
      %1817 = vmatprep.subr.bf16.mxu0 0
      %1818 = vmatpush2.bf16.msra.mxu0 0
      %1819 = vmatprep.mubr.bf16.mxu0 0
      %1820 = vmatmul.mubr.bf16.gmra.mxu0 %v1358
      %v1821 = vpop.f32.mrf.mxu0
      %v1822 = vadd.f32 %v1725, %v1821
      %v1823 = vpop.f32.mrf.mxu0
      %v1824 = vpop.f32.mrf.mxu0
      %v1825 = vadd.f32 %v1728, %v1824
      %v1826 = vpop.f32.mrf.mxu0
      %1827 = vmatprep.mubr.bf16.mxu0 0
      %1828 = vmatmul.mubr.bf16.gmra.mxu0 %v1359
      %v1829 = vpop.f32.mrf.mxu0
      %v1830 = vadd.f32 %v1733, %v1829
      %v1831 = vpop.f32.mrf.mxu0
      %v1832 = vpop.f32.mrf.mxu0
      %v1833 = vadd.f32 %v1736, %v1832
      %v1834 = vpop.f32.mrf.mxu0
      %1835 = vdwg.mxu0
      %s1836 = scalar_lea.vmem %s5, 320
      %v1837 = vld [vmem:[%s1836] sm:$0xf]
      %v1838 = vld [vmem:[%s1836 + $0x4] sm:$0xf]
      %v1839 = vld [vmem:[%s1836 + $0x8] sm:$0xf]
      %v1840 = vld [vmem:[%s1836 + $0xc] sm:$0xf]
      %v1841 = vld [vmem:[%s1836 + $0x10] sm:$0xf]
      %v1842 = vld [vmem:[%s1836 + $0x14] sm:$0xf]
      %v1843 = vld [vmem:[%s1836 + $0x18] sm:$0xf]
      %v1844 = vld [vmem:[%s1836 + $0x1c] sm:$0xf]
      %v1845 = vld [vmem:[%s1836 + $0x20] sm:$0xf]
      %v1846 = vld [vmem:[%s1836 + $0x24] sm:$0xf]
      %v1847 = vld [vmem:[%s1836 + $0x28] sm:$0xf]
      %v1848 = vld [vmem:[%s1836 + $0x2c] sm:$0xf]
      %v1849 = vld [vmem:[%s1836 + $0x30] sm:$0xf]
      %v1850 = vld [vmem:[%s1836 + $0x34] sm:$0xf]
      %v1851 = vld [vmem:[%s1836 + $0x38] sm:$0xf]
      %v1852 = vld [vmem:[%s1836 + $0x3c] sm:$0xf]
      %s1853 = scalar_lea.vmem %s5, 128
      %v1854 = vld [vmem:[%s1853] sm:$0xf]
      %v1855 = vld [vmem:[%s1853 + $0x4] sm:$0xf]
      %v1856 = vld [vmem:[%s1853 + $0x8] sm:$0xf]
      %v1857 = vld [vmem:[%s1853 + $0xc] sm:$0xf]
      %v1858 = vld [vmem:[%s1853 + $0x10] sm:$0xf]
      %v1859 = vld [vmem:[%s1853 + $0x14] sm:$0xf]
      %v1860 = vld [vmem:[%s1853 + $0x18] sm:$0xf]
      %v1861 = vld [vmem:[%s1853 + $0x1c] sm:$0xf]
      %v1862 = vld [vmem:[%s1853 + $0x20] sm:$0xf]
      %v1863 = vld [vmem:[%s1853 + $0x24] sm:$0xf]
      %v1864 = vld [vmem:[%s1853 + $0x28] sm:$0xf]
      %v1865 = vld [vmem:[%s1853 + $0x2c] sm:$0xf]
      %v1866 = vld [vmem:[%s1853 + $0x30] sm:$0xf]
      %v1867 = vld [vmem:[%s1853 + $0x34] sm:$0xf]
      %v1868 = vld [vmem:[%s1853 + $0x38] sm:$0xf]
      %v1869 = vld [vmem:[%s1853 + $0x3c] sm:$0xf]
      %v1886 = vunpack.c.l.b16 %v1854
      %v1887 = vunpack.c.l.b16 %v1855
      %v1888 = vunpack.c.l.b16 %v1856
      %v1889 = vunpack.c.l.b16 %v1857
      %v1890 = vunpack.c.l.b16 %v1858
      %v1891 = vunpack.c.l.b16 %v1859
      %v1892 = vunpack.c.l.b16 %v1860
      %v1893 = vunpack.c.l.b16 %v1861
      %v1894 = vunpack.c.l.b16 %v1862
      %v1895 = vunpack.c.l.b16 %v1863
      %v1896 = vunpack.c.l.b16 %v1864
      %v1897 = vunpack.c.l.b16 %v1865
      %v1898 = vunpack.c.l.b16 %v1866
      %v1899 = vunpack.c.l.b16 %v1867
      %v1900 = vunpack.c.l.b16 %v1868
      %v1901 = vunpack.c.l.b16 %v1869
      %v1902 = vpack.c.b16 %v1887, %v1886
      %v1903 = vpack.c.b16 %v1889, %v1888
      %v1904 = vpack.c.b16 %v1891, %v1890
      %v1905 = vpack.c.b16 %v1893, %v1892
      %v1906 = vpack.c.b16 %v1895, %v1894
      %v1907 = vpack.c.b16 %v1897, %v1896
      %v1908 = vpack.c.b16 %v1899, %v1898
      %v1909 = vpack.c.b16 %v1901, %v1900
      %1918 = vmatprep.subr.bf16.mxu0 0
      %1919 = vmatpush1.bf16.msra.mxu0 %v1909
      %1920 = vmatprep.subr.bf16.mxu0 0
      %1921 = vmatpush1.bf16.msra.mxu0 %v1908
      %1922 = vmatprep.subr.bf16.mxu0 0
      %1923 = vmatpush1.bf16.msra.mxu0 %v1907
      %1924 = vmatprep.subr.bf16.mxu0 0
      %1925 = vmatpush1.bf16.msra.mxu0 %v1906
      %1926 = vmatprep.subr.bf16.mxu0 0
      %1927 = vmatpush1.bf16.msra.mxu0 %v1905
      %1928 = vmatprep.subr.bf16.mxu0 0
      %1929 = vmatpush1.bf16.msra.mxu0 %v1904
      %1930 = vmatprep.subr.bf16.mxu0 0
      %1931 = vmatpush1.bf16.msra.mxu0 %v1903
      %1932 = vmatprep.subr.bf16.mxu0 0
      %1933 = vmatpush1.bf16.msra.mxu0 %v1902
      %1934 = vmatprep.subr.bf16.mxu0 0
      %1935 = vmatpush2.bf16.msra.mxu0 0
      %1936 = vmatprep.subr.bf16.mxu0 0
      %1937 = vmatpush2.bf16.msra.mxu0 0
      %1938 = vmatprep.subr.bf16.mxu0 0
      %1939 = vmatpush2.bf16.msra.mxu0 0
      %1940 = vmatprep.subr.bf16.mxu0 0
      %1941 = vmatpush2.bf16.msra.mxu0 0
      %1942 = vmatprep.subr.bf16.mxu0 0
      %1943 = vmatpush2.bf16.msra.mxu0 0
      %1944 = vmatprep.subr.bf16.mxu0 0
      %1945 = vmatpush2.bf16.msra.mxu0 0
      %1946 = vmatprep.subr.bf16.mxu0 0
      %1947 = vmatpush2.bf16.msra.mxu0 0
      %1948 = vmatprep.subr.bf16.mxu0 0
      %1949 = vmatpush2.bf16.msra.mxu0 0
      %1950 = vmatprep.mubr.bf16.mxu0 0
      %1951 = vmatmul.mubr.bf16.gmra.mxu0 %v1410
      %v1952 = vpop.f32.mrf.mxu0
      %v1953 = vadd.f32 0.0, %v1952
      %v1954 = vpop.f32.mrf.mxu0
      %v1955 = vpop.f32.mrf.mxu0
      %v1956 = vadd.f32 0.0, %v1955
      %v1957 = vpop.f32.mrf.mxu0
      %1958 = vmatprep.mubr.bf16.mxu0 0
      %1959 = vmatmul.mubr.bf16.gmra.mxu0 %v1411
      %v1960 = vpop.f32.mrf.mxu0
      %v1961 = vadd.f32 0.0, %v1960
      %v1962 = vpop.f32.mrf.mxu0
      %v1963 = vpop.f32.mrf.mxu0
      %v1964 = vadd.f32 0.0, %v1963
      %v1965 = vpop.f32.mrf.mxu0
      %1966 = vdwg.mxu0
      %v1983 = vunpack.c.l.b16 %v1837
      %v1984 = vunpack.c.l.b16 %v1838
      %v1985 = vunpack.c.l.b16 %v1839
      %v1986 = vunpack.c.l.b16 %v1840
      %v1987 = vunpack.c.l.b16 %v1841
      %v1988 = vunpack.c.l.b16 %v1842
      %v1989 = vunpack.c.l.b16 %v1843
      %v1990 = vunpack.c.l.b16 %v1844
      %v1991 = vunpack.c.l.b16 %v1845
      %v1992 = vunpack.c.l.b16 %v1846
      %v1993 = vunpack.c.l.b16 %v1847
      %v1994 = vunpack.c.l.b16 %v1848
      %v1995 = vunpack.c.l.b16 %v1849
      %v1996 = vunpack.c.l.b16 %v1850
      %v1997 = vunpack.c.l.b16 %v1851
      %v1998 = vunpack.c.l.b16 %v1852
      %v1999 = vpack.c.b16 %v1984, %v1983
      %v2000 = vpack.c.b16 %v1986, %v1985
      %v2001 = vpack.c.b16 %v1988, %v1987
      %v2002 = vpack.c.b16 %v1990, %v1989
      %v2003 = vpack.c.b16 %v1992, %v1991
      %v2004 = vpack.c.b16 %v1994, %v1993
      %v2005 = vpack.c.b16 %v1996, %v1995
      %v2006 = vpack.c.b16 %v1998, %v1997
      %2015 = vmatprep.subr.bf16.mxu0 0
      %2016 = vmatpush1.bf16.msra.mxu0 %v2006
      %2017 = vmatprep.subr.bf16.mxu0 0
      %2018 = vmatpush1.bf16.msra.mxu0 %v2005
      %2019 = vmatprep.subr.bf16.mxu0 0
      %2020 = vmatpush1.bf16.msra.mxu0 %v2004
      %2021 = vmatprep.subr.bf16.mxu0 0
      %2022 = vmatpush1.bf16.msra.mxu0 %v2003
      %2023 = vmatprep.subr.bf16.mxu0 0
      %2024 = vmatpush1.bf16.msra.mxu0 %v2002
      %2025 = vmatprep.subr.bf16.mxu0 0
      %2026 = vmatpush1.bf16.msra.mxu0 %v2001
      %2027 = vmatprep.subr.bf16.mxu0 0
      %2028 = vmatpush1.bf16.msra.mxu0 %v2000
      %2029 = vmatprep.subr.bf16.mxu0 0
      %2030 = vmatpush1.bf16.msra.mxu0 %v1999
      %2031 = vmatprep.subr.bf16.mxu0 0
      %2032 = vmatpush2.bf16.msra.mxu0 0
      %2033 = vmatprep.subr.bf16.mxu0 0
      %2034 = vmatpush2.bf16.msra.mxu0 0
      %2035 = vmatprep.subr.bf16.mxu0 0
      %2036 = vmatpush2.bf16.msra.mxu0 0
      %2037 = vmatprep.subr.bf16.mxu0 0
      %2038 = vmatpush2.bf16.msra.mxu0 0
      %2039 = vmatprep.subr.bf16.mxu0 0
      %2040 = vmatpush2.bf16.msra.mxu0 0
      %2041 = vmatprep.subr.bf16.mxu0 0
      %2042 = vmatpush2.bf16.msra.mxu0 0
      %2043 = vmatprep.subr.bf16.mxu0 0
      %2044 = vmatpush2.bf16.msra.mxu0 0
      %2045 = vmatprep.subr.bf16.mxu0 0
      %2046 = vmatpush2.bf16.msra.mxu0 0
      %2047 = vmatprep.mubr.bf16.mxu0 0
      %2048 = vmatmul.mubr.bf16.gmra.mxu0 %v1358
      %v2049 = vpop.f32.mrf.mxu0
      %v2050 = vadd.f32 %v1953, %v2049
      %v2051 = vpop.f32.mrf.mxu0
      %v2052 = vpop.f32.mrf.mxu0
      %v2053 = vadd.f32 %v1956, %v2052
      %v2054 = vpop.f32.mrf.mxu0
      %2055 = vmatprep.mubr.bf16.mxu0 0
      %2056 = vmatmul.mubr.bf16.gmra.mxu0 %v1359
      %v2057 = vpop.f32.mrf.mxu0
      %v2058 = vadd.f32 %v1961, %v2057
      %v2059 = vpop.f32.mrf.mxu0
      %v2060 = vpop.f32.mrf.mxu0
      %v2061 = vadd.f32 %v1964, %v2060
      %v2062 = vpop.f32.mrf.mxu0
      %2063 = vdwg.mxu0
      %vm2064 = vcmask 261120
      %v2066 = vsel %vm2064, %v1360, 0
      %v2069 = vsel %vm2064, %v1361, 0
      %v2072 = vsel %vm2064, %v1362, 0
      %v2075 = vsel %vm2064, %v1363, 0
      %2077 = vmatprep.subr.mxu0 0.0
      %2078 = vmatpush1.msra.mxu0 0.0
      %2079 = vmatprep.subr.mxu0 0.0
      %2080 = vmatpush1.msra.mxu0 0.0
      %2081 = vmatprep.subr.mxu0 0.0
      %2082 = vmatpush1.msra.mxu0 0.0
      %2083 = vmatprep.subr.mxu0 0.0
      %2084 = vmatpush1.msra.mxu0 0.0
      %2085 = vmatprep.subr.mxu0 0.0
      %2086 = vmatpush1.msra.mxu0 0.0
      %2087 = vmatprep.subr.mxu0 0.0
      %2088 = vmatpush1.msra.mxu0 0.0
      %2089 = vmatprep.subr.mxu0 0.0
      %2090 = vmatpush1.msra.mxu0 0.0
      %2091 = vmatprep.subr.mxu0 0.0
      %2092 = vmatpush1.msra.mxu0 0.0
      %2093 = vmatprep.subr.mxu0 0.0
      %2094 = vmatpush1.msra.mxu0 0.0
      %2095 = vmatprep.subr.mxu0 0.0
      %2096 = vmatpush1.msra.mxu0 0.0
      %2097 = vmatprep.subr.mxu0 0.0
      %2098 = vmatpush1.msra.mxu0 0.0
      %2099 = vmatprep.subr.mxu0 0.0
      %2100 = vmatpush1.msra.mxu0 0.0
      %2101 = vmatprep.subr.mxu0 0.0
      %2102 = vmatpush1.msra.mxu0 %v1605
      %2103 = vmatprep.subr.mxu0 0.0
      %2104 = vmatpush1.msra.mxu0 %v1602
      %2105 = vmatprep.subr.mxu0 0.0
      %2106 = vmatpush1.msra.mxu0 %v1597
      %2107 = vmatprep.subr.mxu0 0.0
      %2108 = vmatpush1.msra.mxu0 %v1594
      %2109 = vmatprep.subr.mxu0 0.0
      %2110 = vmatpush2.msra.mxu0 0.0
      %2111 = vmatprep.subr.mxu0 0.0
      %2112 = vmatpush2.msra.mxu0 0.0
      %2113 = vmatprep.subr.mxu0 0.0
      %2114 = vmatpush2.msra.mxu0 0.0
      %2115 = vmatprep.subr.mxu0 0.0
      %2116 = vmatpush2.msra.mxu0 0.0
      %2117 = vmatprep.subr.mxu0 0.0
      %2118 = vmatpush2.msra.mxu0 0.0
      %2119 = vmatprep.subr.mxu0 0.0
      %2120 = vmatpush2.msra.mxu0 0.0
      %2121 = vmatprep.subr.mxu0 0.0
      %2122 = vmatpush2.msra.mxu0 0.0
      %2123 = vmatprep.subr.mxu0 0.0
      %2124 = vmatpush2.msra.mxu0 0.0
      %2125 = vmatprep.subr.mxu0 0.0
      %2126 = vmatpush2.msra.mxu0 0.0
      %2127 = vmatprep.subr.mxu0 0.0
      %2128 = vmatpush2.msra.mxu0 0.0
      %2129 = vmatprep.subr.mxu0 0.0
      %2130 = vmatpush2.msra.mxu0 0.0
      %2131 = vmatprep.subr.mxu0 0.0
      %2132 = vmatpush2.msra.mxu0 0.0
      %2133 = vmatprep.subr.mxu0 0.0
      %2134 = vmatpush2.msra.mxu0 0.0
      %2135 = vmatprep.subr.mxu0 0.0
      %2136 = vmatpush2.msra.mxu0 0.0
      %2137 = vmatprep.subr.mxu0 0.0
      %2138 = vmatpush2.msra.mxu0 0.0
      %2139 = vmatprep.subr.mxu0 0.0
      %2140 = vmatpush2.msra.mxu0 0.0
      %2141 = vmatprep.mubr.f32.mxu0 0.0
      %2142 = vmatmul.mubr.f32.gmra.mxu0 %v2066
      %v2143 = vpop.f32.mrf.mxu0
      %v2144 = vadd.f32 %v1822, %v2143
      %v2145 = vpop.f32.mrf.mxu0
      %2146 = vmatprep.mubr.f32.mxu0 0.0
      %2147 = vmatmul.mubr.f32.gmra.mxu0 %v2069
      %v2148 = vpop.f32.mrf.mxu0
      %v2149 = vadd.f32 %v1825, %v2148
      %v2150 = vpop.f32.mrf.mxu0
      %2151 = vmatprep.mubr.f32.mxu0 0.0
      %2152 = vmatmul.mubr.f32.gmra.mxu0 %v2072
      %v2153 = vpop.f32.mrf.mxu0
      %v2154 = vadd.f32 %v1830, %v2153
      %v2155 = vpop.f32.mrf.mxu0
      %2156 = vmatprep.mubr.f32.mxu0 0.0
      %2157 = vmatmul.mubr.f32.gmra.mxu0 %v2075
      %v2158 = vpop.f32.mrf.mxu0
      %v2159 = vadd.f32 %v1833, %v2158
      %v2160 = vpop.f32.mrf.mxu0
      %2161 = vdwg.mxu0
      %v2163 = vsel %vm2064, %v1365, 0
      %v2166 = vsel %vm2064, %v1366, 0
      %v2169 = vsel %vm2064, %v1367, 0
      %v2172 = vsel %vm2064, %v1368, 0
      %2174 = vmatprep.subr.mxu0 0.0
      %2175 = vmatpush1.msra.mxu0 0.0
      %2176 = vmatprep.subr.mxu0 0.0
      %2177 = vmatpush1.msra.mxu0 0.0
      %2178 = vmatprep.subr.mxu0 0.0
      %2179 = vmatpush1.msra.mxu0 0.0
      %2180 = vmatprep.subr.mxu0 0.0
      %2181 = vmatpush1.msra.mxu0 0.0
      %2182 = vmatprep.subr.mxu0 0.0
      %2183 = vmatpush1.msra.mxu0 0.0
      %2184 = vmatprep.subr.mxu0 0.0
      %2185 = vmatpush1.msra.mxu0 0.0
      %2186 = vmatprep.subr.mxu0 0.0
      %2187 = vmatpush1.msra.mxu0 0.0
      %2188 = vmatprep.subr.mxu0 0.0
      %2189 = vmatpush1.msra.mxu0 0.0
      %2190 = vmatprep.subr.mxu0 0.0
      %2191 = vmatpush1.msra.mxu0 0.0
      %2192 = vmatprep.subr.mxu0 0.0
      %2193 = vmatpush1.msra.mxu0 0.0
      %2194 = vmatprep.subr.mxu0 0.0
      %2195 = vmatpush1.msra.mxu0 0.0
      %2196 = vmatprep.subr.mxu0 0.0
      %2197 = vmatpush1.msra.mxu0 0.0
      %2198 = vmatprep.subr.mxu0 0.0
      %2199 = vmatpush1.msra.mxu0 %v2061
      %2200 = vmatprep.subr.mxu0 0.0
      %2201 = vmatpush1.msra.mxu0 %v2058
      %2202 = vmatprep.subr.mxu0 0.0
      %2203 = vmatpush1.msra.mxu0 %v2053
      %2204 = vmatprep.subr.mxu0 0.0
      %2205 = vmatpush1.msra.mxu0 %v2050
      %2206 = vmatprep.subr.mxu0 0.0
      %2207 = vmatpush2.msra.mxu0 0.0
      %2208 = vmatprep.subr.mxu0 0.0
      %2209 = vmatpush2.msra.mxu0 0.0
      %2210 = vmatprep.subr.mxu0 0.0
      %2211 = vmatpush2.msra.mxu0 0.0
      %2212 = vmatprep.subr.mxu0 0.0
      %2213 = vmatpush2.msra.mxu0 0.0
      %2214 = vmatprep.subr.mxu0 0.0
      %2215 = vmatpush2.msra.mxu0 0.0
      %2216 = vmatprep.subr.mxu0 0.0
      %2217 = vmatpush2.msra.mxu0 0.0
      %2218 = vmatprep.subr.mxu0 0.0
      %2219 = vmatpush2.msra.mxu0 0.0
      %2220 = vmatprep.subr.mxu0 0.0
      %2221 = vmatpush2.msra.mxu0 0.0
      %2222 = vmatprep.subr.mxu0 0.0
      %2223 = vmatpush2.msra.mxu0 0.0
      %2224 = vmatprep.subr.mxu0 0.0
      %2225 = vmatpush2.msra.mxu0 0.0
      %2226 = vmatprep.subr.mxu0 0.0
      %2227 = vmatpush2.msra.mxu0 0.0
      %2228 = vmatprep.subr.mxu0 0.0
      %2229 = vmatpush2.msra.mxu0 0.0
      %2230 = vmatprep.subr.mxu0 0.0
      %2231 = vmatpush2.msra.mxu0 0.0
      %2232 = vmatprep.subr.mxu0 0.0
      %2233 = vmatpush2.msra.mxu0 0.0
      %2234 = vmatprep.subr.mxu0 0.0
      %2235 = vmatpush2.msra.mxu0 0.0
      %2236 = vmatprep.subr.mxu0 0.0
      %2237 = vmatpush2.msra.mxu0 0.0
      %2238 = vmatprep.mubr.f32.mxu0 0.0
      %2239 = vmatmul.mubr.f32.gmra.mxu0 %v2163
      %v2240 = vpop.f32.mrf.mxu0
      %v2241 = vadd.f32 0.0, %v2240
      %v2242 = vpop.f32.mrf.mxu0
      %2243 = vmatprep.mubr.f32.mxu0 0.0
      %2244 = vmatmul.mubr.f32.gmra.mxu0 %v2166
      %v2245 = vpop.f32.mrf.mxu0
      %v2246 = vadd.f32 0.0, %v2245
      %v2247 = vpop.f32.mrf.mxu0
      %2248 = vmatprep.mubr.f32.mxu0 0.0
      %2249 = vmatmul.mubr.f32.gmra.mxu0 %v2169
      %v2250 = vpop.f32.mrf.mxu0
      %v2251 = vadd.f32 0.0, %v2250
      %v2252 = vpop.f32.mrf.mxu0
      %2253 = vmatprep.mubr.f32.mxu0 0.0
      %2254 = vmatmul.mubr.f32.gmra.mxu0 %v2172
      %v2255 = vpop.f32.mrf.mxu0
      %v2256 = vadd.f32 0.0, %v2255
      %v2257 = vpop.f32.mrf.mxu0
      %2258 = vdwg.mxu0
      %v2259 = vadd.f32 %v2144, %v2241
      %v2260 = vadd.f32 %v2149, %v2246
      %v2261 = vadd.f32 %v2154, %v2251
      %v2262 = vadd.f32 %v2159, %v2256
      %v2263 = vld [vmem:[%s11] sm:$0x7]
      %v2264 = vlaneseq
      %v2265 = vshrl.u32 %v2264, 7
      %v2266 = vsub.s32 0, %v2265
      %v2267 = vrot.slane %v2263, %v2266
      %v2268 = vadd.f32 %v2259, %v2267
      %v2269 = vadd.f32 %v2260, %v2267
      %v2270 = vadd.f32 %v2261, %v2267
      %v2271 = vadd.f32 %v2262, %v2267
      %v2272 = vmul.f32 %v2268, %v2268
      %v2273 = vmul.f32 %v2269, %v2269
      %v2274 = vmul.f32 %v2270, %v2270
      %v2275 = vmul.f32 %v2271, %v2271
      %v2276 = vld [vmem:[%s7] sm:$0xff]
      %v2277 = vld [vmem:[%s7 + $0x8] sm:$0xff]
      %v2278 = vld [vmem:[%s7 + $0x10] sm:$0xff]
      %v2279 = vld [vmem:[%s7 + $0x18] sm:$0xff]
      %v2280 = vld [vmem:[%s7 + $0x20] sm:$0xff]
      %v2281 = vld [vmem:[%s7 + $0x28] sm:$0xff]
      %v2282 = vld [vmem:[%s7 + $0x30] sm:$0xff]
      %v2283 = vld [vmem:[%s7 + $0x38] sm:$0xff]
      %v2284 = vld [vmem:[%s7 + $0x40] sm:$0xff]
      %v2285 = vld [vmem:[%s7 + $0x48] sm:$0xff]
      %v2286 = vld [vmem:[%s7 + $0x50] sm:$0xff]
      %v2287 = vld [vmem:[%s7 + $0x58] sm:$0xff]
      %v2288 = vld [vmem:[%s7 + $0x60] sm:$0xff]
      %v2289 = vld [vmem:[%s7 + $0x68] sm:$0xff]
      %v2290 = vld [vmem:[%s7 + $0x70] sm:$0xff]
      %v2291 = vld [vmem:[%s7 + $0x78] sm:$0xff]
      %v2292 = vld [vmem:[%s7 + $0x80] sm:$0xff]
      %v2293 = vld [vmem:[%s7 + $0x88] sm:$0xff]
      %v2294 = vld [vmem:[%s7 + $0x90] sm:$0xff]
      %v2295 = vld [vmem:[%s7 + $0x98] sm:$0xff]
      %v2296 = vld [vmem:[%s7 + $0xa0] sm:$0xff]
      %v2297 = vld [vmem:[%s7 + $0xa8] sm:$0xff]
      %v2298 = vld [vmem:[%s7 + $0xb0] sm:$0xff]
      %v2299 = vld [vmem:[%s7 + $0xb8] sm:$0xff]
      %v2300 = vld [vmem:[%s7 + $0xc0] sm:$0xff]
      %v2301 = vld [vmem:[%s7 + $0xc8] sm:$0xff]
      %v2302 = vld [vmem:[%s7 + $0xd0] sm:$0xff]
      %v2303 = vld [vmem:[%s7 + $0xd8] sm:$0xff]
      %v2304 = vld [vmem:[%s7 + $0xe0] sm:$0xff]
      %v2305 = vld [vmem:[%s7 + $0xe8] sm:$0xff]
      %v2306 = vld [vmem:[%s7 + $0xf0] sm:$0xff]
      %v2307 = vld [vmem:[%s7 + $0xf8] sm:$0xff]
      %2308 = vmatprep.subr.mxu0 0.0
      %2309 = vmatpush1.msra.mxu0 %v2291
      %2310 = vmatprep.subr.mxu0 0.0
      %2311 = vmatpush1.msra.mxu0 %v2290
      %2312 = vmatprep.subr.mxu0 0.0
      %2313 = vmatpush1.msra.mxu0 %v2289
      %2314 = vmatprep.subr.mxu0 0.0
      %2315 = vmatpush1.msra.mxu0 %v2288
      %2316 = vmatprep.subr.mxu0 0.0
      %2317 = vmatpush1.msra.mxu0 %v2287
      %2318 = vmatprep.subr.mxu0 0.0
      %2319 = vmatpush1.msra.mxu0 %v2286
      %2320 = vmatprep.subr.mxu0 0.0
      %2321 = vmatpush1.msra.mxu0 %v2285
      %2322 = vmatprep.subr.mxu0 0.0
      %2323 = vmatpush1.msra.mxu0 %v2284
      %2324 = vmatprep.subr.mxu0 0.0
      %2325 = vmatpush1.msra.mxu0 %v2283
      %2326 = vmatprep.subr.mxu0 0.0
      %2327 = vmatpush1.msra.mxu0 %v2282
      %2328 = vmatprep.subr.mxu0 0.0
      %2329 = vmatpush1.msra.mxu0 %v2281
      %2330 = vmatprep.subr.mxu0 0.0
      %2331 = vmatpush1.msra.mxu0 %v2280
      %2332 = vmatprep.subr.mxu0 0.0
      %2333 = vmatpush1.msra.mxu0 %v2279
      %2334 = vmatprep.subr.mxu0 0.0
      %2335 = vmatpush1.msra.mxu0 %v2278
      %2336 = vmatprep.subr.mxu0 0.0
      %2337 = vmatpush1.msra.mxu0 %v2277
      %2338 = vmatprep.subr.mxu0 0.0
      %2339 = vmatpush1.msra.mxu0 %v2276
      %2340 = vmatprep.subr.mxu0 0.0
      %2341 = vmatpush2.msra.mxu0 %v2307
      %2342 = vmatprep.subr.mxu0 0.0
      %2343 = vmatpush2.msra.mxu0 %v2306
      %2344 = vmatprep.subr.mxu0 0.0
      %2345 = vmatpush2.msra.mxu0 %v2305
      %2346 = vmatprep.subr.mxu0 0.0
      %2347 = vmatpush2.msra.mxu0 %v2304
      %2348 = vmatprep.subr.mxu0 0.0
      %2349 = vmatpush2.msra.mxu0 %v2303
      %2350 = vmatprep.subr.mxu0 0.0
      %2351 = vmatpush2.msra.mxu0 %v2302
      %2352 = vmatprep.subr.mxu0 0.0
      %2353 = vmatpush2.msra.mxu0 %v2301
      %2354 = vmatprep.subr.mxu0 0.0
      %2355 = vmatpush2.msra.mxu0 %v2300
      %2356 = vmatprep.subr.mxu0 0.0
      %2357 = vmatpush2.msra.mxu0 %v2299
      %2358 = vmatprep.subr.mxu0 0.0
      %2359 = vmatpush2.msra.mxu0 %v2298
      %2360 = vmatprep.subr.mxu0 0.0
      %2361 = vmatpush2.msra.mxu0 %v2297
      %2362 = vmatprep.subr.mxu0 0.0
      %2363 = vmatpush2.msra.mxu0 %v2296
      %2364 = vmatprep.subr.mxu0 0.0
      %2365 = vmatpush2.msra.mxu0 %v2295
      %2366 = vmatprep.subr.mxu0 0.0
      %2367 = vmatpush2.msra.mxu0 %v2294
      %2368 = vmatprep.subr.mxu0 0.0
      %2369 = vmatpush2.msra.mxu0 %v2293
      %2370 = vmatprep.subr.mxu0 0.0
      %2371 = vmatpush2.msra.mxu0 %v2292
      %2372 = vmatprep.mubr.f32.mxu0 %v2272
      %2373 = vmatmul.mubr.f32.gmra.mxu0 %v2268
      %v2374 = vpop.f32.mrf.mxu0
      %v2375 = vadd.f32 0.0, %v2374
      %v2376 = vpop.f32.mrf.mxu0
      %2377 = vmatprep.mubr.f32.mxu0 %v2273
      %2378 = vmatmul.mubr.f32.gmra.mxu0 %v2269
      %v2379 = vpop.f32.mrf.mxu0
      %v2380 = vadd.f32 0.0, %v2379
      %v2381 = vpop.f32.mrf.mxu0
      %2382 = vmatprep.mubr.f32.mxu0 %v2274
      %2383 = vmatmul.mubr.f32.gmra.mxu0 %v2270
      %v2384 = vpop.f32.mrf.mxu0
      %v2385 = vadd.f32 0.0, %v2384
      %v2386 = vpop.f32.mrf.mxu0
      %2387 = vmatprep.mubr.f32.mxu0 %v2275
      %2388 = vmatmul.mubr.f32.gmra.mxu0 %v2271
      %v2389 = vpop.f32.mrf.mxu0
      %v2390 = vadd.f32 0.0, %v2389
      %v2391 = vpop.f32.mrf.mxu0
      %2392 = vdwg.mxu0
      %v2393 = vld [vmem:[%s9] sm:$0x3]
      %v2395 = vsel %vm2064, %v2393, 0
      %2397 = vmatprep.subr.mxu0 0.0
      %2398 = vmatpush1.msra.mxu0 0.0
      %2399 = vmatprep.subr.mxu0 0.0
      %2400 = vmatpush1.msra.mxu0 0.0
      %2401 = vmatprep.subr.mxu0 0.0
      %2402 = vmatpush1.msra.mxu0 0.0
      %2403 = vmatprep.subr.mxu0 0.0
      %2404 = vmatpush1.msra.mxu0 0.0
      %2405 = vmatprep.subr.mxu0 0.0
      %2406 = vmatpush1.msra.mxu0 0.0
      %2407 = vmatprep.subr.mxu0 0.0
      %2408 = vmatpush1.msra.mxu0 0.0
      %2409 = vmatprep.subr.mxu0 0.0
      %2410 = vmatpush1.msra.mxu0 0.0
      %2411 = vmatprep.subr.mxu0 0.0
      %2412 = vmatpush1.msra.mxu0 0.0
      %2413 = vmatprep.subr.mxu0 0.0
      %2414 = vmatpush1.msra.mxu0 0.0
      %2415 = vmatprep.subr.mxu0 0.0
      %2416 = vmatpush1.msra.mxu0 0.0
      %2417 = vmatprep.subr.mxu0 0.0
      %2418 = vmatpush1.msra.mxu0 0.0
      %2419 = vmatprep.subr.mxu0 0.0
      %2420 = vmatpush1.msra.mxu0 0.0
      %2421 = vmatprep.subr.mxu0 0.0
      %2422 = vmatpush1.msra.mxu0 %v2390
      %2423 = vmatprep.subr.mxu0 0.0
      %2424 = vmatpush1.msra.mxu0 %v2385
      %2425 = vmatprep.subr.mxu0 0.0
      %2426 = vmatpush1.msra.mxu0 %v2380
      %2427 = vmatprep.subr.mxu0 0.0
      %2428 = vmatpush1.msra.mxu0 %v2375
      %2429 = vmatprep.subr.mxu0 0.0
      %2430 = vmatpush2.msra.mxu0 0.0
      %2431 = vmatprep.subr.mxu0 0.0
      %2432 = vmatpush2.msra.mxu0 0.0
      %2433 = vmatprep.subr.mxu0 0.0
      %2434 = vmatpush2.msra.mxu0 0.0
      %2435 = vmatprep.subr.mxu0 0.0
      %2436 = vmatpush2.msra.mxu0 0.0
      %2437 = vmatprep.subr.mxu0 0.0
      %2438 = vmatpush2.msra.mxu0 0.0
      %2439 = vmatprep.subr.mxu0 0.0
      %2440 = vmatpush2.msra.mxu0 0.0
      %2441 = vmatprep.subr.mxu0 0.0
      %2442 = vmatpush2.msra.mxu0 0.0
      %2443 = vmatprep.subr.mxu0 0.0
      %2444 = vmatpush2.msra.mxu0 0.0
      %2445 = vmatprep.subr.mxu0 0.0
      %2446 = vmatpush2.msra.mxu0 0.0
      %2447 = vmatprep.subr.mxu0 0.0
      %2448 = vmatpush2.msra.mxu0 0.0
      %2449 = vmatprep.subr.mxu0 0.0
      %2450 = vmatpush2.msra.mxu0 0.0
      %2451 = vmatprep.subr.mxu0 0.0
      %2452 = vmatpush2.msra.mxu0 0.0
      %2453 = vmatprep.subr.mxu0 0.0
      %2454 = vmatpush2.msra.mxu0 0.0
      %2455 = vmatprep.subr.mxu0 0.0
      %2456 = vmatpush2.msra.mxu0 0.0
      %2457 = vmatprep.subr.mxu0 0.0
      %2458 = vmatpush2.msra.mxu0 0.0
      %2459 = vmatprep.subr.mxu0 0.0
      %2460 = vmatpush2.msra.mxu0 0.0
      %2461 = vmatprep.mubr.f32.mxu0 0.0
      %2462 = vmatmul.mubr.f32.gmra.mxu0 %v2395
      %v2463 = vpop.f32.mrf.mxu0
      %v2464 = vadd.f32 0.0, %v2463
      %v2465 = vpop.f32.mrf.mxu0
      %2466 = vdwg.mxu0
      %v2467 = vmul.f32 %v2464, %v2464
      %2469 = vrot.lane.b32.xlu0 %v2467, 4
      %v2470 = vpop.permute.xlu0 %2469
      %v2472 = vsub.f32 %v2464, %v2470
      %v2473 = vadd.f32 %v2472, 1e-05
      %v2474 = vrsqrt.pop %v2473
      %v2475 = vld [vmem:[%s8] sm:$0xf]
      %2477 = vrot.lane.b32.xlu0 %v2474, 124
      %v2478 = vpop.permute.xlu0 %2477
      %vm2479 = vcmask 31744
      %v2480 = vsel %vm2479, %v2478, 0
      %vm2482 = vcmask 1043456
      %v2484 = vsel %vm2482, %v2475, 0
      %2486 = vmatprep.subr.mxu0 0.0
      %2487 = vmatpush1.msra.mxu0 0.0
      %2488 = vmatprep.subr.mxu0 0.0
      %2489 = vmatpush1.msra.mxu0 0.0
      %2490 = vmatprep.subr.mxu0 0.0
      %2491 = vmatpush1.msra.mxu0 0.0
      %2492 = vmatprep.subr.mxu0 0.0
      %2493 = vmatpush1.msra.mxu0 0.0
      %2494 = vmatprep.subr.mxu0 0.0
      %2495 = vmatpush1.msra.mxu0 0.0
      %2496 = vmatprep.subr.mxu0 0.0
      %2497 = vmatpush1.msra.mxu0 0.0
      %2498 = vmatprep.subr.mxu0 0.0
      %2499 = vmatpush1.msra.mxu0 0.0
      %2500 = vmatprep.subr.mxu0 0.0
      %2501 = vmatpush1.msra.mxu0 0.0
      %2502 = vmatprep.subr.mxu0 0.0
      %2503 = vmatpush1.msra.mxu0 0.0
      %2504 = vmatprep.subr.mxu0 0.0
      %2505 = vmatpush1.msra.mxu0 0.0
      %2506 = vmatprep.subr.mxu0 0.0
      %2507 = vmatpush1.msra.mxu0 0.0
      %2508 = vmatprep.subr.mxu0 0.0
      %2509 = vmatpush1.msra.mxu0 0.0
      %2510 = vmatprep.subr.mxu0 0.0
      %2511 = vmatpush1.msra.mxu0 0.0
      %2512 = vmatprep.subr.mxu0 0.0
      %2513 = vmatpush1.msra.mxu0 0.0
      %2514 = vmatprep.subr.mxu0 0.0
      %2515 = vmatpush1.msra.mxu0 0.0
      %2516 = vmatprep.subr.mxu0 0.0
      %2517 = vmatpush1.msra.mxu0 %v2484
      %2518 = vmatprep.subr.mxu0 0.0
      %2519 = vmatpush2.msra.mxu0 0.0
      %2520 = vmatprep.subr.mxu0 0.0
      %2521 = vmatpush2.msra.mxu0 0.0
      %2522 = vmatprep.subr.mxu0 0.0
      %2523 = vmatpush2.msra.mxu0 0.0
      %2524 = vmatprep.subr.mxu0 0.0
      %2525 = vmatpush2.msra.mxu0 0.0
      %2526 = vmatprep.subr.mxu0 0.0
      %2527 = vmatpush2.msra.mxu0 0.0
      %2528 = vmatprep.subr.mxu0 0.0
      %2529 = vmatpush2.msra.mxu0 0.0
      %2530 = vmatprep.subr.mxu0 0.0
      %2531 = vmatpush2.msra.mxu0 0.0
      %2532 = vmatprep.subr.mxu0 0.0
      %2533 = vmatpush2.msra.mxu0 0.0
      %2534 = vmatprep.subr.mxu0 0.0
      %2535 = vmatpush2.msra.mxu0 0.0
      %2536 = vmatprep.subr.mxu0 0.0
      %2537 = vmatpush2.msra.mxu0 0.0
      %2538 = vmatprep.subr.mxu0 0.0
      %2539 = vmatpush2.msra.mxu0 0.0
      %2540 = vmatprep.subr.mxu0 0.0
      %2541 = vmatpush2.msra.mxu0 0.0
      %2542 = vmatprep.subr.mxu0 0.0
      %2543 = vmatpush2.msra.mxu0 0.0
      %2544 = vmatprep.subr.mxu0 0.0
      %2545 = vmatpush2.msra.mxu0 0.0
      %2546 = vmatprep.subr.mxu0 0.0
      %2547 = vmatpush2.msra.mxu0 0.0
      %2548 = vmatprep.subr.mxu0 0.0
      %2549 = vmatpush2.msra.mxu0 0.0
      %2550 = vmatprep.mubr.f32.mxu0 0.0
      %2551 = vmatmul.mubr.f32.gmra.mxu0 %v2480
      %v2552 = vpop.f32.mrf.mxu0
      %v2553 = vadd.f32 0.0, %v2552
      %v2554 = vpop.f32.mrf.mxu0
      %2555 = vdwg.mxu0
      %v2556 = vlaneseq
      %v2557 = vshrl.u32 %v2556, 7
      %v2558 = vsub.s32 1, %v2557
      %v2559 = vrot.slane %v2263, %v2558
      %v2560 = vmul.f32 %v2553, %v2559
      %v2562 = vsel %vm2479, %v2464, 0
      %2564 = vmatprep.subr.mxu0 0.0
      %2565 = vmatpush1.msra.mxu0 0.0
      %2566 = vmatprep.subr.mxu0 0.0
      %2567 = vmatpush1.msra.mxu0 0.0
      %2568 = vmatprep.subr.mxu0 0.0
      %2569 = vmatpush1.msra.mxu0 0.0
      %2570 = vmatprep.subr.mxu0 0.0
      %2571 = vmatpush1.msra.mxu0 0.0
      %2572 = vmatprep.subr.mxu0 0.0
      %2573 = vmatpush1.msra.mxu0 0.0
      %2574 = vmatprep.subr.mxu0 0.0
      %2575 = vmatpush1.msra.mxu0 0.0
      %2576 = vmatprep.subr.mxu0 0.0
      %2577 = vmatpush1.msra.mxu0 0.0
      %2578 = vmatprep.subr.mxu0 0.0
      %2579 = vmatpush1.msra.mxu0 0.0
      %2580 = vmatprep.subr.mxu0 0.0
      %2581 = vmatpush1.msra.mxu0 0.0
      %2582 = vmatprep.subr.mxu0 0.0
      %2583 = vmatpush1.msra.mxu0 0.0
      %2584 = vmatprep.subr.mxu0 0.0
      %2585 = vmatpush1.msra.mxu0 0.0
      %2586 = vmatprep.subr.mxu0 0.0
      %2587 = vmatpush1.msra.mxu0 0.0
      %2588 = vmatprep.subr.mxu0 0.0
      %2589 = vmatpush1.msra.mxu0 0.0
      %2590 = vmatprep.subr.mxu0 0.0
      %2591 = vmatpush1.msra.mxu0 0.0
      %2592 = vmatprep.subr.mxu0 0.0
      %2593 = vmatpush1.msra.mxu0 0.0
      %2594 = vmatprep.subr.mxu0 0.0
      %2595 = vmatpush1.msra.mxu0 %v2484
      %2596 = vmatprep.subr.mxu0 0.0
      %2597 = vmatpush2.msra.mxu0 0.0
      %2598 = vmatprep.subr.mxu0 0.0
      %2599 = vmatpush2.msra.mxu0 0.0
      %2600 = vmatprep.subr.mxu0 0.0
      %2601 = vmatpush2.msra.mxu0 0.0
      %2602 = vmatprep.subr.mxu0 0.0
      %2603 = vmatpush2.msra.mxu0 0.0
      %2604 = vmatprep.subr.mxu0 0.0
      %2605 = vmatpush2.msra.mxu0 0.0
      %2606 = vmatprep.subr.mxu0 0.0
      %2607 = vmatpush2.msra.mxu0 0.0
      %2608 = vmatprep.subr.mxu0 0.0
      %2609 = vmatpush2.msra.mxu0 0.0
      %2610 = vmatprep.subr.mxu0 0.0
      %2611 = vmatpush2.msra.mxu0 0.0
      %2612 = vmatprep.subr.mxu0 0.0
      %2613 = vmatpush2.msra.mxu0 0.0
      %2614 = vmatprep.subr.mxu0 0.0
      %2615 = vmatpush2.msra.mxu0 0.0
      %2616 = vmatprep.subr.mxu0 0.0
      %2617 = vmatpush2.msra.mxu0 0.0
      %2618 = vmatprep.subr.mxu0 0.0
      %2619 = vmatpush2.msra.mxu0 0.0
      %2620 = vmatprep.subr.mxu0 0.0
      %2621 = vmatpush2.msra.mxu0 0.0
      %2622 = vmatprep.subr.mxu0 0.0
      %2623 = vmatpush2.msra.mxu0 0.0
      %2624 = vmatprep.subr.mxu0 0.0
      %2625 = vmatpush2.msra.mxu0 0.0
      %2626 = vmatprep.subr.mxu0 0.0
      %2627 = vmatpush2.msra.mxu0 0.0
      %2628 = vmatprep.mubr.f32.mxu0 0.0
      %2629 = vmatmul.mubr.f32.gmra.mxu0 %v2562
      %v2630 = vpop.f32.mrf.mxu0
      %v2631 = vadd.f32 0.0, %v2630
      %v2632 = vpop.f32.mrf.mxu0
      %2633 = vdwg.mxu0
      %v2634 = vmul.f32 %v2631, %v2560
      %v2635 = vlaneseq
      %v2636 = vshrl.u32 %v2635, 7
      %v2637 = vsub.s32 2, %v2636
      %v2638 = vrot.slane %v2263, %v2637
      %v2639 = vsub.f32 %v2638, %v2634
      %v2640 = vld [vmem:[%s10] sm:$0xff]
      %v2641 = vld [vmem:[%s10 + $0x8] sm:$0xff]
      %v2642 = vld [vmem:[%s10 + $0x10] sm:$0xff]
      %v2643 = vld [vmem:[%s10 + $0x18] sm:$0xff]
      %vm2644 = vcmask 15360
      %v2646 = vsel %vm2644, %v2640, 0
      %v2649 = vsel %vm2644, %v2641, 0
      %v2652 = vsel %vm2644, %v2642, 0
      %v2655 = vsel %vm2644, %v2643, 0
      %vm2657 = vcmask 1041408
      %v2659 = vsel %vm2657, %v2560, 0
      %2661 = vmatprep.subr.mxu0 0.0
      %2662 = vmatpush1.msra.mxu0 0.0
      %2663 = vmatprep.subr.mxu0 0.0
      %2664 = vmatpush1.msra.mxu0 0.0
      %2665 = vmatprep.subr.mxu0 0.0
      %2666 = vmatpush1.msra.mxu0 0.0
      %2667 = vmatprep.subr.mxu0 0.0
      %2668 = vmatpush1.msra.mxu0 0.0
      %2669 = vmatprep.subr.mxu0 0.0
      %2670 = vmatpush1.msra.mxu0 0.0
      %2671 = vmatprep.subr.mxu0 0.0
      %2672 = vmatpush1.msra.mxu0 0.0
      %2673 = vmatprep.subr.mxu0 0.0
      %2674 = vmatpush1.msra.mxu0 0.0
      %2675 = vmatprep.subr.mxu0 0.0
      %2676 = vmatpush1.msra.mxu0 0.0
      %2677 = vmatprep.subr.mxu0 0.0
      %2678 = vmatpush1.msra.mxu0 0.0
      %2679 = vmatprep.subr.mxu0 0.0
      %2680 = vmatpush1.msra.mxu0 0.0
      %2681 = vmatprep.subr.mxu0 0.0
      %2682 = vmatpush1.msra.mxu0 0.0
      %2683 = vmatprep.subr.mxu0 0.0
      %2684 = vmatpush1.msra.mxu0 0.0
      %2685 = vmatprep.subr.mxu0 0.0
      %2686 = vmatpush1.msra.mxu0 0.0
      %2687 = vmatprep.subr.mxu0 0.0
      %2688 = vmatpush1.msra.mxu0 0.0
      %2689 = vmatprep.subr.mxu0 0.0
      %2690 = vmatpush1.msra.mxu0 0.0
      %2691 = vmatprep.subr.mxu0 0.0
      %2692 = vmatpush1.msra.mxu0 %v2659
      %2693 = vmatprep.subr.mxu0 0.0
      %2694 = vmatpush2.msra.mxu0 0.0
      %2695 = vmatprep.subr.mxu0 0.0
      %2696 = vmatpush2.msra.mxu0 0.0
      %2697 = vmatprep.subr.mxu0 0.0
      %2698 = vmatpush2.msra.mxu0 0.0
      %2699 = vmatprep.subr.mxu0 0.0
      %2700 = vmatpush2.msra.mxu0 0.0
      %2701 = vmatprep.subr.mxu0 0.0
      %2702 = vmatpush2.msra.mxu0 0.0
      %2703 = vmatprep.subr.mxu0 0.0
      %2704 = vmatpush2.msra.mxu0 0.0
      %2705 = vmatprep.subr.mxu0 0.0
      %2706 = vmatpush2.msra.mxu0 0.0
      %2707 = vmatprep.subr.mxu0 0.0
      %2708 = vmatpush2.msra.mxu0 0.0
      %2709 = vmatprep.subr.mxu0 0.0
      %2710 = vmatpush2.msra.mxu0 0.0
      %2711 = vmatprep.subr.mxu0 0.0
      %2712 = vmatpush2.msra.mxu0 0.0
      %2713 = vmatprep.subr.mxu0 0.0
      %2714 = vmatpush2.msra.mxu0 0.0
      %2715 = vmatprep.subr.mxu0 0.0
      %2716 = vmatpush2.msra.mxu0 0.0
      %2717 = vmatprep.subr.mxu0 0.0
      %2718 = vmatpush2.msra.mxu0 0.0
      %2719 = vmatprep.subr.mxu0 0.0
      %2720 = vmatpush2.msra.mxu0 0.0
      %2721 = vmatprep.subr.mxu0 0.0
      %2722 = vmatpush2.msra.mxu0 0.0
      %2723 = vmatprep.subr.mxu0 0.0
      %2724 = vmatpush2.msra.mxu0 0.0
      %2725 = vmatprep.mubr.f32.mxu0 0.0
      %2726 = vmatmul.mubr.f32.gmra.mxu0 %v2646
      %v2727 = vpop.f32.mrf.mxu0
      %v2728 = vadd.f32 0.0, %v2727
      %v2729 = vpop.f32.mrf.mxu0
      %2730 = vmatprep.mubr.f32.mxu0 0.0
      %2731 = vmatmul.mubr.f32.gmra.mxu0 %v2649
      %v2732 = vpop.f32.mrf.mxu0
      %v2733 = vadd.f32 0.0, %v2732
      %v2734 = vpop.f32.mrf.mxu0
      %2735 = vmatprep.mubr.f32.mxu0 0.0
      %2736 = vmatmul.mubr.f32.gmra.mxu0 %v2652
      %v2737 = vpop.f32.mrf.mxu0
      %v2738 = vadd.f32 0.0, %v2737
      %v2739 = vpop.f32.mrf.mxu0
      %2740 = vmatprep.mubr.f32.mxu0 0.0
      %2741 = vmatmul.mubr.f32.gmra.mxu0 %v2655
      %v2742 = vpop.f32.mrf.mxu0
      %v2743 = vadd.f32 0.0, %v2742
      %v2744 = vpop.f32.mrf.mxu0
      %2745 = vdwg.mxu0
      %v2747 = vsel %vm2657, %v2639, 0
      %2749 = vmatprep.subr.mxu0 0.0
      %2750 = vmatpush1.msra.mxu0 0.0
      %2751 = vmatprep.subr.mxu0 0.0
      %2752 = vmatpush1.msra.mxu0 0.0
      %2753 = vmatprep.subr.mxu0 0.0
      %2754 = vmatpush1.msra.mxu0 0.0
      %2755 = vmatprep.subr.mxu0 0.0
      %2756 = vmatpush1.msra.mxu0 0.0
      %2757 = vmatprep.subr.mxu0 0.0
      %2758 = vmatpush1.msra.mxu0 0.0
      %2759 = vmatprep.subr.mxu0 0.0
      %2760 = vmatpush1.msra.mxu0 0.0
      %2761 = vmatprep.subr.mxu0 0.0
      %2762 = vmatpush1.msra.mxu0 0.0
      %2763 = vmatprep.subr.mxu0 0.0
      %2764 = vmatpush1.msra.mxu0 0.0
      %2765 = vmatprep.subr.mxu0 0.0
      %2766 = vmatpush1.msra.mxu0 0.0
      %2767 = vmatprep.subr.mxu0 0.0
      %2768 = vmatpush1.msra.mxu0 0.0
      %2769 = vmatprep.subr.mxu0 0.0
      %2770 = vmatpush1.msra.mxu0 0.0
      %2771 = vmatprep.subr.mxu0 0.0
      %2772 = vmatpush1.msra.mxu0 0.0
      %2773 = vmatprep.subr.mxu0 0.0
      %2774 = vmatpush1.msra.mxu0 0.0
      %2775 = vmatprep.subr.mxu0 0.0
      %2776 = vmatpush1.msra.mxu0 0.0
      %2777 = vmatprep.subr.mxu0 0.0
      %2778 = vmatpush1.msra.mxu0 0.0
      %2779 = vmatprep.subr.mxu0 0.0
      %2780 = vmatpush1.msra.mxu0 %v2747
      %2781 = vmatprep.subr.mxu0 0.0
      %2782 = vmatpush2.msra.mxu0 0.0
      %2783 = vmatprep.subr.mxu0 0.0
      %2784 = vmatpush2.msra.mxu0 0.0
      %2785 = vmatprep.subr.mxu0 0.0
      %2786 = vmatpush2.msra.mxu0 0.0
      %2787 = vmatprep.subr.mxu0 0.0
      %2788 = vmatpush2.msra.mxu0 0.0
      %2789 = vmatprep.subr.mxu0 0.0
      %2790 = vmatpush2.msra.mxu0 0.0
      %2791 = vmatprep.subr.mxu0 0.0
      %2792 = vmatpush2.msra.mxu0 0.0
      %2793 = vmatprep.subr.mxu0 0.0
      %2794 = vmatpush2.msra.mxu0 0.0
      %2795 = vmatprep.subr.mxu0 0.0
      %2796 = vmatpush2.msra.mxu0 0.0
      %2797 = vmatprep.subr.mxu0 0.0
      %2798 = vmatpush2.msra.mxu0 0.0
      %2799 = vmatprep.subr.mxu0 0.0
      %2800 = vmatpush2.msra.mxu0 0.0
      %2801 = vmatprep.subr.mxu0 0.0
      %2802 = vmatpush2.msra.mxu0 0.0
      %2803 = vmatprep.subr.mxu0 0.0
      %2804 = vmatpush2.msra.mxu0 0.0
      %2805 = vmatprep.subr.mxu0 0.0
      %2806 = vmatpush2.msra.mxu0 0.0
      %2807 = vmatprep.subr.mxu0 0.0
      %2808 = vmatpush2.msra.mxu0 0.0
      %2809 = vmatprep.subr.mxu0 0.0
      %2810 = vmatpush2.msra.mxu0 0.0
      %2811 = vmatprep.subr.mxu0 0.0
      %2812 = vmatpush2.msra.mxu0 0.0
      %2813 = vmatprep.mubr.f32.mxu0 0.0
      %2814 = vmatmul.mubr.f32.gmra.mxu0 %v2646
      %v2815 = vpop.f32.mrf.mxu0
      %v2816 = vadd.f32 0.0, %v2815
      %v2817 = vpop.f32.mrf.mxu0
      %2818 = vmatprep.mubr.f32.mxu0 0.0
      %2819 = vmatmul.mubr.f32.gmra.mxu0 %v2649
      %v2820 = vpop.f32.mrf.mxu0
      %v2821 = vadd.f32 0.0, %v2820
      %v2822 = vpop.f32.mrf.mxu0
      %2823 = vmatprep.mubr.f32.mxu0 0.0
      %2824 = vmatmul.mubr.f32.gmra.mxu0 %v2652
      %v2825 = vpop.f32.mrf.mxu0
      %v2826 = vadd.f32 0.0, %v2825
      %v2827 = vpop.f32.mrf.mxu0
      %2828 = vmatprep.mubr.f32.mxu0 0.0
      %2829 = vmatmul.mubr.f32.gmra.mxu0 %v2655
      %v2830 = vpop.f32.mrf.mxu0
      %v2831 = vadd.f32 0.0, %v2830
      %v2832 = vpop.f32.mrf.mxu0
      %2833 = vdwg.mxu0
      %v2834 = vmul.f32 %v2268, %v2728
      %v2835 = vmul.f32 %v2269, %v2733
      %v2836 = vmul.f32 %v2270, %v2738
      %v2837 = vmul.f32 %v2271, %v2743
      %v2838 = vadd.f32 %v2834, %v2816
      %v2839 = vadd.f32 %v2835, %v2821
      %v2840 = vadd.f32 %v2836, %v2826
      %v2841 = vadd.f32 %v2837, %v2831
      %v2842 = vand.u32 2147483647, %v2838
      %v2843 = vand.u32 2147483647, %v2839
      %v2844 = vand.u32 2147483647, %v2840
      %v2845 = vand.u32 2147483647, %v2841
      %v2846 = vmul.f32 %v2842, 0.70710677
      %v2847 = vmul.f32 %v2843, 0.70710677
      %v2848 = vmul.f32 %v2844, 0.70710677
      %v2849 = vmul.f32 %v2845, 0.70710677
      %v2850 = vmul.f32 %v2846, 0.3275911
      %v2851 = vmul.f32 %v2847, 0.3275911
      %v2852 = vmul.f32 %v2848, 0.3275911
      %v2853 = vmul.f32 %v2849, 0.3275911
      %v2854 = vadd.f32 %v2850, 1.0
      %v2855 = vadd.f32 %v2851, 1.0
      %v2856 = vadd.f32 %v2852, 1.0
      %v2857 = vadd.f32 %v2853, 1.0
      %v2858 = vrcp.pop %v2854
      %v2859 = vrcp.pop %v2855
      %v2860 = vrcp.pop %v2856
      %v2861 = vrcp.pop %v2857
      %v2862 = vmul.f32 %v2858, 1.0614054
      %v2863 = vmul.f32 %v2859, 1.0614054
      %v2864 = vmul.f32 %v2860, 1.0614054
      %v2865 = vmul.f32 %v2861, 1.0614054
      %v2866 = vadd.f32 %v2862, -1.4531521
      %v2867 = vadd.f32 %v2863, -1.4531521
      %v2868 = vadd.f32 %v2864, -1.4531521
      %v2869 = vadd.f32 %v2865, -1.4531521
      %v2870 = vmul.f32 %v2858, %v2866
      %v2871 = vmul.f32 %v2859, %v2867
      %v2872 = vmul.f32 %v2860, %v2868
      %v2873 = vmul.f32 %v2861, %v2869
      %v2874 = vadd.f32 %v2870, 1.4214138
      %v2875 = vadd.f32 %v2871, 1.4214138
      %v2876 = vadd.f32 %v2872, 1.4214138
      %v2877 = vadd.f32 %v2873, 1.4214138
      %v2878 = vmul.f32 %v2858, %v2874
      %v2879 = vmul.f32 %v2859, %v2875
      %v2880 = vmul.f32 %v2860, %v2876
      %v2881 = vmul.f32 %v2861, %v2877
      %v2882 = vadd.f32 %v2878, -0.28449672
      %v2883 = vadd.f32 %v2879, -0.28449672
      %v2884 = vadd.f32 %v2880, -0.28449672
      %v2885 = vadd.f32 %v2881, -0.28449672
      %v2886 = vmul.f32 %v2858, %v2882
      %v2887 = vmul.f32 %v2859, %v2883
      %v2888 = vmul.f32 %v2860, %v2884
      %v2889 = vmul.f32 %v2861, %v2885
      %v2890 = vadd.f32 %v2886, 0.2548296
      %v2891 = vadd.f32 %v2887, 0.2548296
      %v2892 = vadd.f32 %v2888, 0.2548296
      %v2893 = vadd.f32 %v2889, 0.2548296
      %v2894 = vmul.f32 %v2858, %v2890
      %v2895 = vmul.f32 %v2859, %v2891
      %v2896 = vmul.f32 %v2860, %v2892
      %v2897 = vmul.f32 %v2861, %v2893
      %v2898 = vsub.f32 0.0, %v2846
      %v2899 = vsub.f32 0.0, %v2847
      %v2900 = vsub.f32 0.0, %v2848
      %v2901 = vsub.f32 0.0, %v2849
      %v2902 = vmul.f32 %v2898, %v2846
      %v2903 = vmul.f32 %v2899, %v2847
      %v2904 = vmul.f32 %v2900, %v2848
      %v2905 = vmul.f32 %v2901, %v2849
      %v2906 = vmul.f32 %v2902, 1.442695
      %v2907 = vpow.pop %v2906
      %v2908 = vmul.f32 %v2903, 1.442695
      %v2909 = vpow.pop %v2908
      %v2910 = vmul.f32 %v2904, 1.442695
      %v2911 = vpow.pop %v2910
      %v2912 = vmul.f32 %v2905, 1.442695
      %v2913 = vpow.pop %v2912
      %v2914 = vmul.f32 %v2894, %v2907
      %v2915 = vmul.f32 %v2895, %v2909
      %v2916 = vmul.f32 %v2896, %v2911
      %v2917 = vmul.f32 %v2897, %v2913
      %v2918 = vsub.f32 1.0, %v2914
      %v2919 = vsub.f32 1.0, %v2915
      %v2920 = vsub.f32 1.0, %v2916
      %v2921 = vsub.f32 1.0, %v2917
      %vm2922 = vcmp.ge.f32.partialorder %v2838, 0.0
      %vm2923 = vcmp.ge.f32.partialorder %v2839, 0.0
      %vm2924 = vcmp.ge.f32.partialorder %v2840, 0.0
      %vm2925 = vcmp.ge.f32.partialorder %v2841, 0.0
      %v2926 = vsub.f32 0.0, %v2918
      %v2927 = vsub.f32 0.0, %v2919
      %v2928 = vsub.f32 0.0, %v2920
      %v2929 = vsub.f32 0.0, %v2921
      %v2930 = vsel %vm2922, %v2918, %v2926
      %v2931 = vsel %vm2923, %v2919, %v2927
      %v2932 = vsel %vm2924, %v2920, %v2928
      %v2933 = vsel %vm2925, %v2921, %v2929
      %v2934 = vmul.f32 %v2838, 0.5
      %v2935 = vmul.f32 %v2839, 0.5
      %v2936 = vmul.f32 %v2840, 0.5
      %v2937 = vmul.f32 %v2841, 0.5
      %v2938 = vadd.f32 %v2930, 1.0
      %v2939 = vadd.f32 %v2931, 1.0
      %v2940 = vadd.f32 %v2932, 1.0
      %v2941 = vadd.f32 %v2933, 1.0
      %v2942 = vmul.f32 %v2934, %v2938
      %v2943 = vmul.f32 %v2935, %v2939
      %v2944 = vmul.f32 %v2936, %v2940
      %v2945 = vmul.f32 %v2937, %v2941
      %v2946 = vpack.c.bf16 %v2943, %v2942
      %v2947 = vpack.c.bf16 %v2945, %v2944
      %s2948 = scalar_lea.vmem %s5, 384
      %v2949 = vld [vmem:[%s2948] sm:$0xf]
      %v2950 = vld [vmem:[%s2948 + $0x4] sm:$0xf]
      %v2951 = vld [vmem:[%s2948 + $0x8] sm:$0xf]
      %v2952 = vld [vmem:[%s2948 + $0xc] sm:$0xf]
      %v2953 = vld [vmem:[%s2948 + $0x10] sm:$0xf]
      %v2954 = vld [vmem:[%s2948 + $0x14] sm:$0xf]
      %v2955 = vld [vmem:[%s2948 + $0x18] sm:$0xf]
      %v2956 = vld [vmem:[%s2948 + $0x1c] sm:$0xf]
      %v2957 = vld [vmem:[%s2948 + $0x20] sm:$0xf]
      %v2958 = vld [vmem:[%s2948 + $0x24] sm:$0xf]
      %v2959 = vld [vmem:[%s2948 + $0x28] sm:$0xf]
      %v2960 = vld [vmem:[%s2948 + $0x2c] sm:$0xf]
      %v2961 = vld [vmem:[%s2948 + $0x30] sm:$0xf]
      %v2962 = vld [vmem:[%s2948 + $0x34] sm:$0xf]
      %v2963 = vld [vmem:[%s2948 + $0x38] sm:$0xf]
      %v2964 = vld [vmem:[%s2948 + $0x3c] sm:$0xf]
      %v2981 = vunpack.c.l.b16 %v2949
      %v2982 = vunpack.c.l.b16 %v2950
      %v2983 = vunpack.c.l.b16 %v2951
      %v2984 = vunpack.c.l.b16 %v2952
      %v2985 = vunpack.c.l.b16 %v2953
      %v2986 = vunpack.c.l.b16 %v2954
      %v2987 = vunpack.c.l.b16 %v2955
      %v2988 = vunpack.c.l.b16 %v2956
      %v2989 = vunpack.c.l.b16 %v2957
      %v2990 = vunpack.c.l.b16 %v2958
      %v2991 = vunpack.c.l.b16 %v2959
      %v2992 = vunpack.c.l.b16 %v2960
      %v2993 = vunpack.c.l.b16 %v2961
      %v2994 = vunpack.c.l.b16 %v2962
      %v2995 = vunpack.c.l.b16 %v2963
      %v2996 = vunpack.c.l.b16 %v2964
      %v2997 = vpack.c.b16 %v2982, %v2981
      %v2998 = vpack.c.b16 %v2984, %v2983
      %v2999 = vpack.c.b16 %v2986, %v2985
      %v3000 = vpack.c.b16 %v2988, %v2987
      %v3001 = vpack.c.b16 %v2990, %v2989
      %v3002 = vpack.c.b16 %v2992, %v2991
      %v3003 = vpack.c.b16 %v2994, %v2993
      %v3004 = vpack.c.b16 %v2996, %v2995
      %3013 = vmatprep.subr.bf16.mxu0 0
      %3014 = vmatpush1.bf16.msra.mxu0 %v3004
      %3015 = vmatprep.subr.bf16.mxu0 0
      %3016 = vmatpush1.bf16.msra.mxu0 %v3003
      %3017 = vmatprep.subr.bf16.mxu0 0
      %3018 = vmatpush1.bf16.msra.mxu0 %v3002
      %3019 = vmatprep.subr.bf16.mxu0 0
      %3020 = vmatpush1.bf16.msra.mxu0 %v3001
      %3021 = vmatprep.subr.bf16.mxu0 0
      %3022 = vmatpush1.bf16.msra.mxu0 %v3000
      %3023 = vmatprep.subr.bf16.mxu0 0
      %3024 = vmatpush1.bf16.msra.mxu0 %v2999
      %3025 = vmatprep.subr.bf16.mxu0 0
      %3026 = vmatpush1.bf16.msra.mxu0 %v2998
      %3027 = vmatprep.subr.bf16.mxu0 0
      %3028 = vmatpush1.bf16.msra.mxu0 %v2997
      %3029 = vmatprep.subr.bf16.mxu0 0
      %3030 = vmatpush2.bf16.msra.mxu0 0
      %3031 = vmatprep.subr.bf16.mxu0 0
      %3032 = vmatpush2.bf16.msra.mxu0 0
      %3033 = vmatprep.subr.bf16.mxu0 0
      %3034 = vmatpush2.bf16.msra.mxu0 0
      %3035 = vmatprep.subr.bf16.mxu0 0
      %3036 = vmatpush2.bf16.msra.mxu0 0
      %3037 = vmatprep.subr.bf16.mxu0 0
      %3038 = vmatpush2.bf16.msra.mxu0 0
      %3039 = vmatprep.subr.bf16.mxu0 0
      %3040 = vmatpush2.bf16.msra.mxu0 0
      %3041 = vmatprep.subr.bf16.mxu0 0
      %3042 = vmatpush2.bf16.msra.mxu0 0
      %3043 = vmatprep.subr.bf16.mxu0 0
      %3044 = vmatpush2.bf16.msra.mxu0 0
      %3045 = vmatprep.mubr.bf16.mxu0 0
      %3046 = vmatmul.mubr.bf16.gmra.mxu0 %v2946
      %v3047 = vpop.f32.mrf.mxu0
      %v3048 = vadd.f32 0.0, %v3047
      %v3049 = vpop.f32.mrf.mxu0
      %v3050 = vpop.f32.mrf.mxu0
      %v3051 = vadd.f32 0.0, %v3050
      %v3052 = vpop.f32.mrf.mxu0
      %3053 = vmatprep.mubr.bf16.mxu0 0
      %3054 = vmatmul.mubr.bf16.gmra.mxu0 %v2947
      %v3055 = vpop.f32.mrf.mxu0
      %v3056 = vadd.f32 0.0, %v3055
      %v3057 = vpop.f32.mrf.mxu0
      %v3058 = vpop.f32.mrf.mxu0
      %v3059 = vadd.f32 0.0, %v3058
      %v3060 = vpop.f32.mrf.mxu0
      %3061 = vdwg.mxu0
      %s3062 = scalar_lea.vmem %s5, 448
      %v3063 = vld [vmem:[%s3062] sm:$0xf]
      %v3064 = vld [vmem:[%s3062 + $0x4] sm:$0xf]
      %v3065 = vld [vmem:[%s3062 + $0x8] sm:$0xf]
      %v3066 = vld [vmem:[%s3062 + $0xc] sm:$0xf]
      %v3067 = vld [vmem:[%s3062 + $0x10] sm:$0xf]
      %v3068 = vld [vmem:[%s3062 + $0x14] sm:$0xf]
      %v3069 = vld [vmem:[%s3062 + $0x18] sm:$0xf]
      %v3070 = vld [vmem:[%s3062 + $0x1c] sm:$0xf]
      %v3071 = vld [vmem:[%s3062 + $0x20] sm:$0xf]
      %v3072 = vld [vmem:[%s3062 + $0x24] sm:$0xf]
      %v3073 = vld [vmem:[%s3062 + $0x28] sm:$0xf]
      %v3074 = vld [vmem:[%s3062 + $0x2c] sm:$0xf]
      %v3075 = vld [vmem:[%s3062 + $0x30] sm:$0xf]
      %v3076 = vld [vmem:[%s3062 + $0x34] sm:$0xf]
      %v3077 = vld [vmem:[%s3062 + $0x38] sm:$0xf]
      %v3078 = vld [vmem:[%s3062 + $0x3c] sm:$0xf]
      %v3095 = vunpack.c.l.b16 %v3063
      %v3096 = vunpack.c.l.b16 %v3064
      %v3097 = vunpack.c.l.b16 %v3065
      %v3098 = vunpack.c.l.b16 %v3066
      %v3099 = vunpack.c.l.b16 %v3067
      %v3100 = vunpack.c.l.b16 %v3068
      %v3101 = vunpack.c.l.b16 %v3069
      %v3102 = vunpack.c.l.b16 %v3070
      %v3103 = vunpack.c.l.b16 %v3071
      %v3104 = vunpack.c.l.b16 %v3072
      %v3105 = vunpack.c.l.b16 %v3073
      %v3106 = vunpack.c.l.b16 %v3074
      %v3107 = vunpack.c.l.b16 %v3075
      %v3108 = vunpack.c.l.b16 %v3076
      %v3109 = vunpack.c.l.b16 %v3077
      %v3110 = vunpack.c.l.b16 %v3078
      %v3111 = vpack.c.b16 %v3096, %v3095
      %v3112 = vpack.c.b16 %v3098, %v3097
      %v3113 = vpack.c.b16 %v3100, %v3099
      %v3114 = vpack.c.b16 %v3102, %v3101
      %v3115 = vpack.c.b16 %v3104, %v3103
      %v3116 = vpack.c.b16 %v3106, %v3105
      %v3117 = vpack.c.b16 %v3108, %v3107
      %v3118 = vpack.c.b16 %v3110, %v3109
      %3127 = vmatprep.subr.bf16.mxu0 0
      %3128 = vmatpush1.bf16.msra.mxu0 %v3118
      %3129 = vmatprep.subr.bf16.mxu0 0
      %3130 = vmatpush1.bf16.msra.mxu0 %v3117
      %3131 = vmatprep.subr.bf16.mxu0 0
      %3132 = vmatpush1.bf16.msra.mxu0 %v3116
      %3133 = vmatprep.subr.bf16.mxu0 0
      %3134 = vmatpush1.bf16.msra.mxu0 %v3115
      %3135 = vmatprep.subr.bf16.mxu0 0
      %3136 = vmatpush1.bf16.msra.mxu0 %v3114
      %3137 = vmatprep.subr.bf16.mxu0 0
      %3138 = vmatpush1.bf16.msra.mxu0 %v3113
      %3139 = vmatprep.subr.bf16.mxu0 0
      %3140 = vmatpush1.bf16.msra.mxu0 %v3112
      %3141 = vmatprep.subr.bf16.mxu0 0
      %3142 = vmatpush1.bf16.msra.mxu0 %v3111
      %3143 = vmatprep.subr.bf16.mxu0 0
      %3144 = vmatpush2.bf16.msra.mxu0 0
      %3145 = vmatprep.subr.bf16.mxu0 0
      %3146 = vmatpush2.bf16.msra.mxu0 0
      %3147 = vmatprep.subr.bf16.mxu0 0
      %3148 = vmatpush2.bf16.msra.mxu0 0
      %3149 = vmatprep.subr.bf16.mxu0 0
      %3150 = vmatpush2.bf16.msra.mxu0 0
      %3151 = vmatprep.subr.bf16.mxu0 0
      %3152 = vmatpush2.bf16.msra.mxu0 0
      %3153 = vmatprep.subr.bf16.mxu0 0
      %3154 = vmatpush2.bf16.msra.mxu0 0
      %3155 = vmatprep.subr.bf16.mxu0 0
      %3156 = vmatpush2.bf16.msra.mxu0 0
      %3157 = vmatprep.subr.bf16.mxu0 0
      %3158 = vmatpush2.bf16.msra.mxu0 0
      %3159 = vmatprep.mubr.bf16.mxu0 0
      %3160 = vmatmul.mubr.bf16.gmra.mxu0 %v2946
      %v3161 = vpop.f32.mrf.mxu0
      %v3162 = vadd.f32 0.0, %v3161
      %v3163 = vpop.f32.mrf.mxu0
      %v3164 = vpop.f32.mrf.mxu0
      %v3165 = vadd.f32 0.0, %v3164
      %v3166 = vpop.f32.mrf.mxu0
      %3167 = vmatprep.mubr.bf16.mxu0 0
      %3168 = vmatmul.mubr.bf16.gmra.mxu0 %v2947
      %v3169 = vpop.f32.mrf.mxu0
      %v3170 = vadd.f32 0.0, %v3169
      %v3171 = vpop.f32.mrf.mxu0
      %v3172 = vpop.f32.mrf.mxu0
      %v3173 = vadd.f32 0.0, %v3172
      %v3174 = vpop.f32.mrf.mxu0
      %3175 = vdwg.mxu0
      %s3176 = scalar_lea.vmem %s5, 512
      %v3177 = vld [vmem:[%s3176] sm:$0xf]
      %v3178 = vld [vmem:[%s3176 + $0x4] sm:$0xf]
      %v3179 = vld [vmem:[%s3176 + $0x8] sm:$0xf]
      %v3180 = vld [vmem:[%s3176 + $0xc] sm:$0xf]
      %v3181 = vld [vmem:[%s3176 + $0x10] sm:$0xf]
      %v3182 = vld [vmem:[%s3176 + $0x14] sm:$0xf]
      %v3183 = vld [vmem:[%s3176 + $0x18] sm:$0xf]
      %v3184 = vld [vmem:[%s3176 + $0x1c] sm:$0xf]
      %v3185 = vld [vmem:[%s3176 + $0x20] sm:$0xf]
      %v3186 = vld [vmem:[%s3176 + $0x24] sm:$0xf]
      %v3187 = vld [vmem:[%s3176 + $0x28] sm:$0xf]
      %v3188 = vld [vmem:[%s3176 + $0x2c] sm:$0xf]
      %v3189 = vld [vmem:[%s3176 + $0x30] sm:$0xf]
      %v3190 = vld [vmem:[%s3176 + $0x34] sm:$0xf]
      %v3191 = vld [vmem:[%s3176 + $0x38] sm:$0xf]
      %v3192 = vld [vmem:[%s3176 + $0x3c] sm:$0xf]
      %v3209 = vunpack.c.l.b16 %v3177
      %v3210 = vunpack.c.l.b16 %v3178
      %v3211 = vunpack.c.l.b16 %v3179
      %v3212 = vunpack.c.l.b16 %v3180
      %v3213 = vunpack.c.l.b16 %v3181
      %v3214 = vunpack.c.l.b16 %v3182
      %v3215 = vunpack.c.l.b16 %v3183
      %v3216 = vunpack.c.l.b16 %v3184
      %v3217 = vunpack.c.l.b16 %v3185
      %v3218 = vunpack.c.l.b16 %v3186
      %v3219 = vunpack.c.l.b16 %v3187
      %v3220 = vunpack.c.l.b16 %v3188
      %v3221 = vunpack.c.l.b16 %v3189
      %v3222 = vunpack.c.l.b16 %v3190
      %v3223 = vunpack.c.l.b16 %v3191
      %v3224 = vunpack.c.l.b16 %v3192
      %v3225 = vpack.c.b16 %v3210, %v3209
      %v3226 = vpack.c.b16 %v3212, %v3211
      %v3227 = vpack.c.b16 %v3214, %v3213
      %v3228 = vpack.c.b16 %v3216, %v3215
      %v3229 = vpack.c.b16 %v3218, %v3217
      %v3230 = vpack.c.b16 %v3220, %v3219
      %v3231 = vpack.c.b16 %v3222, %v3221
      %v3232 = vpack.c.b16 %v3224, %v3223
      %3241 = vmatprep.subr.bf16.mxu0 0
      %3242 = vmatpush1.bf16.msra.mxu0 %v3232
      %3243 = vmatprep.subr.bf16.mxu0 0
      %3244 = vmatpush1.bf16.msra.mxu0 %v3231
      %3245 = vmatprep.subr.bf16.mxu0 0
      %3246 = vmatpush1.bf16.msra.mxu0 %v3230
      %3247 = vmatprep.subr.bf16.mxu0 0
      %3248 = vmatpush1.bf16.msra.mxu0 %v3229
      %3249 = vmatprep.subr.bf16.mxu0 0
      %3250 = vmatpush1.bf16.msra.mxu0 %v3228
      %3251 = vmatprep.subr.bf16.mxu0 0
      %3252 = vmatpush1.bf16.msra.mxu0 %v3227
      %3253 = vmatprep.subr.bf16.mxu0 0
      %3254 = vmatpush1.bf16.msra.mxu0 %v3226
      %3255 = vmatprep.subr.bf16.mxu0 0
      %3256 = vmatpush1.bf16.msra.mxu0 %v3225
      %3257 = vmatprep.subr.bf16.mxu0 0
      %3258 = vmatpush2.bf16.msra.mxu0 0
      %3259 = vmatprep.subr.bf16.mxu0 0
      %3260 = vmatpush2.bf16.msra.mxu0 0
      %3261 = vmatprep.subr.bf16.mxu0 0
      %3262 = vmatpush2.bf16.msra.mxu0 0
      %3263 = vmatprep.subr.bf16.mxu0 0
      %3264 = vmatpush2.bf16.msra.mxu0 0
      %3265 = vmatprep.subr.bf16.mxu0 0
      %3266 = vmatpush2.bf16.msra.mxu0 0
      %3267 = vmatprep.subr.bf16.mxu0 0
      %3268 = vmatpush2.bf16.msra.mxu0 0
      %3269 = vmatprep.subr.bf16.mxu0 0
      %3270 = vmatpush2.bf16.msra.mxu0 0
      %3271 = vmatprep.subr.bf16.mxu0 0
      %3272 = vmatpush2.bf16.msra.mxu0 0
      %3273 = vmatprep.mubr.bf16.mxu0 0
      %3274 = vmatmul.mubr.bf16.gmra.mxu0 %v2946
      %v3275 = vpop.f32.mrf.mxu0
      %v3276 = vadd.f32 0.0, %v3275
      %v3277 = vpop.f32.mrf.mxu0
      %v3278 = vpop.f32.mrf.mxu0
      %v3279 = vadd.f32 0.0, %v3278
      %v3280 = vpop.f32.mrf.mxu0
      %3281 = vmatprep.mubr.bf16.mxu0 0
      %3282 = vmatmul.mubr.bf16.gmra.mxu0 %v2947
      %v3283 = vpop.f32.mrf.mxu0
      %v3284 = vadd.f32 0.0, %v3283
      %v3285 = vpop.f32.mrf.mxu0
      %v3286 = vpop.f32.mrf.mxu0
      %v3287 = vadd.f32 0.0, %v3286
      %v3288 = vpop.f32.mrf.mxu0
      %3289 = vdwg.mxu0
      %3290 = vmatprep.subr.mxu0 0.0
      %3291 = vmatpush1.msra.mxu0 0.0
      %3292 = vmatprep.subr.mxu0 0.0
      %3293 = vmatpush1.msra.mxu0 0.0
      %3294 = vmatprep.subr.mxu0 0.0
      %3295 = vmatpush1.msra.mxu0 0.0
      %3296 = vmatprep.subr.mxu0 0.0
      %3297 = vmatpush1.msra.mxu0 0.0
      %3298 = vmatprep.subr.mxu0 0.0
      %3299 = vmatpush1.msra.mxu0 0.0
      %3300 = vmatprep.subr.mxu0 0.0
      %3301 = vmatpush1.msra.mxu0 0.0
      %3302 = vmatprep.subr.mxu0 0.0
      %3303 = vmatpush1.msra.mxu0 0.0
      %3304 = vmatprep.subr.mxu0 0.0
      %3305 = vmatpush1.msra.mxu0 0.0
      %3306 = vmatprep.subr.mxu0 0.0
      %3307 = vmatpush1.msra.mxu0 0.0
      %3308 = vmatprep.subr.mxu0 0.0
      %3309 = vmatpush1.msra.mxu0 0.0
      %3310 = vmatprep.subr.mxu0 0.0
      %3311 = vmatpush1.msra.mxu0 0.0
      %3312 = vmatprep.subr.mxu0 0.0
      %3313 = vmatpush1.msra.mxu0 0.0
      %3314 = vmatprep.subr.mxu0 0.0
      %3315 = vmatpush1.msra.mxu0 %v3059
      %3316 = vmatprep.subr.mxu0 0.0
      %3317 = vmatpush1.msra.mxu0 %v3056
      %3318 = vmatprep.subr.mxu0 0.0
      %3319 = vmatpush1.msra.mxu0 %v3051
      %3320 = vmatprep.subr.mxu0 0.0
      %3321 = vmatpush1.msra.mxu0 %v3048
      %3322 = vmatprep.subr.mxu0 0.0
      %3323 = vmatpush2.msra.mxu0 0.0
      %3324 = vmatprep.subr.mxu0 0.0
      %3325 = vmatpush2.msra.mxu0 0.0
      %3326 = vmatprep.subr.mxu0 0.0
      %3327 = vmatpush2.msra.mxu0 0.0
      %3328 = vmatprep.subr.mxu0 0.0
      %3329 = vmatpush2.msra.mxu0 0.0
      %3330 = vmatprep.subr.mxu0 0.0
      %3331 = vmatpush2.msra.mxu0 0.0
      %3332 = vmatprep.subr.mxu0 0.0
      %3333 = vmatpush2.msra.mxu0 0.0
      %3334 = vmatprep.subr.mxu0 0.0
      %3335 = vmatpush2.msra.mxu0 0.0
      %3336 = vmatprep.subr.mxu0 0.0
      %3337 = vmatpush2.msra.mxu0 0.0
      %3338 = vmatprep.subr.mxu0 0.0
      %3339 = vmatpush2.msra.mxu0 0.0
      %3340 = vmatprep.subr.mxu0 0.0
      %3341 = vmatpush2.msra.mxu0 0.0
      %3342 = vmatprep.subr.mxu0 0.0
      %3343 = vmatpush2.msra.mxu0 0.0
      %3344 = vmatprep.subr.mxu0 0.0
      %3345 = vmatpush2.msra.mxu0 0.0
      %3346 = vmatprep.subr.mxu0 0.0
      %3347 = vmatpush2.msra.mxu0 0.0
      %3348 = vmatprep.subr.mxu0 0.0
      %3349 = vmatpush2.msra.mxu0 0.0
      %3350 = vmatprep.subr.mxu0 0.0
      %3351 = vmatpush2.msra.mxu0 0.0
      %3352 = vmatprep.subr.mxu0 0.0
      %3353 = vmatpush2.msra.mxu0 0.0
      %3354 = vmatprep.mubr.f32.mxu0 0.0
      %3355 = vmatmul.mubr.f32.gmra.mxu0 %v2066
      %v3356 = vpop.f32.mrf.mxu0
      %v3357 = vadd.f32 %v3162, %v3356
      %v3358 = vpop.f32.mrf.mxu0
      %3359 = vmatprep.mubr.f32.mxu0 0.0
      %3360 = vmatmul.mubr.f32.gmra.mxu0 %v2069
      %v3361 = vpop.f32.mrf.mxu0
      %v3362 = vadd.f32 %v3165, %v3361
      %v3363 = vpop.f32.mrf.mxu0
      %3364 = vmatprep.mubr.f32.mxu0 0.0
      %3365 = vmatmul.mubr.f32.gmra.mxu0 %v2072
      %v3366 = vpop.f32.mrf.mxu0
      %v3367 = vadd.f32 %v3170, %v3366
      %v3368 = vpop.f32.mrf.mxu0
      %3369 = vmatprep.mubr.f32.mxu0 0.0
      %3370 = vmatmul.mubr.f32.gmra.mxu0 %v2075
      %v3371 = vpop.f32.mrf.mxu0
      %v3372 = vadd.f32 %v3173, %v3371
      %v3373 = vpop.f32.mrf.mxu0
      %3374 = vdwg.mxu0
      %3375 = vmatprep.subr.mxu0 0.0
      %3376 = vmatpush1.msra.mxu0 0.0
      %3377 = vmatprep.subr.mxu0 0.0
      %3378 = vmatpush1.msra.mxu0 0.0
      %3379 = vmatprep.subr.mxu0 0.0
      %3380 = vmatpush1.msra.mxu0 0.0
      %3381 = vmatprep.subr.mxu0 0.0
      %3382 = vmatpush1.msra.mxu0 0.0
      %3383 = vmatprep.subr.mxu0 0.0
      %3384 = vmatpush1.msra.mxu0 0.0
      %3385 = vmatprep.subr.mxu0 0.0
      %3386 = vmatpush1.msra.mxu0 0.0
      %3387 = vmatprep.subr.mxu0 0.0
      %3388 = vmatpush1.msra.mxu0 0.0
      %3389 = vmatprep.subr.mxu0 0.0
      %3390 = vmatpush1.msra.mxu0 0.0
      %3391 = vmatprep.subr.mxu0 0.0
      %3392 = vmatpush1.msra.mxu0 0.0
      %3393 = vmatprep.subr.mxu0 0.0
      %3394 = vmatpush1.msra.mxu0 0.0
      %3395 = vmatprep.subr.mxu0 0.0
      %3396 = vmatpush1.msra.mxu0 0.0
      %3397 = vmatprep.subr.mxu0 0.0
      %3398 = vmatpush1.msra.mxu0 0.0
      %3399 = vmatprep.subr.mxu0 0.0
      %3400 = vmatpush1.msra.mxu0 %v3287
      %3401 = vmatprep.subr.mxu0 0.0
      %3402 = vmatpush1.msra.mxu0 %v3284
      %3403 = vmatprep.subr.mxu0 0.0
      %3404 = vmatpush1.msra.mxu0 %v3279
      %3405 = vmatprep.subr.mxu0 0.0
      %3406 = vmatpush1.msra.mxu0 %v3276
      %3407 = vmatprep.subr.mxu0 0.0
      %3408 = vmatpush2.msra.mxu0 0.0
      %3409 = vmatprep.subr.mxu0 0.0
      %3410 = vmatpush2.msra.mxu0 0.0
      %3411 = vmatprep.subr.mxu0 0.0
      %3412 = vmatpush2.msra.mxu0 0.0
      %3413 = vmatprep.subr.mxu0 0.0
      %3414 = vmatpush2.msra.mxu0 0.0
      %3415 = vmatprep.subr.mxu0 0.0
      %3416 = vmatpush2.msra.mxu0 0.0
      %3417 = vmatprep.subr.mxu0 0.0
      %3418 = vmatpush2.msra.mxu0 0.0
      %3419 = vmatprep.subr.mxu0 0.0
      %3420 = vmatpush2.msra.mxu0 0.0
      %3421 = vmatprep.subr.mxu0 0.0
      %3422 = vmatpush2.msra.mxu0 0.0
      %3423 = vmatprep.subr.mxu0 0.0
      %3424 = vmatpush2.msra.mxu0 0.0
      %3425 = vmatprep.subr.mxu0 0.0
      %3426 = vmatpush2.msra.mxu0 0.0
      %3427 = vmatprep.subr.mxu0 0.0
      %3428 = vmatpush2.msra.mxu0 0.0
      %3429 = vmatprep.subr.mxu0 0.0
      %3430 = vmatpush2.msra.mxu0 0.0
      %3431 = vmatprep.subr.mxu0 0.0
      %3432 = vmatpush2.msra.mxu0 0.0
      %3433 = vmatprep.subr.mxu0 0.0
      %3434 = vmatpush2.msra.mxu0 0.0
      %3435 = vmatprep.subr.mxu0 0.0
      %3436 = vmatpush2.msra.mxu0 0.0
      %3437 = vmatprep.subr.mxu0 0.0
      %3438 = vmatpush2.msra.mxu0 0.0
      %3439 = vmatprep.mubr.f32.mxu0 0.0
      %3440 = vmatmul.mubr.f32.gmra.mxu0 %v2163
      %v3441 = vpop.f32.mrf.mxu0
      %v3442 = vadd.f32 0.0, %v3441
      %v3443 = vpop.f32.mrf.mxu0
      %3444 = vmatprep.mubr.f32.mxu0 0.0
      %3445 = vmatmul.mubr.f32.gmra.mxu0 %v2166
      %v3446 = vpop.f32.mrf.mxu0
      %v3447 = vadd.f32 0.0, %v3446
      %v3448 = vpop.f32.mrf.mxu0
      %3449 = vmatprep.mubr.f32.mxu0 0.0
      %3450 = vmatmul.mubr.f32.gmra.mxu0 %v2169
      %v3451 = vpop.f32.mrf.mxu0
      %v3452 = vadd.f32 0.0, %v3451
      %v3453 = vpop.f32.mrf.mxu0
      %3454 = vmatprep.mubr.f32.mxu0 0.0
      %3455 = vmatmul.mubr.f32.gmra.mxu0 %v2172
      %v3456 = vpop.f32.mrf.mxu0
      %v3457 = vadd.f32 0.0, %v3456
      %v3458 = vpop.f32.mrf.mxu0
      %3459 = vdwg.mxu0
      %v3460 = vadd.f32 %v3357, %v3442
      %v3461 = vadd.f32 %v3362, %v3447
      %v3462 = vadd.f32 %v3367, %v3452
      %v3463 = vadd.f32 %v3372, %v3457
      %s3464 = scalar_lea.vmem %s11, 4
      %v3465 = vld [vmem:[%s3464] sm:$0x7]
      %v3466 = vlaneseq
      %v3467 = vshrl.u32 %v3466, 7
      %v3468 = vsub.s32 0, %v3467
      %v3469 = vrot.slane %v3465, %v3468
      %v3470 = vadd.f32 %v3460, %v3469
      %v3471 = vadd.f32 %v3461, %v3469
      %v3472 = vadd.f32 %v3462, %v3469
      %v3473 = vadd.f32 %v3463, %v3469
      %v3474 = vmul.f32 %v3470, %v3470
      %v3475 = vmul.f32 %v3471, %v3471
      %v3476 = vmul.f32 %v3472, %v3472
      %v3477 = vmul.f32 %v3473, %v3473
      %3478 = vmatprep.subr.mxu0 0.0
      %3479 = vmatpush1.msra.mxu0 %v2291
      %3480 = vmatprep.subr.mxu0 0.0
      %3481 = vmatpush1.msra.mxu0 %v2290
      %3482 = vmatprep.subr.mxu0 0.0
      %3483 = vmatpush1.msra.mxu0 %v2289
      %3484 = vmatprep.subr.mxu0 0.0
      %3485 = vmatpush1.msra.mxu0 %v2288
      %3486 = vmatprep.subr.mxu0 0.0
      %3487 = vmatpush1.msra.mxu0 %v2287
      %3488 = vmatprep.subr.mxu0 0.0
      %3489 = vmatpush1.msra.mxu0 %v2286
      %3490 = vmatprep.subr.mxu0 0.0
      %3491 = vmatpush1.msra.mxu0 %v2285
      %3492 = vmatprep.subr.mxu0 0.0
      %3493 = vmatpush1.msra.mxu0 %v2284
      %3494 = vmatprep.subr.mxu0 0.0
      %3495 = vmatpush1.msra.mxu0 %v2283
      %3496 = vmatprep.subr.mxu0 0.0
      %3497 = vmatpush1.msra.mxu0 %v2282
      %3498 = vmatprep.subr.mxu0 0.0
      %3499 = vmatpush1.msra.mxu0 %v2281
      %3500 = vmatprep.subr.mxu0 0.0
      %3501 = vmatpush1.msra.mxu0 %v2280
      %3502 = vmatprep.subr.mxu0 0.0
      %3503 = vmatpush1.msra.mxu0 %v2279
      %3504 = vmatprep.subr.mxu0 0.0
      %3505 = vmatpush1.msra.mxu0 %v2278
      %3506 = vmatprep.subr.mxu0 0.0
      %3507 = vmatpush1.msra.mxu0 %v2277
      %3508 = vmatprep.subr.mxu0 0.0
      %3509 = vmatpush1.msra.mxu0 %v2276
      %3510 = vmatprep.subr.mxu0 0.0
      %3511 = vmatpush2.msra.mxu0 %v2307
      %3512 = vmatprep.subr.mxu0 0.0
      %3513 = vmatpush2.msra.mxu0 %v2306
      %3514 = vmatprep.subr.mxu0 0.0
      %3515 = vmatpush2.msra.mxu0 %v2305
      %3516 = vmatprep.subr.mxu0 0.0
      %3517 = vmatpush2.msra.mxu0 %v2304
      %3518 = vmatprep.subr.mxu0 0.0
      %3519 = vmatpush2.msra.mxu0 %v2303
      %3520 = vmatprep.subr.mxu0 0.0
      %3521 = vmatpush2.msra.mxu0 %v2302
      %3522 = vmatprep.subr.mxu0 0.0
      %3523 = vmatpush2.msra.mxu0 %v2301
      %3524 = vmatprep.subr.mxu0 0.0
      %3525 = vmatpush2.msra.mxu0 %v2300
      %3526 = vmatprep.subr.mxu0 0.0
      %3527 = vmatpush2.msra.mxu0 %v2299
      %3528 = vmatprep.subr.mxu0 0.0
      %3529 = vmatpush2.msra.mxu0 %v2298
      %3530 = vmatprep.subr.mxu0 0.0
      %3531 = vmatpush2.msra.mxu0 %v2297
      %3532 = vmatprep.subr.mxu0 0.0
      %3533 = vmatpush2.msra.mxu0 %v2296
      %3534 = vmatprep.subr.mxu0 0.0
      %3535 = vmatpush2.msra.mxu0 %v2295
      %3536 = vmatprep.subr.mxu0 0.0
      %3537 = vmatpush2.msra.mxu0 %v2294
      %3538 = vmatprep.subr.mxu0 0.0
      %3539 = vmatpush2.msra.mxu0 %v2293
      %3540 = vmatprep.subr.mxu0 0.0
      %3541 = vmatpush2.msra.mxu0 %v2292
      %3542 = vmatprep.mubr.f32.mxu0 %v3474
      %3543 = vmatmul.mubr.f32.gmra.mxu0 %v3470
      %v3544 = vpop.f32.mrf.mxu0
      %v3545 = vadd.f32 0.0, %v3544
      %v3546 = vpop.f32.mrf.mxu0
      %3547 = vmatprep.mubr.f32.mxu0 %v3475
      %3548 = vmatmul.mubr.f32.gmra.mxu0 %v3471
      %v3549 = vpop.f32.mrf.mxu0
      %v3550 = vadd.f32 0.0, %v3549
      %v3551 = vpop.f32.mrf.mxu0
      %3552 = vmatprep.mubr.f32.mxu0 %v3476
      %3553 = vmatmul.mubr.f32.gmra.mxu0 %v3472
      %v3554 = vpop.f32.mrf.mxu0
      %v3555 = vadd.f32 0.0, %v3554
      %v3556 = vpop.f32.mrf.mxu0
      %3557 = vmatprep.mubr.f32.mxu0 %v3477
      %3558 = vmatmul.mubr.f32.gmra.mxu0 %v3473
      %v3559 = vpop.f32.mrf.mxu0
      %v3560 = vadd.f32 0.0, %v3559
      %v3561 = vpop.f32.mrf.mxu0
      %3562 = vdwg.mxu0
      %3563 = vmatprep.subr.mxu0 0.0
      %3564 = vmatpush1.msra.mxu0 0.0
      %3565 = vmatprep.subr.mxu0 0.0
      %3566 = vmatpush1.msra.mxu0 0.0
      %3567 = vmatprep.subr.mxu0 0.0
      %3568 = vmatpush1.msra.mxu0 0.0
      %3569 = vmatprep.subr.mxu0 0.0
      %3570 = vmatpush1.msra.mxu0 0.0
      %3571 = vmatprep.subr.mxu0 0.0
      %3572 = vmatpush1.msra.mxu0 0.0
      %3573 = vmatprep.subr.mxu0 0.0
      %3574 = vmatpush1.msra.mxu0 0.0
      %3575 = vmatprep.subr.mxu0 0.0
      %3576 = vmatpush1.msra.mxu0 0.0
      %3577 = vmatprep.subr.mxu0 0.0
      %3578 = vmatpush1.msra.mxu0 0.0
      %3579 = vmatprep.subr.mxu0 0.0
      %3580 = vmatpush1.msra.mxu0 0.0
      %3581 = vmatprep.subr.mxu0 0.0
      %3582 = vmatpush1.msra.mxu0 0.0
      %3583 = vmatprep.subr.mxu0 0.0
      %3584 = vmatpush1.msra.mxu0 0.0
      %3585 = vmatprep.subr.mxu0 0.0
      %3586 = vmatpush1.msra.mxu0 0.0
      %3587 = vmatprep.subr.mxu0 0.0
      %3588 = vmatpush1.msra.mxu0 %v3560
      %3589 = vmatprep.subr.mxu0 0.0
      %3590 = vmatpush1.msra.mxu0 %v3555
      %3591 = vmatprep.subr.mxu0 0.0
      %3592 = vmatpush1.msra.mxu0 %v3550
      %3593 = vmatprep.subr.mxu0 0.0
      %3594 = vmatpush1.msra.mxu0 %v3545
      %3595 = vmatprep.subr.mxu0 0.0
      %3596 = vmatpush2.msra.mxu0 0.0
      %3597 = vmatprep.subr.mxu0 0.0
      %3598 = vmatpush2.msra.mxu0 0.0
      %3599 = vmatprep.subr.mxu0 0.0
      %3600 = vmatpush2.msra.mxu0 0.0
      %3601 = vmatprep.subr.mxu0 0.0
      %3602 = vmatpush2.msra.mxu0 0.0
      %3603 = vmatprep.subr.mxu0 0.0
      %3604 = vmatpush2.msra.mxu0 0.0
      %3605 = vmatprep.subr.mxu0 0.0
      %3606 = vmatpush2.msra.mxu0 0.0
      %3607 = vmatprep.subr.mxu0 0.0
      %3608 = vmatpush2.msra.mxu0 0.0
      %3609 = vmatprep.subr.mxu0 0.0
      %3610 = vmatpush2.msra.mxu0 0.0
      %3611 = vmatprep.subr.mxu0 0.0
      %3612 = vmatpush2.msra.mxu0 0.0
      %3613 = vmatprep.subr.mxu0 0.0
      %3614 = vmatpush2.msra.mxu0 0.0
      %3615 = vmatprep.subr.mxu0 0.0
      %3616 = vmatpush2.msra.mxu0 0.0
      %3617 = vmatprep.subr.mxu0 0.0
      %3618 = vmatpush2.msra.mxu0 0.0
      %3619 = vmatprep.subr.mxu0 0.0
      %3620 = vmatpush2.msra.mxu0 0.0
      %3621 = vmatprep.subr.mxu0 0.0
      %3622 = vmatpush2.msra.mxu0 0.0
      %3623 = vmatprep.subr.mxu0 0.0
      %3624 = vmatpush2.msra.mxu0 0.0
      %3625 = vmatprep.subr.mxu0 0.0
      %3626 = vmatpush2.msra.mxu0 0.0
      %3627 = vmatprep.mubr.f32.mxu0 0.0
      %3628 = vmatmul.mubr.f32.gmra.mxu0 %v2395
      %v3629 = vpop.f32.mrf.mxu0
      %v3630 = vadd.f32 0.0, %v3629
      %v3631 = vpop.f32.mrf.mxu0
      %3632 = vdwg.mxu0
      %v3633 = vmul.f32 %v3630, %v3630
      %3635 = vrot.lane.b32.xlu0 %v3633, 4
      %v3636 = vpop.permute.xlu0 %3635
      %v3638 = vsub.f32 %v3630, %v3636
      %v3639 = vadd.f32 %v3638, 1e-05
      %v3640 = vrsqrt.pop %v3639
      %3642 = vrot.lane.b32.xlu0 %v3640, 124
      %v3643 = vpop.permute.xlu0 %3642
      %v3644 = vsel %vm2479, %v3643, 0
      %3646 = vmatprep.subr.mxu0 0.0
      %3647 = vmatpush1.msra.mxu0 0.0
      %3648 = vmatprep.subr.mxu0 0.0
      %3649 = vmatpush1.msra.mxu0 0.0
      %3650 = vmatprep.subr.mxu0 0.0
      %3651 = vmatpush1.msra.mxu0 0.0
      %3652 = vmatprep.subr.mxu0 0.0
      %3653 = vmatpush1.msra.mxu0 0.0
      %3654 = vmatprep.subr.mxu0 0.0
      %3655 = vmatpush1.msra.mxu0 0.0
      %3656 = vmatprep.subr.mxu0 0.0
      %3657 = vmatpush1.msra.mxu0 0.0
      %3658 = vmatprep.subr.mxu0 0.0
      %3659 = vmatpush1.msra.mxu0 0.0
      %3660 = vmatprep.subr.mxu0 0.0
      %3661 = vmatpush1.msra.mxu0 0.0
      %3662 = vmatprep.subr.mxu0 0.0
      %3663 = vmatpush1.msra.mxu0 0.0
      %3664 = vmatprep.subr.mxu0 0.0
      %3665 = vmatpush1.msra.mxu0 0.0
      %3666 = vmatprep.subr.mxu0 0.0
      %3667 = vmatpush1.msra.mxu0 0.0
      %3668 = vmatprep.subr.mxu0 0.0
      %3669 = vmatpush1.msra.mxu0 0.0
      %3670 = vmatprep.subr.mxu0 0.0
      %3671 = vmatpush1.msra.mxu0 0.0
      %3672 = vmatprep.subr.mxu0 0.0
      %3673 = vmatpush1.msra.mxu0 0.0
      %3674 = vmatprep.subr.mxu0 0.0
      %3675 = vmatpush1.msra.mxu0 0.0
      %3676 = vmatprep.subr.mxu0 0.0
      %3677 = vmatpush1.msra.mxu0 %v2484
      %3678 = vmatprep.subr.mxu0 0.0
      %3679 = vmatpush2.msra.mxu0 0.0
      %3680 = vmatprep.subr.mxu0 0.0
      %3681 = vmatpush2.msra.mxu0 0.0
      %3682 = vmatprep.subr.mxu0 0.0
      %3683 = vmatpush2.msra.mxu0 0.0
      %3684 = vmatprep.subr.mxu0 0.0
      %3685 = vmatpush2.msra.mxu0 0.0
      %3686 = vmatprep.subr.mxu0 0.0
      %3687 = vmatpush2.msra.mxu0 0.0
      %3688 = vmatprep.subr.mxu0 0.0
      %3689 = vmatpush2.msra.mxu0 0.0
      %3690 = vmatprep.subr.mxu0 0.0
      %3691 = vmatpush2.msra.mxu0 0.0
      %3692 = vmatprep.subr.mxu0 0.0
      %3693 = vmatpush2.msra.mxu0 0.0
      %3694 = vmatprep.subr.mxu0 0.0
      %3695 = vmatpush2.msra.mxu0 0.0
      %3696 = vmatprep.subr.mxu0 0.0
      %3697 = vmatpush2.msra.mxu0 0.0
      %3698 = vmatprep.subr.mxu0 0.0
      %3699 = vmatpush2.msra.mxu0 0.0
      %3700 = vmatprep.subr.mxu0 0.0
      %3701 = vmatpush2.msra.mxu0 0.0
      %3702 = vmatprep.subr.mxu0 0.0
      %3703 = vmatpush2.msra.mxu0 0.0
      %3704 = vmatprep.subr.mxu0 0.0
      %3705 = vmatpush2.msra.mxu0 0.0
      %3706 = vmatprep.subr.mxu0 0.0
      %3707 = vmatpush2.msra.mxu0 0.0
      %3708 = vmatprep.subr.mxu0 0.0
      %3709 = vmatpush2.msra.mxu0 0.0
      %3710 = vmatprep.mubr.f32.mxu0 0.0
      %3711 = vmatmul.mubr.f32.gmra.mxu0 %v3644
      %v3712 = vpop.f32.mrf.mxu0
      %v3713 = vadd.f32 0.0, %v3712
      %v3714 = vpop.f32.mrf.mxu0
      %3715 = vdwg.mxu0
      %v3716 = vlaneseq
      %v3717 = vshrl.u32 %v3716, 7
      %v3718 = vsub.s32 1, %v3717
      %v3719 = vrot.slane %v3465, %v3718
      %v3720 = vmul.f32 %v3713, %v3719
      %v3722 = vsel %vm2479, %v3630, 0
      %3724 = vmatprep.subr.mxu0 0.0
      %3725 = vmatpush1.msra.mxu0 0.0
      %3726 = vmatprep.subr.mxu0 0.0
      %3727 = vmatpush1.msra.mxu0 0.0
      %3728 = vmatprep.subr.mxu0 0.0
      %3729 = vmatpush1.msra.mxu0 0.0
      %3730 = vmatprep.subr.mxu0 0.0
      %3731 = vmatpush1.msra.mxu0 0.0
      %3732 = vmatprep.subr.mxu0 0.0
      %3733 = vmatpush1.msra.mxu0 0.0
      %3734 = vmatprep.subr.mxu0 0.0
      %3735 = vmatpush1.msra.mxu0 0.0
      %3736 = vmatprep.subr.mxu0 0.0
      %3737 = vmatpush1.msra.mxu0 0.0
      %3738 = vmatprep.subr.mxu0 0.0
      %3739 = vmatpush1.msra.mxu0 0.0
      %3740 = vmatprep.subr.mxu0 0.0
      %3741 = vmatpush1.msra.mxu0 0.0
      %3742 = vmatprep.subr.mxu0 0.0
      %3743 = vmatpush1.msra.mxu0 0.0
      %3744 = vmatprep.subr.mxu0 0.0
      %3745 = vmatpush1.msra.mxu0 0.0
      %3746 = vmatprep.subr.mxu0 0.0
      %3747 = vmatpush1.msra.mxu0 0.0
      %3748 = vmatprep.subr.mxu0 0.0
      %3749 = vmatpush1.msra.mxu0 0.0
      %3750 = vmatprep.subr.mxu0 0.0
      %3751 = vmatpush1.msra.mxu0 0.0
      %3752 = vmatprep.subr.mxu0 0.0
      %3753 = vmatpush1.msra.mxu0 0.0
      %3754 = vmatprep.subr.mxu0 0.0
      %3755 = vmatpush1.msra.mxu0 %v2484
      %3756 = vmatprep.subr.mxu0 0.0
      %3757 = vmatpush2.msra.mxu0 0.0
      %3758 = vmatprep.subr.mxu0 0.0
      %3759 = vmatpush2.msra.mxu0 0.0
      %3760 = vmatprep.subr.mxu0 0.0
      %3761 = vmatpush2.msra.mxu0 0.0
      %3762 = vmatprep.subr.mxu0 0.0
      %3763 = vmatpush2.msra.mxu0 0.0
      %3764 = vmatprep.subr.mxu0 0.0
      %3765 = vmatpush2.msra.mxu0 0.0
      %3766 = vmatprep.subr.mxu0 0.0
      %3767 = vmatpush2.msra.mxu0 0.0
      %3768 = vmatprep.subr.mxu0 0.0
      %3769 = vmatpush2.msra.mxu0 0.0
      %3770 = vmatprep.subr.mxu0 0.0
      %3771 = vmatpush2.msra.mxu0 0.0
      %3772 = vmatprep.subr.mxu0 0.0
      %3773 = vmatpush2.msra.mxu0 0.0
      %3774 = vmatprep.subr.mxu0 0.0
      %3775 = vmatpush2.msra.mxu0 0.0
      %3776 = vmatprep.subr.mxu0 0.0
      %3777 = vmatpush2.msra.mxu0 0.0
      %3778 = vmatprep.subr.mxu0 0.0
      %3779 = vmatpush2.msra.mxu0 0.0
      %3780 = vmatprep.subr.mxu0 0.0
      %3781 = vmatpush2.msra.mxu0 0.0
      %3782 = vmatprep.subr.mxu0 0.0
      %3783 = vmatpush2.msra.mxu0 0.0
      %3784 = vmatprep.subr.mxu0 0.0
      %3785 = vmatpush2.msra.mxu0 0.0
      %3786 = vmatprep.subr.mxu0 0.0
      %3787 = vmatpush2.msra.mxu0 0.0
      %3788 = vmatprep.mubr.f32.mxu0 0.0
      %3789 = vmatmul.mubr.f32.gmra.mxu0 %v3722
      %v3790 = vpop.f32.mrf.mxu0
      %v3791 = vadd.f32 0.0, %v3790
      %v3792 = vpop.f32.mrf.mxu0
      %3793 = vdwg.mxu0
      %v3794 = vmul.f32 %v3791, %v3720
      %v3795 = vlaneseq
      %v3796 = vshrl.u32 %v3795, 7
      %v3797 = vsub.s32 2, %v3796
      %v3798 = vrot.slane %v3465, %v3797
      %v3799 = vsub.f32 %v3798, %v3794
      %v3801 = vsel %vm2657, %v3720, 0
      %3803 = vmatprep.subr.mxu0 0.0
      %3804 = vmatpush1.msra.mxu0 0.0
      %3805 = vmatprep.subr.mxu0 0.0
      %3806 = vmatpush1.msra.mxu0 0.0
      %3807 = vmatprep.subr.mxu0 0.0
      %3808 = vmatpush1.msra.mxu0 0.0
      %3809 = vmatprep.subr.mxu0 0.0
      %3810 = vmatpush1.msra.mxu0 0.0
      %3811 = vmatprep.subr.mxu0 0.0
      %3812 = vmatpush1.msra.mxu0 0.0
      %3813 = vmatprep.subr.mxu0 0.0
      %3814 = vmatpush1.msra.mxu0 0.0
      %3815 = vmatprep.subr.mxu0 0.0
      %3816 = vmatpush1.msra.mxu0 0.0
      %3817 = vmatprep.subr.mxu0 0.0
      %3818 = vmatpush1.msra.mxu0 0.0
      %3819 = vmatprep.subr.mxu0 0.0
      %3820 = vmatpush1.msra.mxu0 0.0
      %3821 = vmatprep.subr.mxu0 0.0
      %3822 = vmatpush1.msra.mxu0 0.0
      %3823 = vmatprep.subr.mxu0 0.0
      %3824 = vmatpush1.msra.mxu0 0.0
      %3825 = vmatprep.subr.mxu0 0.0
      %3826 = vmatpush1.msra.mxu0 0.0
      %3827 = vmatprep.subr.mxu0 0.0
      %3828 = vmatpush1.msra.mxu0 0.0
      %3829 = vmatprep.subr.mxu0 0.0
      %3830 = vmatpush1.msra.mxu0 0.0
      %3831 = vmatprep.subr.mxu0 0.0
      %3832 = vmatpush1.msra.mxu0 0.0
      %3833 = vmatprep.subr.mxu0 0.0
      %3834 = vmatpush1.msra.mxu0 %v3801
      %3835 = vmatprep.subr.mxu0 0.0
      %3836 = vmatpush2.msra.mxu0 0.0
      %3837 = vmatprep.subr.mxu0 0.0
      %3838 = vmatpush2.msra.mxu0 0.0
      %3839 = vmatprep.subr.mxu0 0.0
      %3840 = vmatpush2.msra.mxu0 0.0
      %3841 = vmatprep.subr.mxu0 0.0
      %3842 = vmatpush2.msra.mxu0 0.0
      %3843 = vmatprep.subr.mxu0 0.0
      %3844 = vmatpush2.msra.mxu0 0.0
      %3845 = vmatprep.subr.mxu0 0.0
      %3846 = vmatpush2.msra.mxu0 0.0
      %3847 = vmatprep.subr.mxu0 0.0
      %3848 = vmatpush2.msra.mxu0 0.0
      %3849 = vmatprep.subr.mxu0 0.0
      %3850 = vmatpush2.msra.mxu0 0.0
      %3851 = vmatprep.subr.mxu0 0.0
      %3852 = vmatpush2.msra.mxu0 0.0
      %3853 = vmatprep.subr.mxu0 0.0
      %3854 = vmatpush2.msra.mxu0 0.0
      %3855 = vmatprep.subr.mxu0 0.0
      %3856 = vmatpush2.msra.mxu0 0.0
      %3857 = vmatprep.subr.mxu0 0.0
      %3858 = vmatpush2.msra.mxu0 0.0
      %3859 = vmatprep.subr.mxu0 0.0
      %3860 = vmatpush2.msra.mxu0 0.0
      %3861 = vmatprep.subr.mxu0 0.0
      %3862 = vmatpush2.msra.mxu0 0.0
      %3863 = vmatprep.subr.mxu0 0.0
      %3864 = vmatpush2.msra.mxu0 0.0
      %3865 = vmatprep.subr.mxu0 0.0
      %3866 = vmatpush2.msra.mxu0 0.0
      %3867 = vmatprep.mubr.f32.mxu0 0.0
      %3868 = vmatmul.mubr.f32.gmra.mxu0 %v2646
      %v3869 = vpop.f32.mrf.mxu0
      %v3870 = vadd.f32 0.0, %v3869
      %v3871 = vpop.f32.mrf.mxu0
      %3872 = vmatprep.mubr.f32.mxu0 0.0
      %3873 = vmatmul.mubr.f32.gmra.mxu0 %v2649
      %v3874 = vpop.f32.mrf.mxu0
      %v3875 = vadd.f32 0.0, %v3874
      %v3876 = vpop.f32.mrf.mxu0
      %3877 = vmatprep.mubr.f32.mxu0 0.0
      %3878 = vmatmul.mubr.f32.gmra.mxu0 %v2652
      %v3879 = vpop.f32.mrf.mxu0
      %v3880 = vadd.f32 0.0, %v3879
      %v3881 = vpop.f32.mrf.mxu0
      %3882 = vmatprep.mubr.f32.mxu0 0.0
      %3883 = vmatmul.mubr.f32.gmra.mxu0 %v2655
      %v3884 = vpop.f32.mrf.mxu0
      %v3885 = vadd.f32 0.0, %v3884
      %v3886 = vpop.f32.mrf.mxu0
      %3887 = vdwg.mxu0
      %v3889 = vsel %vm2657, %v3799, 0
      %3891 = vmatprep.subr.mxu0 0.0
      %3892 = vmatpush1.msra.mxu0 0.0
      %3893 = vmatprep.subr.mxu0 0.0
      %3894 = vmatpush1.msra.mxu0 0.0
      %3895 = vmatprep.subr.mxu0 0.0
      %3896 = vmatpush1.msra.mxu0 0.0
      %3897 = vmatprep.subr.mxu0 0.0
      %3898 = vmatpush1.msra.mxu0 0.0
      %3899 = vmatprep.subr.mxu0 0.0
      %3900 = vmatpush1.msra.mxu0 0.0
      %3901 = vmatprep.subr.mxu0 0.0
      %3902 = vmatpush1.msra.mxu0 0.0
      %3903 = vmatprep.subr.mxu0 0.0
      %3904 = vmatpush1.msra.mxu0 0.0
      %3905 = vmatprep.subr.mxu0 0.0
      %3906 = vmatpush1.msra.mxu0 0.0
      %3907 = vmatprep.subr.mxu0 0.0
      %3908 = vmatpush1.msra.mxu0 0.0
      %3909 = vmatprep.subr.mxu0 0.0
      %3910 = vmatpush1.msra.mxu0 0.0
      %3911 = vmatprep.subr.mxu0 0.0
      %3912 = vmatpush1.msra.mxu0 0.0
      %3913 = vmatprep.subr.mxu0 0.0
      %3914 = vmatpush1.msra.mxu0 0.0
      %3915 = vmatprep.subr.mxu0 0.0
      %3916 = vmatpush1.msra.mxu0 0.0
      %3917 = vmatprep.subr.mxu0 0.0
      %3918 = vmatpush1.msra.mxu0 0.0
      %3919 = vmatprep.subr.mxu0 0.0
      %3920 = vmatpush1.msra.mxu0 0.0
      %3921 = vmatprep.subr.mxu0 0.0
      %3922 = vmatpush1.msra.mxu0 %v3889
      %3923 = vmatprep.subr.mxu0 0.0
      %3924 = vmatpush2.msra.mxu0 0.0
      %3925 = vmatprep.subr.mxu0 0.0
      %3926 = vmatpush2.msra.mxu0 0.0
      %3927 = vmatprep.subr.mxu0 0.0
      %3928 = vmatpush2.msra.mxu0 0.0
      %3929 = vmatprep.subr.mxu0 0.0
      %3930 = vmatpush2.msra.mxu0 0.0
      %3931 = vmatprep.subr.mxu0 0.0
      %3932 = vmatpush2.msra.mxu0 0.0
      %3933 = vmatprep.subr.mxu0 0.0
      %3934 = vmatpush2.msra.mxu0 0.0
      %3935 = vmatprep.subr.mxu0 0.0
      %3936 = vmatpush2.msra.mxu0 0.0
      %3937 = vmatprep.subr.mxu0 0.0
      %3938 = vmatpush2.msra.mxu0 0.0
      %3939 = vmatprep.subr.mxu0 0.0
      %3940 = vmatpush2.msra.mxu0 0.0
      %3941 = vmatprep.subr.mxu0 0.0
      %3942 = vmatpush2.msra.mxu0 0.0
      %3943 = vmatprep.subr.mxu0 0.0
      %3944 = vmatpush2.msra.mxu0 0.0
      %3945 = vmatprep.subr.mxu0 0.0
      %3946 = vmatpush2.msra.mxu0 0.0
      %3947 = vmatprep.subr.mxu0 0.0
      %3948 = vmatpush2.msra.mxu0 0.0
      %3949 = vmatprep.subr.mxu0 0.0
      %3950 = vmatpush2.msra.mxu0 0.0
      %3951 = vmatprep.subr.mxu0 0.0
      %3952 = vmatpush2.msra.mxu0 0.0
      %3953 = vmatprep.subr.mxu0 0.0
      %3954 = vmatpush2.msra.mxu0 0.0
      %3955 = vmatprep.mubr.f32.mxu0 0.0
      %3956 = vmatmul.mubr.f32.gmra.mxu0 %v2646
      %v3957 = vpop.f32.mrf.mxu0
      %v3958 = vadd.f32 0.0, %v3957
      %v3959 = vpop.f32.mrf.mxu0
      %3960 = vmatprep.mubr.f32.mxu0 0.0
      %3961 = vmatmul.mubr.f32.gmra.mxu0 %v2649
      %v3962 = vpop.f32.mrf.mxu0
      %v3963 = vadd.f32 0.0, %v3962
      %v3964 = vpop.f32.mrf.mxu0
      %3965 = vmatprep.mubr.f32.mxu0 0.0
      %3966 = vmatmul.mubr.f32.gmra.mxu0 %v2652
      %v3967 = vpop.f32.mrf.mxu0
      %v3968 = vadd.f32 0.0, %v3967
      %v3969 = vpop.f32.mrf.mxu0
      %3970 = vmatprep.mubr.f32.mxu0 0.0
      %3971 = vmatmul.mubr.f32.gmra.mxu0 %v2655
      %v3972 = vpop.f32.mrf.mxu0
      %v3973 = vadd.f32 0.0, %v3972
      %v3974 = vpop.f32.mrf.mxu0
      %3975 = vdwg.mxu0
      %v3976 = vmul.f32 %v3470, %v3870
      %v3977 = vmul.f32 %v3471, %v3875
      %v3978 = vmul.f32 %v3472, %v3880
      %v3979 = vmul.f32 %v3473, %v3885
      %v3980 = vadd.f32 %v3976, %v3958
      %v3981 = vadd.f32 %v3977, %v3963
      %v3982 = vadd.f32 %v3978, %v3968
      %v3983 = vadd.f32 %v3979, %v3973
      %v3984 = vand.u32 2147483647, %v3980
      %v3985 = vand.u32 2147483647, %v3981
      %v3986 = vand.u32 2147483647, %v3982
      %v3987 = vand.u32 2147483647, %v3983
      %v3988 = vmul.f32 %v3984, 0.70710677
      %v3989 = vmul.f32 %v3985, 0.70710677
      %v3990 = vmul.f32 %v3986, 0.70710677
      %v3991 = vmul.f32 %v3987, 0.70710677
      %v3992 = vmul.f32 %v3988, 0.3275911
      %v3993 = vmul.f32 %v3989, 0.3275911
      %v3994 = vmul.f32 %v3990, 0.3275911
      %v3995 = vmul.f32 %v3991, 0.3275911
      %v3996 = vadd.f32 %v3992, 1.0
      %v3997 = vadd.f32 %v3993, 1.0
      %v3998 = vadd.f32 %v3994, 1.0
      %v3999 = vadd.f32 %v3995, 1.0
      %v4000 = vrcp.pop %v3996
      %v4001 = vrcp.pop %v3997
      %v4002 = vrcp.pop %v3998
      %v4003 = vrcp.pop %v3999
      %v4004 = vmul.f32 %v4000, 1.0614054
      %v4005 = vmul.f32 %v4001, 1.0614054
      %v4006 = vmul.f32 %v4002, 1.0614054
      %v4007 = vmul.f32 %v4003, 1.0614054
      %v4008 = vadd.f32 %v4004, -1.4531521
      %v4009 = vadd.f32 %v4005, -1.4531521
      %v4010 = vadd.f32 %v4006, -1.4531521
      %v4011 = vadd.f32 %v4007, -1.4531521
      %v4012 = vmul.f32 %v4000, %v4008
      %v4013 = vmul.f32 %v4001, %v4009
      %v4014 = vmul.f32 %v4002, %v4010
      %v4015 = vmul.f32 %v4003, %v4011
      %v4016 = vadd.f32 %v4012, 1.4214138
      %v4017 = vadd.f32 %v4013, 1.4214138
      %v4018 = vadd.f32 %v4014, 1.4214138
      %v4019 = vadd.f32 %v4015, 1.4214138
      %v4020 = vmul.f32 %v4000, %v4016
      %v4021 = vmul.f32 %v4001, %v4017
      %v4022 = vmul.f32 %v4002, %v4018
      %v4023 = vmul.f32 %v4003, %v4019
      %v4024 = vadd.f32 %v4020, -0.28449672
      %v4025 = vadd.f32 %v4021, -0.28449672
      %v4026 = vadd.f32 %v4022, -0.28449672
      %v4027 = vadd.f32 %v4023, -0.28449672
      %v4028 = vmul.f32 %v4000, %v4024
      %v4029 = vmul.f32 %v4001, %v4025
      %v4030 = vmul.f32 %v4002, %v4026
      %v4031 = vmul.f32 %v4003, %v4027
      %v4032 = vadd.f32 %v4028, 0.2548296
      %v4033 = vadd.f32 %v4029, 0.2548296
      %v4034 = vadd.f32 %v4030, 0.2548296
      %v4035 = vadd.f32 %v4031, 0.2548296
      %v4036 = vmul.f32 %v4000, %v4032
      %v4037 = vmul.f32 %v4001, %v4033
      %v4038 = vmul.f32 %v4002, %v4034
      %v4039 = vmul.f32 %v4003, %v4035
      %v4040 = vsub.f32 0.0, %v3988
      %v4041 = vsub.f32 0.0, %v3989
      %v4042 = vsub.f32 0.0, %v3990
      %v4043 = vsub.f32 0.0, %v3991
      %v4044 = vmul.f32 %v4040, %v3988
      %v4045 = vmul.f32 %v4041, %v3989
      %v4046 = vmul.f32 %v4042, %v3990
      %v4047 = vmul.f32 %v4043, %v3991
      %v4048 = vmul.f32 %v4044, 1.442695
      %v4049 = vpow.pop %v4048
      %v4050 = vmul.f32 %v4045, 1.442695
      %v4051 = vpow.pop %v4050
      %v4052 = vmul.f32 %v4046, 1.442695
      %v4053 = vpow.pop %v4052
      %v4054 = vmul.f32 %v4047, 1.442695
      %v4055 = vpow.pop %v4054
      %v4056 = vmul.f32 %v4036, %v4049
      %v4057 = vmul.f32 %v4037, %v4051
      %v4058 = vmul.f32 %v4038, %v4053
      %v4059 = vmul.f32 %v4039, %v4055
      %v4060 = vsub.f32 1.0, %v4056
      %v4061 = vsub.f32 1.0, %v4057
      %v4062 = vsub.f32 1.0, %v4058
      %v4063 = vsub.f32 1.0, %v4059
      %vm4064 = vcmp.ge.f32.partialorder %v3980, 0.0
      %vm4065 = vcmp.ge.f32.partialorder %v3981, 0.0
      %vm4066 = vcmp.ge.f32.partialorder %v3982, 0.0
      %vm4067 = vcmp.ge.f32.partialorder %v3983, 0.0
      %v4068 = vsub.f32 0.0, %v4060
      %v4069 = vsub.f32 0.0, %v4061
      %v4070 = vsub.f32 0.0, %v4062
      %v4071 = vsub.f32 0.0, %v4063
      %v4072 = vsel %vm4064, %v4060, %v4068
      %v4073 = vsel %vm4065, %v4061, %v4069
      %v4074 = vsel %vm4066, %v4062, %v4070
      %v4075 = vsel %vm4067, %v4063, %v4071
      %v4076 = vmul.f32 %v3980, 0.5
      %v4077 = vmul.f32 %v3981, 0.5
      %v4078 = vmul.f32 %v3982, 0.5
      %v4079 = vmul.f32 %v3983, 0.5
      %v4080 = vadd.f32 %v4072, 1.0
      %v4081 = vadd.f32 %v4073, 1.0
      %v4082 = vadd.f32 %v4074, 1.0
      %v4083 = vadd.f32 %v4075, 1.0
      %v4084 = vmul.f32 %v4076, %v4080
      %v4085 = vmul.f32 %v4077, %v4081
      %v4086 = vmul.f32 %v4078, %v4082
      %v4087 = vmul.f32 %v4079, %v4083
      %v4088 = vpack.c.bf16 %v4085, %v4084
      %v4089 = vpack.c.bf16 %v4087, %v4086
      %s4090 = scalar_lea.vmem %s5, 576
      %v4091 = vld [vmem:[%s4090] sm:$0xf]
      %v4092 = vld [vmem:[%s4090 + $0x4] sm:$0xf]
      %v4093 = vld [vmem:[%s4090 + $0x8] sm:$0xf]
      %v4094 = vld [vmem:[%s4090 + $0xc] sm:$0xf]
      %v4095 = vld [vmem:[%s4090 + $0x10] sm:$0xf]
      %v4096 = vld [vmem:[%s4090 + $0x14] sm:$0xf]
      %v4097 = vld [vmem:[%s4090 + $0x18] sm:$0xf]
      %v4098 = vld [vmem:[%s4090 + $0x1c] sm:$0xf]
      %v4099 = vld [vmem:[%s4090 + $0x20] sm:$0xf]
      %v4100 = vld [vmem:[%s4090 + $0x24] sm:$0xf]
      %v4101 = vld [vmem:[%s4090 + $0x28] sm:$0xf]
      %v4102 = vld [vmem:[%s4090 + $0x2c] sm:$0xf]
      %v4103 = vld [vmem:[%s4090 + $0x30] sm:$0xf]
      %v4104 = vld [vmem:[%s4090 + $0x34] sm:$0xf]
      %v4105 = vld [vmem:[%s4090 + $0x38] sm:$0xf]
      %v4106 = vld [vmem:[%s4090 + $0x3c] sm:$0xf]
      %v4123 = vunpack.c.l.b16 %v4091
      %v4124 = vunpack.c.l.b16 %v4092
      %v4125 = vunpack.c.l.b16 %v4093
      %v4126 = vunpack.c.l.b16 %v4094
      %v4127 = vunpack.c.l.b16 %v4095
      %v4128 = vunpack.c.l.b16 %v4096
      %v4129 = vunpack.c.l.b16 %v4097
      %v4130 = vunpack.c.l.b16 %v4098
      %v4131 = vunpack.c.l.b16 %v4099
      %v4132 = vunpack.c.l.b16 %v4100
      %v4133 = vunpack.c.l.b16 %v4101
      %v4134 = vunpack.c.l.b16 %v4102
      %v4135 = vunpack.c.l.b16 %v4103
      %v4136 = vunpack.c.l.b16 %v4104
      %v4137 = vunpack.c.l.b16 %v4105
      %v4138 = vunpack.c.l.b16 %v4106
      %v4139 = vpack.c.b16 %v4124, %v4123
      %v4140 = vpack.c.b16 %v4126, %v4125
      %v4141 = vpack.c.b16 %v4128, %v4127
      %v4142 = vpack.c.b16 %v4130, %v4129
      %v4143 = vpack.c.b16 %v4132, %v4131
      %v4144 = vpack.c.b16 %v4134, %v4133
      %v4145 = vpack.c.b16 %v4136, %v4135
      %v4146 = vpack.c.b16 %v4138, %v4137
      %4155 = vmatprep.subr.bf16.mxu0 0
      %4156 = vmatpush1.bf16.msra.mxu0 %v4146
      %4157 = vmatprep.subr.bf16.mxu0 0
      %4158 = vmatpush1.bf16.msra.mxu0 %v4145
      %4159 = vmatprep.subr.bf16.mxu0 0
      %4160 = vmatpush1.bf16.msra.mxu0 %v4144
      %4161 = vmatprep.subr.bf16.mxu0 0
      %4162 = vmatpush1.bf16.msra.mxu0 %v4143
      %4163 = vmatprep.subr.bf16.mxu0 0
      %4164 = vmatpush1.bf16.msra.mxu0 %v4142
      %4165 = vmatprep.subr.bf16.mxu0 0
      %4166 = vmatpush1.bf16.msra.mxu0 %v4141
      %4167 = vmatprep.subr.bf16.mxu0 0
      %4168 = vmatpush1.bf16.msra.mxu0 %v4140
      %4169 = vmatprep.subr.bf16.mxu0 0
      %4170 = vmatpush1.bf16.msra.mxu0 %v4139
      %4171 = vmatprep.subr.bf16.mxu0 0
      %4172 = vmatpush2.bf16.msra.mxu0 0
      %4173 = vmatprep.subr.bf16.mxu0 0
      %4174 = vmatpush2.bf16.msra.mxu0 0
      %4175 = vmatprep.subr.bf16.mxu0 0
      %4176 = vmatpush2.bf16.msra.mxu0 0
      %4177 = vmatprep.subr.bf16.mxu0 0
      %4178 = vmatpush2.bf16.msra.mxu0 0
      %4179 = vmatprep.subr.bf16.mxu0 0
      %4180 = vmatpush2.bf16.msra.mxu0 0
      %4181 = vmatprep.subr.bf16.mxu0 0
      %4182 = vmatpush2.bf16.msra.mxu0 0
      %4183 = vmatprep.subr.bf16.mxu0 0
      %4184 = vmatpush2.bf16.msra.mxu0 0
      %4185 = vmatprep.subr.bf16.mxu0 0
      %4186 = vmatpush2.bf16.msra.mxu0 0
      %4187 = vmatprep.mubr.bf16.mxu0 0
      %4188 = vmatmul.mubr.bf16.gmra.mxu0 %v4088
      %v4189 = vpop.f32.mrf.mxu0
      %v4190 = vadd.f32 0.0, %v4189
      %v4191 = vpop.f32.mrf.mxu0
      %v4192 = vpop.f32.mrf.mxu0
      %v4193 = vadd.f32 0.0, %v4192
      %v4194 = vpop.f32.mrf.mxu0
      %4195 = vmatprep.mubr.bf16.mxu0 0
      %4196 = vmatmul.mubr.bf16.gmra.mxu0 %v4089
      %v4197 = vpop.f32.mrf.mxu0
      %v4198 = vadd.f32 0.0, %v4197
      %v4199 = vpop.f32.mrf.mxu0
      %v4200 = vpop.f32.mrf.mxu0
      %v4201 = vadd.f32 0.0, %v4200
      %v4202 = vpop.f32.mrf.mxu0
      %4203 = vdwg.mxu0
      %s4204 = scalar_lea.vmem %s5, 640
      %v4205 = vld [vmem:[%s4204] sm:$0xf]
      %v4206 = vld [vmem:[%s4204 + $0x4] sm:$0xf]
      %v4207 = vld [vmem:[%s4204 + $0x8] sm:$0xf]
      %v4208 = vld [vmem:[%s4204 + $0xc] sm:$0xf]
      %v4209 = vld [vmem:[%s4204 + $0x10] sm:$0xf]
      %v4210 = vld [vmem:[%s4204 + $0x14] sm:$0xf]
      %v4211 = vld [vmem:[%s4204 + $0x18] sm:$0xf]
      %v4212 = vld [vmem:[%s4204 + $0x1c] sm:$0xf]
      %v4213 = vld [vmem:[%s4204 + $0x20] sm:$0xf]
      %v4214 = vld [vmem:[%s4204 + $0x24] sm:$0xf]
      %v4215 = vld [vmem:[%s4204 + $0x28] sm:$0xf]
      %v4216 = vld [vmem:[%s4204 + $0x2c] sm:$0xf]
      %v4217 = vld [vmem:[%s4204 + $0x30] sm:$0xf]
      %v4218 = vld [vmem:[%s4204 + $0x34] sm:$0xf]
      %v4219 = vld [vmem:[%s4204 + $0x38] sm:$0xf]
      %v4220 = vld [vmem:[%s4204 + $0x3c] sm:$0xf]
      %v4237 = vunpack.c.l.b16 %v4205
      %v4238 = vunpack.c.l.b16 %v4206
      %v4239 = vunpack.c.l.b16 %v4207
      %v4240 = vunpack.c.l.b16 %v4208
      %v4241 = vunpack.c.l.b16 %v4209
      %v4242 = vunpack.c.l.b16 %v4210
      %v4243 = vunpack.c.l.b16 %v4211
      %v4244 = vunpack.c.l.b16 %v4212
      %v4245 = vunpack.c.l.b16 %v4213
      %v4246 = vunpack.c.l.b16 %v4214
      %v4247 = vunpack.c.l.b16 %v4215
      %v4248 = vunpack.c.l.b16 %v4216
      %v4249 = vunpack.c.l.b16 %v4217
      %v4250 = vunpack.c.l.b16 %v4218
      %v4251 = vunpack.c.l.b16 %v4219
      %v4252 = vunpack.c.l.b16 %v4220
      %v4253 = vpack.c.b16 %v4238, %v4237
      %v4254 = vpack.c.b16 %v4240, %v4239
      %v4255 = vpack.c.b16 %v4242, %v4241
      %v4256 = vpack.c.b16 %v4244, %v4243
      %v4257 = vpack.c.b16 %v4246, %v4245
      %v4258 = vpack.c.b16 %v4248, %v4247
      %v4259 = vpack.c.b16 %v4250, %v4249
      %v4260 = vpack.c.b16 %v4252, %v4251
      %4269 = vmatprep.subr.bf16.mxu0 0
      %4270 = vmatpush1.bf16.msra.mxu0 %v4260
      %4271 = vmatprep.subr.bf16.mxu0 0
      %4272 = vmatpush1.bf16.msra.mxu0 %v4259
      %4273 = vmatprep.subr.bf16.mxu0 0
      %4274 = vmatpush1.bf16.msra.mxu0 %v4258
      %4275 = vmatprep.subr.bf16.mxu0 0
      %4276 = vmatpush1.bf16.msra.mxu0 %v4257
      %4277 = vmatprep.subr.bf16.mxu0 0
      %4278 = vmatpush1.bf16.msra.mxu0 %v4256
      %4279 = vmatprep.subr.bf16.mxu0 0
      %4280 = vmatpush1.bf16.msra.mxu0 %v4255
      %4281 = vmatprep.subr.bf16.mxu0 0
      %4282 = vmatpush1.bf16.msra.mxu0 %v4254
      %4283 = vmatprep.subr.bf16.mxu0 0
      %4284 = vmatpush1.bf16.msra.mxu0 %v4253
      %4285 = vmatprep.subr.bf16.mxu0 0
      %4286 = vmatpush2.bf16.msra.mxu0 0
      %4287 = vmatprep.subr.bf16.mxu0 0
      %4288 = vmatpush2.bf16.msra.mxu0 0
      %4289 = vmatprep.subr.bf16.mxu0 0
      %4290 = vmatpush2.bf16.msra.mxu0 0
      %4291 = vmatprep.subr.bf16.mxu0 0
      %4292 = vmatpush2.bf16.msra.mxu0 0
      %4293 = vmatprep.subr.bf16.mxu0 0
      %4294 = vmatpush2.bf16.msra.mxu0 0
      %4295 = vmatprep.subr.bf16.mxu0 0
      %4296 = vmatpush2.bf16.msra.mxu0 0
      %4297 = vmatprep.subr.bf16.mxu0 0
      %4298 = vmatpush2.bf16.msra.mxu0 0
      %4299 = vmatprep.subr.bf16.mxu0 0
      %4300 = vmatpush2.bf16.msra.mxu0 0
      %4301 = vmatprep.mubr.bf16.mxu0 0
      %4302 = vmatmul.mubr.bf16.gmra.mxu0 %v4088
      %v4303 = vpop.f32.mrf.mxu0
      %v4304 = vadd.f32 0.0, %v4303
      %v4305 = vpop.f32.mrf.mxu0
      %v4306 = vpop.f32.mrf.mxu0
      %v4307 = vadd.f32 0.0, %v4306
      %v4308 = vpop.f32.mrf.mxu0
      %4309 = vmatprep.mubr.bf16.mxu0 0
      %4310 = vmatmul.mubr.bf16.gmra.mxu0 %v4089
      %v4311 = vpop.f32.mrf.mxu0
      %v4312 = vadd.f32 0.0, %v4311
      %v4313 = vpop.f32.mrf.mxu0
      %v4314 = vpop.f32.mrf.mxu0
      %v4315 = vadd.f32 0.0, %v4314
      %v4316 = vpop.f32.mrf.mxu0
      %4317 = vdwg.mxu0
      %s4318 = scalar_lea.vmem %s5, 704
      %v4319 = vld [vmem:[%s4318] sm:$0xf]
      %v4320 = vld [vmem:[%s4318 + $0x4] sm:$0xf]
      %v4321 = vld [vmem:[%s4318 + $0x8] sm:$0xf]
      %v4322 = vld [vmem:[%s4318 + $0xc] sm:$0xf]
      %v4323 = vld [vmem:[%s4318 + $0x10] sm:$0xf]
      %v4324 = vld [vmem:[%s4318 + $0x14] sm:$0xf]
      %v4325 = vld [vmem:[%s4318 + $0x18] sm:$0xf]
      %v4326 = vld [vmem:[%s4318 + $0x1c] sm:$0xf]
      %v4327 = vld [vmem:[%s4318 + $0x20] sm:$0xf]
      %v4328 = vld [vmem:[%s4318 + $0x24] sm:$0xf]
      %v4329 = vld [vmem:[%s4318 + $0x28] sm:$0xf]
      %v4330 = vld [vmem:[%s4318 + $0x2c] sm:$0xf]
      %v4331 = vld [vmem:[%s4318 + $0x30] sm:$0xf]
      %v4332 = vld [vmem:[%s4318 + $0x34] sm:$0xf]
      %v4333 = vld [vmem:[%s4318 + $0x38] sm:$0xf]
      %v4334 = vld [vmem:[%s4318 + $0x3c] sm:$0xf]
      %v4351 = vunpack.c.l.b16 %v4319
      %v4352 = vunpack.c.l.b16 %v4320
      %v4353 = vunpack.c.l.b16 %v4321
      %v4354 = vunpack.c.l.b16 %v4322
      %v4355 = vunpack.c.l.b16 %v4323
      %v4356 = vunpack.c.l.b16 %v4324
      %v4357 = vunpack.c.l.b16 %v4325
      %v4358 = vunpack.c.l.b16 %v4326
      %v4359 = vunpack.c.l.b16 %v4327
      %v4360 = vunpack.c.l.b16 %v4328
      %v4361 = vunpack.c.l.b16 %v4329
      %v4362 = vunpack.c.l.b16 %v4330
      %v4363 = vunpack.c.l.b16 %v4331
      %v4364 = vunpack.c.l.b16 %v4332
      %v4365 = vunpack.c.l.b16 %v4333
      %v4366 = vunpack.c.l.b16 %v4334
      %v4367 = vpack.c.b16 %v4352, %v4351
      %v4368 = vpack.c.b16 %v4354, %v4353
      %v4369 = vpack.c.b16 %v4356, %v4355
      %v4370 = vpack.c.b16 %v4358, %v4357
      %v4371 = vpack.c.b16 %v4360, %v4359
      %v4372 = vpack.c.b16 %v4362, %v4361
      %v4373 = vpack.c.b16 %v4364, %v4363
      %v4374 = vpack.c.b16 %v4366, %v4365
      %4383 = vmatprep.subr.bf16.mxu0 0
      %4384 = vmatpush1.bf16.msra.mxu0 %v4374
      %4385 = vmatprep.subr.bf16.mxu0 0
      %4386 = vmatpush1.bf16.msra.mxu0 %v4373
      %4387 = vmatprep.subr.bf16.mxu0 0
      %4388 = vmatpush1.bf16.msra.mxu0 %v4372
      %4389 = vmatprep.subr.bf16.mxu0 0
      %4390 = vmatpush1.bf16.msra.mxu0 %v4371
      %4391 = vmatprep.subr.bf16.mxu0 0
      %4392 = vmatpush1.bf16.msra.mxu0 %v4370
      %4393 = vmatprep.subr.bf16.mxu0 0
      %4394 = vmatpush1.bf16.msra.mxu0 %v4369
      %4395 = vmatprep.subr.bf16.mxu0 0
      %4396 = vmatpush1.bf16.msra.mxu0 %v4368
      %4397 = vmatprep.subr.bf16.mxu0 0
      %4398 = vmatpush1.bf16.msra.mxu0 %v4367
      %4399 = vmatprep.subr.bf16.mxu0 0
      %4400 = vmatpush2.bf16.msra.mxu0 0
      %4401 = vmatprep.subr.bf16.mxu0 0
      %4402 = vmatpush2.bf16.msra.mxu0 0
      %4403 = vmatprep.subr.bf16.mxu0 0
      %4404 = vmatpush2.bf16.msra.mxu0 0
      %4405 = vmatprep.subr.bf16.mxu0 0
      %4406 = vmatpush2.bf16.msra.mxu0 0
      %4407 = vmatprep.subr.bf16.mxu0 0
      %4408 = vmatpush2.bf16.msra.mxu0 0
      %4409 = vmatprep.subr.bf16.mxu0 0
      %4410 = vmatpush2.bf16.msra.mxu0 0
      %4411 = vmatprep.subr.bf16.mxu0 0
      %4412 = vmatpush2.bf16.msra.mxu0 0
      %4413 = vmatprep.subr.bf16.mxu0 0
      %4414 = vmatpush2.bf16.msra.mxu0 0
      %4415 = vmatprep.mubr.bf16.mxu0 0
      %4416 = vmatmul.mubr.bf16.gmra.mxu0 %v4088
      %v4417 = vpop.f32.mrf.mxu0
      %v4418 = vadd.f32 0.0, %v4417
      %v4419 = vpop.f32.mrf.mxu0
      %v4420 = vpop.f32.mrf.mxu0
      %v4421 = vadd.f32 0.0, %v4420
      %v4422 = vpop.f32.mrf.mxu0
      %4423 = vmatprep.mubr.bf16.mxu0 0
      %4424 = vmatmul.mubr.bf16.gmra.mxu0 %v4089
      %v4425 = vpop.f32.mrf.mxu0
      %v4426 = vadd.f32 0.0, %v4425
      %v4427 = vpop.f32.mrf.mxu0
      %v4428 = vpop.f32.mrf.mxu0
      %v4429 = vadd.f32 0.0, %v4428
      %v4430 = vpop.f32.mrf.mxu0
      %4431 = vdwg.mxu0
      %4432 = vmatprep.subr.mxu0 0.0
      %4433 = vmatpush1.msra.mxu0 0.0
      %4434 = vmatprep.subr.mxu0 0.0
      %4435 = vmatpush1.msra.mxu0 0.0
      %4436 = vmatprep.subr.mxu0 0.0
      %4437 = vmatpush1.msra.mxu0 0.0
      %4438 = vmatprep.subr.mxu0 0.0
      %4439 = vmatpush1.msra.mxu0 0.0
      %4440 = vmatprep.subr.mxu0 0.0
      %4441 = vmatpush1.msra.mxu0 0.0
      %4442 = vmatprep.subr.mxu0 0.0
      %4443 = vmatpush1.msra.mxu0 0.0
      %4444 = vmatprep.subr.mxu0 0.0
      %4445 = vmatpush1.msra.mxu0 0.0
      %4446 = vmatprep.subr.mxu0 0.0
      %4447 = vmatpush1.msra.mxu0 0.0
      %4448 = vmatprep.subr.mxu0 0.0
      %4449 = vmatpush1.msra.mxu0 0.0
      %4450 = vmatprep.subr.mxu0 0.0
      %4451 = vmatpush1.msra.mxu0 0.0
      %4452 = vmatprep.subr.mxu0 0.0
      %4453 = vmatpush1.msra.mxu0 0.0
      %4454 = vmatprep.subr.mxu0 0.0
      %4455 = vmatpush1.msra.mxu0 0.0
      %4456 = vmatprep.subr.mxu0 0.0
      %4457 = vmatpush1.msra.mxu0 %v4201
      %4458 = vmatprep.subr.mxu0 0.0
      %4459 = vmatpush1.msra.mxu0 %v4198
      %4460 = vmatprep.subr.mxu0 0.0
      %4461 = vmatpush1.msra.mxu0 %v4193
      %4462 = vmatprep.subr.mxu0 0.0
      %4463 = vmatpush1.msra.mxu0 %v4190
      %4464 = vmatprep.subr.mxu0 0.0
      %4465 = vmatpush2.msra.mxu0 0.0
      %4466 = vmatprep.subr.mxu0 0.0
      %4467 = vmatpush2.msra.mxu0 0.0
      %4468 = vmatprep.subr.mxu0 0.0
      %4469 = vmatpush2.msra.mxu0 0.0
      %4470 = vmatprep.subr.mxu0 0.0
      %4471 = vmatpush2.msra.mxu0 0.0
      %4472 = vmatprep.subr.mxu0 0.0
      %4473 = vmatpush2.msra.mxu0 0.0
      %4474 = vmatprep.subr.mxu0 0.0
      %4475 = vmatpush2.msra.mxu0 0.0
      %4476 = vmatprep.subr.mxu0 0.0
      %4477 = vmatpush2.msra.mxu0 0.0
      %4478 = vmatprep.subr.mxu0 0.0
      %4479 = vmatpush2.msra.mxu0 0.0
      %4480 = vmatprep.subr.mxu0 0.0
      %4481 = vmatpush2.msra.mxu0 0.0
      %4482 = vmatprep.subr.mxu0 0.0
      %4483 = vmatpush2.msra.mxu0 0.0
      %4484 = vmatprep.subr.mxu0 0.0
      %4485 = vmatpush2.msra.mxu0 0.0
      %4486 = vmatprep.subr.mxu0 0.0
      %4487 = vmatpush2.msra.mxu0 0.0
      %4488 = vmatprep.subr.mxu0 0.0
      %4489 = vmatpush2.msra.mxu0 0.0
      %4490 = vmatprep.subr.mxu0 0.0
      %4491 = vmatpush2.msra.mxu0 0.0
      %4492 = vmatprep.subr.mxu0 0.0
      %4493 = vmatpush2.msra.mxu0 0.0
      %4494 = vmatprep.subr.mxu0 0.0
      %4495 = vmatpush2.msra.mxu0 0.0
      %4496 = vmatprep.mubr.f32.mxu0 0.0
      %4497 = vmatmul.mubr.f32.gmra.mxu0 %v2066
      %v4498 = vpop.f32.mrf.mxu0
      %v4499 = vadd.f32 %v4304, %v4498
      %v4500 = vpop.f32.mrf.mxu0
      %4501 = vmatprep.mubr.f32.mxu0 0.0
      %4502 = vmatmul.mubr.f32.gmra.mxu0 %v2069
      %v4503 = vpop.f32.mrf.mxu0
      %v4504 = vadd.f32 %v4307, %v4503
      %v4505 = vpop.f32.mrf.mxu0
      %4506 = vmatprep.mubr.f32.mxu0 0.0
      %4507 = vmatmul.mubr.f32.gmra.mxu0 %v2072
      %v4508 = vpop.f32.mrf.mxu0
      %v4509 = vadd.f32 %v4312, %v4508
      %v4510 = vpop.f32.mrf.mxu0
      %4511 = vmatprep.mubr.f32.mxu0 0.0
      %4512 = vmatmul.mubr.f32.gmra.mxu0 %v2075
      %v4513 = vpop.f32.mrf.mxu0
      %v4514 = vadd.f32 %v4315, %v4513
      %v4515 = vpop.f32.mrf.mxu0
      %4516 = vdwg.mxu0
      %4517 = vmatprep.subr.mxu0 0.0
      %4518 = vmatpush1.msra.mxu0 0.0
      %4519 = vmatprep.subr.mxu0 0.0
      %4520 = vmatpush1.msra.mxu0 0.0
      %4521 = vmatprep.subr.mxu0 0.0
      %4522 = vmatpush1.msra.mxu0 0.0
      %4523 = vmatprep.subr.mxu0 0.0
      %4524 = vmatpush1.msra.mxu0 0.0
      %4525 = vmatprep.subr.mxu0 0.0
      %4526 = vmatpush1.msra.mxu0 0.0
      %4527 = vmatprep.subr.mxu0 0.0
      %4528 = vmatpush1.msra.mxu0 0.0
      %4529 = vmatprep.subr.mxu0 0.0
      %4530 = vmatpush1.msra.mxu0 0.0
      %4531 = vmatprep.subr.mxu0 0.0
      %4532 = vmatpush1.msra.mxu0 0.0
      %4533 = vmatprep.subr.mxu0 0.0
      %4534 = vmatpush1.msra.mxu0 0.0
      %4535 = vmatprep.subr.mxu0 0.0
      %4536 = vmatpush1.msra.mxu0 0.0
      %4537 = vmatprep.subr.mxu0 0.0
      %4538 = vmatpush1.msra.mxu0 0.0
      %4539 = vmatprep.subr.mxu0 0.0
      %4540 = vmatpush1.msra.mxu0 0.0
      %4541 = vmatprep.subr.mxu0 0.0
      %4542 = vmatpush1.msra.mxu0 %v4429
      %4543 = vmatprep.subr.mxu0 0.0
      %4544 = vmatpush1.msra.mxu0 %v4426
      %4545 = vmatprep.subr.mxu0 0.0
      %4546 = vmatpush1.msra.mxu0 %v4421
      %4547 = vmatprep.subr.mxu0 0.0
      %4548 = vmatpush1.msra.mxu0 %v4418
      %4549 = vmatprep.subr.mxu0 0.0
      %4550 = vmatpush2.msra.mxu0 0.0
      %4551 = vmatprep.subr.mxu0 0.0
      %4552 = vmatpush2.msra.mxu0 0.0
      %4553 = vmatprep.subr.mxu0 0.0
      %4554 = vmatpush2.msra.mxu0 0.0
      %4555 = vmatprep.subr.mxu0 0.0
      %4556 = vmatpush2.msra.mxu0 0.0
      %4557 = vmatprep.subr.mxu0 0.0
      %4558 = vmatpush2.msra.mxu0 0.0
      %4559 = vmatprep.subr.mxu0 0.0
      %4560 = vmatpush2.msra.mxu0 0.0
      %4561 = vmatprep.subr.mxu0 0.0
      %4562 = vmatpush2.msra.mxu0 0.0
      %4563 = vmatprep.subr.mxu0 0.0
      %4564 = vmatpush2.msra.mxu0 0.0
      %4565 = vmatprep.subr.mxu0 0.0
      %4566 = vmatpush2.msra.mxu0 0.0
      %4567 = vmatprep.subr.mxu0 0.0
      %4568 = vmatpush2.msra.mxu0 0.0
      %4569 = vmatprep.subr.mxu0 0.0
      %4570 = vmatpush2.msra.mxu0 0.0
      %4571 = vmatprep.subr.mxu0 0.0
      %4572 = vmatpush2.msra.mxu0 0.0
      %4573 = vmatprep.subr.mxu0 0.0
      %4574 = vmatpush2.msra.mxu0 0.0
      %4575 = vmatprep.subr.mxu0 0.0
      %4576 = vmatpush2.msra.mxu0 0.0
      %4577 = vmatprep.subr.mxu0 0.0
      %4578 = vmatpush2.msra.mxu0 0.0
      %4579 = vmatprep.subr.mxu0 0.0
      %4580 = vmatpush2.msra.mxu0 0.0
      %4581 = vmatprep.mubr.f32.mxu0 0.0
      %4582 = vmatmul.mubr.f32.gmra.mxu0 %v2163
      %v4583 = vpop.f32.mrf.mxu0
      %v4584 = vadd.f32 0.0, %v4583
      %v4585 = vpop.f32.mrf.mxu0
      %4586 = vmatprep.mubr.f32.mxu0 0.0
      %4587 = vmatmul.mubr.f32.gmra.mxu0 %v2166
      %v4588 = vpop.f32.mrf.mxu0
      %v4589 = vadd.f32 0.0, %v4588
      %v4590 = vpop.f32.mrf.mxu0
      %4591 = vmatprep.mubr.f32.mxu0 0.0
      %4592 = vmatmul.mubr.f32.gmra.mxu0 %v2169
      %v4593 = vpop.f32.mrf.mxu0
      %v4594 = vadd.f32 0.0, %v4593
      %v4595 = vpop.f32.mrf.mxu0
      %4596 = vmatprep.mubr.f32.mxu0 0.0
      %4597 = vmatmul.mubr.f32.gmra.mxu0 %v2172
      %v4598 = vpop.f32.mrf.mxu0
      %v4599 = vadd.f32 0.0, %v4598
      %v4600 = vpop.f32.mrf.mxu0
      %4601 = vdwg.mxu0
      %v4602 = vadd.f32 %v4499, %v4584
      %v4603 = vadd.f32 %v4504, %v4589
      %v4604 = vadd.f32 %v4509, %v4594
      %v4605 = vadd.f32 %v4514, %v4599
      %s4606 = scalar_lea.vmem %s11, 8
      %v4607 = vld [vmem:[%s4606] sm:$0x7]
      %v4608 = vlaneseq
      %v4609 = vshrl.u32 %v4608, 7
      %v4610 = vsub.s32 0, %v4609
      %v4611 = vrot.slane %v4607, %v4610
      %v4612 = vadd.f32 %v4602, %v4611
      %v4613 = vadd.f32 %v4603, %v4611
      %v4614 = vadd.f32 %v4604, %v4611
      %v4615 = vadd.f32 %v4605, %v4611
      %v4616 = vmul.f32 %v4612, %v4612
      %v4617 = vmul.f32 %v4613, %v4613
      %v4618 = vmul.f32 %v4614, %v4614
      %v4619 = vmul.f32 %v4615, %v4615
      %4620 = vmatprep.subr.mxu0 0.0
      %4621 = vmatpush1.msra.mxu0 %v2291
      %4622 = vmatprep.subr.mxu0 0.0
      %4623 = vmatpush1.msra.mxu0 %v2290
      %4624 = vmatprep.subr.mxu0 0.0
      %4625 = vmatpush1.msra.mxu0 %v2289
      %4626 = vmatprep.subr.mxu0 0.0
      %4627 = vmatpush1.msra.mxu0 %v2288
      %4628 = vmatprep.subr.mxu0 0.0
      %4629 = vmatpush1.msra.mxu0 %v2287
      %4630 = vmatprep.subr.mxu0 0.0
      %4631 = vmatpush1.msra.mxu0 %v2286
      %4632 = vmatprep.subr.mxu0 0.0
      %4633 = vmatpush1.msra.mxu0 %v2285
      %4634 = vmatprep.subr.mxu0 0.0
      %4635 = vmatpush1.msra.mxu0 %v2284
      %4636 = vmatprep.subr.mxu0 0.0
      %4637 = vmatpush1.msra.mxu0 %v2283
      %4638 = vmatprep.subr.mxu0 0.0
      %4639 = vmatpush1.msra.mxu0 %v2282
      %4640 = vmatprep.subr.mxu0 0.0
      %4641 = vmatpush1.msra.mxu0 %v2281
      %4642 = vmatprep.subr.mxu0 0.0
      %4643 = vmatpush1.msra.mxu0 %v2280
      %4644 = vmatprep.subr.mxu0 0.0
      %4645 = vmatpush1.msra.mxu0 %v2279
      %4646 = vmatprep.subr.mxu0 0.0
      %4647 = vmatpush1.msra.mxu0 %v2278
      %4648 = vmatprep.subr.mxu0 0.0
      %4649 = vmatpush1.msra.mxu0 %v2277
      %4650 = vmatprep.subr.mxu0 0.0
      %4651 = vmatpush1.msra.mxu0 %v2276
      %4652 = vmatprep.subr.mxu0 0.0
      %4653 = vmatpush2.msra.mxu0 %v2307
      %4654 = vmatprep.subr.mxu0 0.0
      %4655 = vmatpush2.msra.mxu0 %v2306
      %4656 = vmatprep.subr.mxu0 0.0
      %4657 = vmatpush2.msra.mxu0 %v2305
      %4658 = vmatprep.subr.mxu0 0.0
      %4659 = vmatpush2.msra.mxu0 %v2304
      %4660 = vmatprep.subr.mxu0 0.0
      %4661 = vmatpush2.msra.mxu0 %v2303
      %4662 = vmatprep.subr.mxu0 0.0
      %4663 = vmatpush2.msra.mxu0 %v2302
      %4664 = vmatprep.subr.mxu0 0.0
      %4665 = vmatpush2.msra.mxu0 %v2301
      %4666 = vmatprep.subr.mxu0 0.0
      %4667 = vmatpush2.msra.mxu0 %v2300
      %4668 = vmatprep.subr.mxu0 0.0
      %4669 = vmatpush2.msra.mxu0 %v2299
      %4670 = vmatprep.subr.mxu0 0.0
      %4671 = vmatpush2.msra.mxu0 %v2298
      %4672 = vmatprep.subr.mxu0 0.0
      %4673 = vmatpush2.msra.mxu0 %v2297
      %4674 = vmatprep.subr.mxu0 0.0
      %4675 = vmatpush2.msra.mxu0 %v2296
      %4676 = vmatprep.subr.mxu0 0.0
      %4677 = vmatpush2.msra.mxu0 %v2295
      %4678 = vmatprep.subr.mxu0 0.0
      %4679 = vmatpush2.msra.mxu0 %v2294
      %4680 = vmatprep.subr.mxu0 0.0
      %4681 = vmatpush2.msra.mxu0 %v2293
      %4682 = vmatprep.subr.mxu0 0.0
      %4683 = vmatpush2.msra.mxu0 %v2292
      %4684 = vmatprep.mubr.f32.mxu0 %v4616
      %4685 = vmatmul.mubr.f32.gmra.mxu0 %v4612
      %v4686 = vpop.f32.mrf.mxu0
      %v4687 = vadd.f32 0.0, %v4686
      %v4688 = vpop.f32.mrf.mxu0
      %4689 = vmatprep.mubr.f32.mxu0 %v4617
      %4690 = vmatmul.mubr.f32.gmra.mxu0 %v4613
      %v4691 = vpop.f32.mrf.mxu0
      %v4692 = vadd.f32 0.0, %v4691
      %v4693 = vpop.f32.mrf.mxu0
      %4694 = vmatprep.mubr.f32.mxu0 %v4618
      %4695 = vmatmul.mubr.f32.gmra.mxu0 %v4614
      %v4696 = vpop.f32.mrf.mxu0
      %v4697 = vadd.f32 0.0, %v4696
      %v4698 = vpop.f32.mrf.mxu0
      %4699 = vmatprep.mubr.f32.mxu0 %v4619
      %4700 = vmatmul.mubr.f32.gmra.mxu0 %v4615
      %v4701 = vpop.f32.mrf.mxu0
      %v4702 = vadd.f32 0.0, %v4701
      %v4703 = vpop.f32.mrf.mxu0
      %4704 = vdwg.mxu0
      %4705 = vmatprep.subr.mxu0 0.0
      %4706 = vmatpush1.msra.mxu0 0.0
      %4707 = vmatprep.subr.mxu0 0.0
      %4708 = vmatpush1.msra.mxu0 0.0
      %4709 = vmatprep.subr.mxu0 0.0
      %4710 = vmatpush1.msra.mxu0 0.0
      %4711 = vmatprep.subr.mxu0 0.0
      %4712 = vmatpush1.msra.mxu0 0.0
      %4713 = vmatprep.subr.mxu0 0.0
      %4714 = vmatpush1.msra.mxu0 0.0
      %4715 = vmatprep.subr.mxu0 0.0
      %4716 = vmatpush1.msra.mxu0 0.0
      %4717 = vmatprep.subr.mxu0 0.0
      %4718 = vmatpush1.msra.mxu0 0.0
      %4719 = vmatprep.subr.mxu0 0.0
      %4720 = vmatpush1.msra.mxu0 0.0
      %4721 = vmatprep.subr.mxu0 0.0
      %4722 = vmatpush1.msra.mxu0 0.0
      %4723 = vmatprep.subr.mxu0 0.0
      %4724 = vmatpush1.msra.mxu0 0.0
      %4725 = vmatprep.subr.mxu0 0.0
      %4726 = vmatpush1.msra.mxu0 0.0
      %4727 = vmatprep.subr.mxu0 0.0
      %4728 = vmatpush1.msra.mxu0 0.0
      %4729 = vmatprep.subr.mxu0 0.0
      %4730 = vmatpush1.msra.mxu0 %v4702
      %4731 = vmatprep.subr.mxu0 0.0
      %4732 = vmatpush1.msra.mxu0 %v4697
      %4733 = vmatprep.subr.mxu0 0.0
      %4734 = vmatpush1.msra.mxu0 %v4692
      %4735 = vmatprep.subr.mxu0 0.0
      %4736 = vmatpush1.msra.mxu0 %v4687
      %4737 = vmatprep.subr.mxu0 0.0
      %4738 = vmatpush2.msra.mxu0 0.0
      %4739 = vmatprep.subr.mxu0 0.0
      %4740 = vmatpush2.msra.mxu0 0.0
      %4741 = vmatprep.subr.mxu0 0.0
      %4742 = vmatpush2.msra.mxu0 0.0
      %4743 = vmatprep.subr.mxu0 0.0
      %4744 = vmatpush2.msra.mxu0 0.0
      %4745 = vmatprep.subr.mxu0 0.0
      %4746 = vmatpush2.msra.mxu0 0.0
      %4747 = vmatprep.subr.mxu0 0.0
      %4748 = vmatpush2.msra.mxu0 0.0
      %4749 = vmatprep.subr.mxu0 0.0
      %4750 = vmatpush2.msra.mxu0 0.0
      %4751 = vmatprep.subr.mxu0 0.0
      %4752 = vmatpush2.msra.mxu0 0.0
      %4753 = vmatprep.subr.mxu0 0.0
      %4754 = vmatpush2.msra.mxu0 0.0
      %4755 = vmatprep.subr.mxu0 0.0
      %4756 = vmatpush2.msra.mxu0 0.0
      %4757 = vmatprep.subr.mxu0 0.0
      %4758 = vmatpush2.msra.mxu0 0.0
      %4759 = vmatprep.subr.mxu0 0.0
      %4760 = vmatpush2.msra.mxu0 0.0
      %4761 = vmatprep.subr.mxu0 0.0
      %4762 = vmatpush2.msra.mxu0 0.0
      %4763 = vmatprep.subr.mxu0 0.0
      %4764 = vmatpush2.msra.mxu0 0.0
      %4765 = vmatprep.subr.mxu0 0.0
      %4766 = vmatpush2.msra.mxu0 0.0
      %4767 = vmatprep.subr.mxu0 0.0
      %4768 = vmatpush2.msra.mxu0 0.0
      %4769 = vmatprep.mubr.f32.mxu0 0.0
      %4770 = vmatmul.mubr.f32.gmra.mxu0 %v2395
      %v4771 = vpop.f32.mrf.mxu0
      %v4772 = vadd.f32 0.0, %v4771
      %v4773 = vpop.f32.mrf.mxu0
      %4774 = vdwg.mxu0
      %v4775 = vmul.f32 %v4772, %v4772
      %4777 = vrot.lane.b32.xlu0 %v4775, 4
      %v4778 = vpop.permute.xlu0 %4777
      %v4780 = vsub.f32 %v4772, %v4778
      %v4781 = vadd.f32 %v4780, 1e-05
      %v4782 = vrsqrt.pop %v4781
      %4784 = vrot.lane.b32.xlu0 %v4782, 124
      %v4785 = vpop.permute.xlu0 %4784
      %v4786 = vsel %vm2479, %v4785, 0
      %4788 = vmatprep.subr.mxu0 0.0
      %4789 = vmatpush1.msra.mxu0 0.0
      %4790 = vmatprep.subr.mxu0 0.0
      %4791 = vmatpush1.msra.mxu0 0.0
      %4792 = vmatprep.subr.mxu0 0.0
      %4793 = vmatpush1.msra.mxu0 0.0
      %4794 = vmatprep.subr.mxu0 0.0
      %4795 = vmatpush1.msra.mxu0 0.0
      %4796 = vmatprep.subr.mxu0 0.0
      %4797 = vmatpush1.msra.mxu0 0.0
      %4798 = vmatprep.subr.mxu0 0.0
      %4799 = vmatpush1.msra.mxu0 0.0
      %4800 = vmatprep.subr.mxu0 0.0
      %4801 = vmatpush1.msra.mxu0 0.0
      %4802 = vmatprep.subr.mxu0 0.0
      %4803 = vmatpush1.msra.mxu0 0.0
      %4804 = vmatprep.subr.mxu0 0.0
      %4805 = vmatpush1.msra.mxu0 0.0
      %4806 = vmatprep.subr.mxu0 0.0
      %4807 = vmatpush1.msra.mxu0 0.0
      %4808 = vmatprep.subr.mxu0 0.0
      %4809 = vmatpush1.msra.mxu0 0.0
      %4810 = vmatprep.subr.mxu0 0.0
      %4811 = vmatpush1.msra.mxu0 0.0
      %4812 = vmatprep.subr.mxu0 0.0
      %4813 = vmatpush1.msra.mxu0 0.0
      %4814 = vmatprep.subr.mxu0 0.0
      %4815 = vmatpush1.msra.mxu0 0.0
      %4816 = vmatprep.subr.mxu0 0.0
      %4817 = vmatpush1.msra.mxu0 0.0
      %4818 = vmatprep.subr.mxu0 0.0
      %4819 = vmatpush1.msra.mxu0 %v2484
      %4820 = vmatprep.subr.mxu0 0.0
      %4821 = vmatpush2.msra.mxu0 0.0
      %4822 = vmatprep.subr.mxu0 0.0
      %4823 = vmatpush2.msra.mxu0 0.0
      %4824 = vmatprep.subr.mxu0 0.0
      %4825 = vmatpush2.msra.mxu0 0.0
      %4826 = vmatprep.subr.mxu0 0.0
      %4827 = vmatpush2.msra.mxu0 0.0
      %4828 = vmatprep.subr.mxu0 0.0
      %4829 = vmatpush2.msra.mxu0 0.0
      %4830 = vmatprep.subr.mxu0 0.0
      %4831 = vmatpush2.msra.mxu0 0.0
      %4832 = vmatprep.subr.mxu0 0.0
      %4833 = vmatpush2.msra.mxu0 0.0
      %4834 = vmatprep.subr.mxu0 0.0
      %4835 = vmatpush2.msra.mxu0 0.0
      %4836 = vmatprep.subr.mxu0 0.0
      %4837 = vmatpush2.msra.mxu0 0.0
      %4838 = vmatprep.subr.mxu0 0.0
      %4839 = vmatpush2.msra.mxu0 0.0
      %4840 = vmatprep.subr.mxu0 0.0
      %4841 = vmatpush2.msra.mxu0 0.0
      %4842 = vmatprep.subr.mxu0 0.0
      %4843 = vmatpush2.msra.mxu0 0.0
      %4844 = vmatprep.subr.mxu0 0.0
      %4845 = vmatpush2.msra.mxu0 0.0
      %4846 = vmatprep.subr.mxu0 0.0
      %4847 = vmatpush2.msra.mxu0 0.0
      %4848 = vmatprep.subr.mxu0 0.0
      %4849 = vmatpush2.msra.mxu0 0.0
      %4850 = vmatprep.subr.mxu0 0.0
      %4851 = vmatpush2.msra.mxu0 0.0
      %4852 = vmatprep.mubr.f32.mxu0 0.0
      %4853 = vmatmul.mubr.f32.gmra.mxu0 %v4786
      %v4854 = vpop.f32.mrf.mxu0
      %v4855 = vadd.f32 0.0, %v4854
      %v4856 = vpop.f32.mrf.mxu0
      %4857 = vdwg.mxu0
      %v4858 = vlaneseq
      %v4859 = vshrl.u32 %v4858, 7
      %v4860 = vsub.s32 1, %v4859
      %v4861 = vrot.slane %v4607, %v4860
      %v4862 = vmul.f32 %v4855, %v4861
      %v4864 = vsel %vm2479, %v4772, 0
      %4866 = vmatprep.subr.mxu0 0.0
      %4867 = vmatpush1.msra.mxu0 0.0
      %4868 = vmatprep.subr.mxu0 0.0
      %4869 = vmatpush1.msra.mxu0 0.0
      %4870 = vmatprep.subr.mxu0 0.0
      %4871 = vmatpush1.msra.mxu0 0.0
      %4872 = vmatprep.subr.mxu0 0.0
      %4873 = vmatpush1.msra.mxu0 0.0
      %4874 = vmatprep.subr.mxu0 0.0
      %4875 = vmatpush1.msra.mxu0 0.0
      %4876 = vmatprep.subr.mxu0 0.0
      %4877 = vmatpush1.msra.mxu0 0.0
      %4878 = vmatprep.subr.mxu0 0.0
      %4879 = vmatpush1.msra.mxu0 0.0
      %4880 = vmatprep.subr.mxu0 0.0
      %4881 = vmatpush1.msra.mxu0 0.0
      %4882 = vmatprep.subr.mxu0 0.0
      %4883 = vmatpush1.msra.mxu0 0.0
      %4884 = vmatprep.subr.mxu0 0.0
      %4885 = vmatpush1.msra.mxu0 0.0
      %4886 = vmatprep.subr.mxu0 0.0
      %4887 = vmatpush1.msra.mxu0 0.0
      %4888 = vmatprep.subr.mxu0 0.0
      %4889 = vmatpush1.msra.mxu0 0.0
      %4890 = vmatprep.subr.mxu0 0.0
      %4891 = vmatpush1.msra.mxu0 0.0
      %4892 = vmatprep.subr.mxu0 0.0
      %4893 = vmatpush1.msra.mxu0 0.0
      %4894 = vmatprep.subr.mxu0 0.0
      %4895 = vmatpush1.msra.mxu0 0.0
      %4896 = vmatprep.subr.mxu0 0.0
      %4897 = vmatpush1.msra.mxu0 %v2484
      %4898 = vmatprep.subr.mxu0 0.0
      %4899 = vmatpush2.msra.mxu0 0.0
      %4900 = vmatprep.subr.mxu0 0.0
      %4901 = vmatpush2.msra.mxu0 0.0
      %4902 = vmatprep.subr.mxu0 0.0
      %4903 = vmatpush2.msra.mxu0 0.0
      %4904 = vmatprep.subr.mxu0 0.0
      %4905 = vmatpush2.msra.mxu0 0.0
      %4906 = vmatprep.subr.mxu0 0.0
      %4907 = vmatpush2.msra.mxu0 0.0
      %4908 = vmatprep.subr.mxu0 0.0
      %4909 = vmatpush2.msra.mxu0 0.0
      %4910 = vmatprep.subr.mxu0 0.0
      %4911 = vmatpush2.msra.mxu0 0.0
      %4912 = vmatprep.subr.mxu0 0.0
      %4913 = vmatpush2.msra.mxu0 0.0
      %4914 = vmatprep.subr.mxu0 0.0
      %4915 = vmatpush2.msra.mxu0 0.0
      %4916 = vmatprep.subr.mxu0 0.0
      %4917 = vmatpush2.msra.mxu0 0.0
      %4918 = vmatprep.subr.mxu0 0.0
      %4919 = vmatpush2.msra.mxu0 0.0
      %4920 = vmatprep.subr.mxu0 0.0
      %4921 = vmatpush2.msra.mxu0 0.0
      %4922 = vmatprep.subr.mxu0 0.0
      %4923 = vmatpush2.msra.mxu0 0.0
      %4924 = vmatprep.subr.mxu0 0.0
      %4925 = vmatpush2.msra.mxu0 0.0
      %4926 = vmatprep.subr.mxu0 0.0
      %4927 = vmatpush2.msra.mxu0 0.0
      %4928 = vmatprep.subr.mxu0 0.0
      %4929 = vmatpush2.msra.mxu0 0.0
      %4930 = vmatprep.mubr.f32.mxu0 0.0
      %4931 = vmatmul.mubr.f32.gmra.mxu0 %v4864
      %v4932 = vpop.f32.mrf.mxu0
      %v4933 = vadd.f32 0.0, %v4932
      %v4934 = vpop.f32.mrf.mxu0
      %4935 = vdwg.mxu0
      %v4936 = vmul.f32 %v4933, %v4862
      %v4937 = vlaneseq
      %v4938 = vshrl.u32 %v4937, 7
      %v4939 = vsub.s32 2, %v4938
      %v4940 = vrot.slane %v4607, %v4939
      %v4941 = vsub.f32 %v4940, %v4936
      %v4943 = vsel %vm2657, %v4862, 0
      %4945 = vmatprep.subr.mxu0 0.0
      %4946 = vmatpush1.msra.mxu0 0.0
      %4947 = vmatprep.subr.mxu0 0.0
      %4948 = vmatpush1.msra.mxu0 0.0
      %4949 = vmatprep.subr.mxu0 0.0
      %4950 = vmatpush1.msra.mxu0 0.0
      %4951 = vmatprep.subr.mxu0 0.0
      %4952 = vmatpush1.msra.mxu0 0.0
      %4953 = vmatprep.subr.mxu0 0.0
      %4954 = vmatpush1.msra.mxu0 0.0
      %4955 = vmatprep.subr.mxu0 0.0
      %4956 = vmatpush1.msra.mxu0 0.0
      %4957 = vmatprep.subr.mxu0 0.0
      %4958 = vmatpush1.msra.mxu0 0.0
      %4959 = vmatprep.subr.mxu0 0.0
      %4960 = vmatpush1.msra.mxu0 0.0
      %4961 = vmatprep.subr.mxu0 0.0
      %4962 = vmatpush1.msra.mxu0 0.0
      %4963 = vmatprep.subr.mxu0 0.0
      %4964 = vmatpush1.msra.mxu0 0.0
      %4965 = vmatprep.subr.mxu0 0.0
      %4966 = vmatpush1.msra.mxu0 0.0
      %4967 = vmatprep.subr.mxu0 0.0
      %4968 = vmatpush1.msra.mxu0 0.0
      %4969 = vmatprep.subr.mxu0 0.0
      %4970 = vmatpush1.msra.mxu0 0.0
      %4971 = vmatprep.subr.mxu0 0.0
      %4972 = vmatpush1.msra.mxu0 0.0
      %4973 = vmatprep.subr.mxu0 0.0
      %4974 = vmatpush1.msra.mxu0 0.0
      %4975 = vmatprep.subr.mxu0 0.0
      %4976 = vmatpush1.msra.mxu0 %v4943
      %4977 = vmatprep.subr.mxu0 0.0
      %4978 = vmatpush2.msra.mxu0 0.0
      %4979 = vmatprep.subr.mxu0 0.0
      %4980 = vmatpush2.msra.mxu0 0.0
      %4981 = vmatprep.subr.mxu0 0.0
      %4982 = vmatpush2.msra.mxu0 0.0
      %4983 = vmatprep.subr.mxu0 0.0
      %4984 = vmatpush2.msra.mxu0 0.0
      %4985 = vmatprep.subr.mxu0 0.0
      %4986 = vmatpush2.msra.mxu0 0.0
      %4987 = vmatprep.subr.mxu0 0.0
      %4988 = vmatpush2.msra.mxu0 0.0
      %4989 = vmatprep.subr.mxu0 0.0
      %4990 = vmatpush2.msra.mxu0 0.0
      %4991 = vmatprep.subr.mxu0 0.0
      %4992 = vmatpush2.msra.mxu0 0.0
      %4993 = vmatprep.subr.mxu0 0.0
      %4994 = vmatpush2.msra.mxu0 0.0
      %4995 = vmatprep.subr.mxu0 0.0
      %4996 = vmatpush2.msra.mxu0 0.0
      %4997 = vmatprep.subr.mxu0 0.0
      %4998 = vmatpush2.msra.mxu0 0.0
      %4999 = vmatprep.subr.mxu0 0.0
      %5000 = vmatpush2.msra.mxu0 0.0
      %5001 = vmatprep.subr.mxu0 0.0
      %5002 = vmatpush2.msra.mxu0 0.0
      %5003 = vmatprep.subr.mxu0 0.0
      %5004 = vmatpush2.msra.mxu0 0.0
      %5005 = vmatprep.subr.mxu0 0.0
      %5006 = vmatpush2.msra.mxu0 0.0
      %5007 = vmatprep.subr.mxu0 0.0
      %5008 = vmatpush2.msra.mxu0 0.0
      %5009 = vmatprep.mubr.f32.mxu0 0.0
      %5010 = vmatmul.mubr.f32.gmra.mxu0 %v2646
      %v5011 = vpop.f32.mrf.mxu0
      %v5012 = vadd.f32 0.0, %v5011
      %v5013 = vpop.f32.mrf.mxu0
      %5014 = vmatprep.mubr.f32.mxu0 0.0
      %5015 = vmatmul.mubr.f32.gmra.mxu0 %v2649
      %v5016 = vpop.f32.mrf.mxu0
      %v5017 = vadd.f32 0.0, %v5016
      %v5018 = vpop.f32.mrf.mxu0
      %5019 = vmatprep.mubr.f32.mxu0 0.0
      %5020 = vmatmul.mubr.f32.gmra.mxu0 %v2652
      %v5021 = vpop.f32.mrf.mxu0
      %v5022 = vadd.f32 0.0, %v5021
      %v5023 = vpop.f32.mrf.mxu0
      %5024 = vmatprep.mubr.f32.mxu0 0.0
      %5025 = vmatmul.mubr.f32.gmra.mxu0 %v2655
      %v5026 = vpop.f32.mrf.mxu0
      %v5027 = vadd.f32 0.0, %v5026
      %v5028 = vpop.f32.mrf.mxu0
      %5029 = vdwg.mxu0
      %v5031 = vsel %vm2657, %v4941, 0
      %5033 = vmatprep.subr.mxu0 0.0
      %5034 = vmatpush1.msra.mxu0 0.0
      %5035 = vmatprep.subr.mxu0 0.0
      %5036 = vmatpush1.msra.mxu0 0.0
      %5037 = vmatprep.subr.mxu0 0.0
      %5038 = vmatpush1.msra.mxu0 0.0
      %5039 = vmatprep.subr.mxu0 0.0
      %5040 = vmatpush1.msra.mxu0 0.0
      %5041 = vmatprep.subr.mxu0 0.0
      %5042 = vmatpush1.msra.mxu0 0.0
      %5043 = vmatprep.subr.mxu0 0.0
      %5044 = vmatpush1.msra.mxu0 0.0
      %5045 = vmatprep.subr.mxu0 0.0
      %5046 = vmatpush1.msra.mxu0 0.0
      %5047 = vmatprep.subr.mxu0 0.0
      %5048 = vmatpush1.msra.mxu0 0.0
      %5049 = vmatprep.subr.mxu0 0.0
      %5050 = vmatpush1.msra.mxu0 0.0
      %5051 = vmatprep.subr.mxu0 0.0
      %5052 = vmatpush1.msra.mxu0 0.0
      %5053 = vmatprep.subr.mxu0 0.0
      %5054 = vmatpush1.msra.mxu0 0.0
      %5055 = vmatprep.subr.mxu0 0.0
      %5056 = vmatpush1.msra.mxu0 0.0
      %5057 = vmatprep.subr.mxu0 0.0
      %5058 = vmatpush1.msra.mxu0 0.0
      %5059 = vmatprep.subr.mxu0 0.0
      %5060 = vmatpush1.msra.mxu0 0.0
      %5061 = vmatprep.subr.mxu0 0.0
      %5062 = vmatpush1.msra.mxu0 0.0
      %5063 = vmatprep.subr.mxu0 0.0
      %5064 = vmatpush1.msra.mxu0 %v5031
      %5065 = vmatprep.subr.mxu0 0.0
      %5066 = vmatpush2.msra.mxu0 0.0
      %5067 = vmatprep.subr.mxu0 0.0
      %5068 = vmatpush2.msra.mxu0 0.0
      %5069 = vmatprep.subr.mxu0 0.0
      %5070 = vmatpush2.msra.mxu0 0.0
      %5071 = vmatprep.subr.mxu0 0.0
      %5072 = vmatpush2.msra.mxu0 0.0
      %5073 = vmatprep.subr.mxu0 0.0
      %5074 = vmatpush2.msra.mxu0 0.0
      %5075 = vmatprep.subr.mxu0 0.0
      %5076 = vmatpush2.msra.mxu0 0.0
      %5077 = vmatprep.subr.mxu0 0.0
      %5078 = vmatpush2.msra.mxu0 0.0
      %5079 = vmatprep.subr.mxu0 0.0
      %5080 = vmatpush2.msra.mxu0 0.0
      %5081 = vmatprep.subr.mxu0 0.0
      %5082 = vmatpush2.msra.mxu0 0.0
      %5083 = vmatprep.subr.mxu0 0.0
      %5084 = vmatpush2.msra.mxu0 0.0
      %5085 = vmatprep.subr.mxu0 0.0
      %5086 = vmatpush2.msra.mxu0 0.0
      %5087 = vmatprep.subr.mxu0 0.0
      %5088 = vmatpush2.msra.mxu0 0.0
      %5089 = vmatprep.subr.mxu0 0.0
      %5090 = vmatpush2.msra.mxu0 0.0
      %5091 = vmatprep.subr.mxu0 0.0
      %5092 = vmatpush2.msra.mxu0 0.0
      %5093 = vmatprep.subr.mxu0 0.0
      %5094 = vmatpush2.msra.mxu0 0.0
      %5095 = vmatprep.subr.mxu0 0.0
      %5096 = vmatpush2.msra.mxu0 0.0
      %5097 = vmatprep.mubr.f32.mxu0 0.0
      %5098 = vmatmul.mubr.f32.gmra.mxu0 %v2646
      %v5099 = vpop.f32.mrf.mxu0
      %v5100 = vadd.f32 0.0, %v5099
      %v5101 = vpop.f32.mrf.mxu0
      %5102 = vmatprep.mubr.f32.mxu0 0.0
      %5103 = vmatmul.mubr.f32.gmra.mxu0 %v2649
      %v5104 = vpop.f32.mrf.mxu0
      %v5105 = vadd.f32 0.0, %v5104
      %v5106 = vpop.f32.mrf.mxu0
      %5107 = vmatprep.mubr.f32.mxu0 0.0
      %5108 = vmatmul.mubr.f32.gmra.mxu0 %v2652
      %v5109 = vpop.f32.mrf.mxu0
      %v5110 = vadd.f32 0.0, %v5109
      %v5111 = vpop.f32.mrf.mxu0
      %5112 = vmatprep.mubr.f32.mxu0 0.0
      %5113 = vmatmul.mubr.f32.gmra.mxu0 %v2655
      %v5114 = vpop.f32.mrf.mxu0
      %v5115 = vadd.f32 0.0, %v5114
      %v5116 = vpop.f32.mrf.mxu0
      %5117 = vdwg.mxu0
      %v5118 = vmul.f32 %v4612, %v5012
      %v5119 = vmul.f32 %v4613, %v5017
      %v5120 = vmul.f32 %v4614, %v5022
      %v5121 = vmul.f32 %v4615, %v5027
      %v5122 = vadd.f32 %v5118, %v5100
      %v5123 = vadd.f32 %v5119, %v5105
      %v5124 = vadd.f32 %v5120, %v5110
      %v5125 = vadd.f32 %v5121, %v5115
      %v5126 = vand.u32 2147483647, %v5122
      %v5127 = vand.u32 2147483647, %v5123
      %v5128 = vand.u32 2147483647, %v5124
      %v5129 = vand.u32 2147483647, %v5125
      %v5130 = vmul.f32 %v5126, 0.70710677
      %v5131 = vmul.f32 %v5127, 0.70710677
      %v5132 = vmul.f32 %v5128, 0.70710677
      %v5133 = vmul.f32 %v5129, 0.70710677
      %v5134 = vmul.f32 %v5130, 0.3275911
      %v5135 = vmul.f32 %v5131, 0.3275911
      %v5136 = vmul.f32 %v5132, 0.3275911
      %v5137 = vmul.f32 %v5133, 0.3275911
      %v5138 = vadd.f32 %v5134, 1.0
      %v5139 = vadd.f32 %v5135, 1.0
      %v5140 = vadd.f32 %v5136, 1.0
      %v5141 = vadd.f32 %v5137, 1.0
      %v5142 = vrcp.pop %v5138
      %v5143 = vrcp.pop %v5139
      %v5144 = vrcp.pop %v5140
      %v5145 = vrcp.pop %v5141
      %v5146 = vmul.f32 %v5142, 1.0614054
      %v5147 = vmul.f32 %v5143, 1.0614054
      %v5148 = vmul.f32 %v5144, 1.0614054
      %v5149 = vmul.f32 %v5145, 1.0614054
      %v5150 = vadd.f32 %v5146, -1.4531521
      %v5151 = vadd.f32 %v5147, -1.4531521
      %v5152 = vadd.f32 %v5148, -1.4531521
      %v5153 = vadd.f32 %v5149, -1.4531521
      %v5154 = vmul.f32 %v5142, %v5150
      %v5155 = vmul.f32 %v5143, %v5151
      %v5156 = vmul.f32 %v5144, %v5152
      %v5157 = vmul.f32 %v5145, %v5153
      %v5158 = vadd.f32 %v5154, 1.4214138
      %v5159 = vadd.f32 %v5155, 1.4214138
      %v5160 = vadd.f32 %v5156, 1.4214138
      %v5161 = vadd.f32 %v5157, 1.4214138
      %v5162 = vmul.f32 %v5142, %v5158
      %v5163 = vmul.f32 %v5143, %v5159
      %v5164 = vmul.f32 %v5144, %v5160
      %v5165 = vmul.f32 %v5145, %v5161
      %v5166 = vadd.f32 %v5162, -0.28449672
      %v5167 = vadd.f32 %v5163, -0.28449672
      %v5168 = vadd.f32 %v5164, -0.28449672
      %v5169 = vadd.f32 %v5165, -0.28449672
      %v5170 = vmul.f32 %v5142, %v5166
      %v5171 = vmul.f32 %v5143, %v5167
      %v5172 = vmul.f32 %v5144, %v5168
      %v5173 = vmul.f32 %v5145, %v5169
      %v5174 = vadd.f32 %v5170, 0.2548296
      %v5175 = vadd.f32 %v5171, 0.2548296
      %v5176 = vadd.f32 %v5172, 0.2548296
      %v5177 = vadd.f32 %v5173, 0.2548296
      %v5178 = vmul.f32 %v5142, %v5174
      %v5179 = vmul.f32 %v5143, %v5175
      %v5180 = vmul.f32 %v5144, %v5176
      %v5181 = vmul.f32 %v5145, %v5177
      %v5182 = vsub.f32 0.0, %v5130
      %v5183 = vsub.f32 0.0, %v5131
      %v5184 = vsub.f32 0.0, %v5132
      %v5185 = vsub.f32 0.0, %v5133
      %v5186 = vmul.f32 %v5182, %v5130
      %v5187 = vmul.f32 %v5183, %v5131
      %v5188 = vmul.f32 %v5184, %v5132
      %v5189 = vmul.f32 %v5185, %v5133
      %v5190 = vmul.f32 %v5186, 1.442695
      %v5191 = vpow.pop %v5190
      %v5192 = vmul.f32 %v5187, 1.442695
      %v5193 = vpow.pop %v5192
      %v5194 = vmul.f32 %v5188, 1.442695
      %v5195 = vpow.pop %v5194
      %v5196 = vmul.f32 %v5189, 1.442695
      %v5197 = vpow.pop %v5196
      %v5198 = vmul.f32 %v5178, %v5191
      %v5199 = vmul.f32 %v5179, %v5193
      %v5200 = vmul.f32 %v5180, %v5195
      %v5201 = vmul.f32 %v5181, %v5197
      %v5202 = vsub.f32 1.0, %v5198
      %v5203 = vsub.f32 1.0, %v5199
      %v5204 = vsub.f32 1.0, %v5200
      %v5205 = vsub.f32 1.0, %v5201
      %vm5206 = vcmp.ge.f32.partialorder %v5122, 0.0
      %vm5207 = vcmp.ge.f32.partialorder %v5123, 0.0
      %vm5208 = vcmp.ge.f32.partialorder %v5124, 0.0
      %vm5209 = vcmp.ge.f32.partialorder %v5125, 0.0
      %v5210 = vsub.f32 0.0, %v5202
      %v5211 = vsub.f32 0.0, %v5203
      %v5212 = vsub.f32 0.0, %v5204
      %v5213 = vsub.f32 0.0, %v5205
      %v5214 = vsel %vm5206, %v5202, %v5210
      %v5215 = vsel %vm5207, %v5203, %v5211
      %v5216 = vsel %vm5208, %v5204, %v5212
      %v5217 = vsel %vm5209, %v5205, %v5213
      %v5218 = vmul.f32 %v5122, 0.5
      %v5219 = vmul.f32 %v5123, 0.5
      %v5220 = vmul.f32 %v5124, 0.5
      %v5221 = vmul.f32 %v5125, 0.5
      %v5222 = vadd.f32 %v5214, 1.0
      %v5223 = vadd.f32 %v5215, 1.0
      %v5224 = vadd.f32 %v5216, 1.0
      %v5225 = vadd.f32 %v5217, 1.0
      %v5226 = vmul.f32 %v5218, %v5222
      %v5227 = vmul.f32 %v5219, %v5223
      %v5228 = vmul.f32 %v5220, %v5224
      %v5229 = vmul.f32 %v5221, %v5225
      %5230 = vst [vmem:[%s437] sm:$0xff] %v5226
      %5231 = vst [vmem:[%s437 + $0x8] sm:$0xff] %v5227
      %5232 = vst [vmem:[%s437 + $0x10] sm:$0xff] %v5228
      %5233 = vst [vmem:[%s437 + $0x18] sm:$0xff] %v5229
      %s5234 = smul.u32 4, %s23
      %p5235 = scmp.lt.s32.totalorder %s5234, 7
      %s5236 = scalar_select %p5235, %s5234, 7
      %s5237 = smul.addr %s5236, 8
      %s5238 = scalar_lea.vmem %s12, %s5237
      // Predicated region
      $region69: #{spec_decoder_forward.1} parent=67 // pred_check
        %p5239 = pneg %p303
      $region70: #{spec_decoder_forward.1} parent=67 // pred_check_branch
        %5241 = sbr.rel (%p5239) target = $region72
      $region71: #{spec_decoder_forward.1} parent=67 // pred_region
        %s5242 = smul.u32 4, %s23
      $region72: #{spec_decoder_forward.1} parent=67 // pred_fallthru
        _
    $region68: #{spec_decoder_forward.1} parent=5 // pred_fallthru
      _
    %p5243 = scmp.le.s32.totalorder 2, %s18
    // Predicated region
    $region73: #{spec_decoder_forward.1} parent=5 // pred_check
      %p5244 = pneg %p5243
    $region74: #{spec_decoder_forward.1} parent=5 // pred_check_branch
      %5246 = sbr.rel (%p5244) target = $region76
    $region75: #{spec_decoder_forward.1} parent=5 // pred_region
      %s5247 = ssub.s32 %s18, 2
      // Predicated region
      $region77: #{spec_decoder_forward.1} parent=75 // pred_check
        %p5248 = pneg %p309
      $region78: #{spec_decoder_forward.1} parent=75 // pred_check_branch
        %5250 = sbr.rel (%p5248) target = $region80
      $region79: #{spec_decoder_forward.1} parent=75 // pred_region
        %s5251 = smul.u32 4, %s24
        %p5252 = scmp.lt.s32.totalorder %s5251, 7
        %s5253 = scalar_select %p5252, %s5251, 7
        %s5254 = smul.addr %s5253, 8
        %s5255 = scalar_lea.vmem %s12, %s5254
      $region80: #{spec_decoder_forward.1} parent=75 // pred_fallthru
        _
    $region76: #{spec_decoder_forward.1} parent=5 // pred_fallthru
      _
  $region6: #{spec_decoder_forward.1} parent=0 // loop_footer
    %s22 = sadd.s32 1, %s18
  $region7: #{spec_decoder_forward.1} parent=0 // loop_footer_branch
    %17 = sbr.rel target = $region3
  $region8: #{spec_decoder_forward.1} parent=0 // loop_exit
    _

</llo_original>
